<compile_context>
chip_gen: v5e
topology: v5e:2x2
jax: 0.10.0
libtpu: 0.0.40
codegen_flags: <defaults>
</compile_context>

<pallas_src>
import jax
import jax.numpy as jnp
import numpy as np
from jax import lax
from jax.experimental import pallas as pl
from jax.experimental.pallas import tpu as pltpu

# ----------------------------- model hyperparams -----------------------------
N_LETTER = 30          # input_size == output_size
HIDDEN = 32            # hidden_size
EMBED = 8              # embed_size
NUM_LAYERS = 4
BATCH = 8              # one full sublane group per grid point
O_PAD = 128            # lane-dense padded output width (multiple of 128 >= N_LETTER)


# ------------------------------- Pallas kernel --------------------------------
def decoder_seq_kernel(
    gx_ref,          # VMEM (T, B, 4H)        precomputed layer-0 gates (embed + len-embed + b0)
    w_hh_bd_ref,     # VMEM (L*H, L*4H)       block-diagonal recurrent weights (transposed)
    w_ih_rest_ref,   # VMEM (L-1, H, 4H)      layers 1..L-1 input weights (transposed)
    b_rest_ref,      # VMEM (L-1, 1, 4H)      layers 1..L-1 combined bias b_ih + b_hh
    fc_w_ref,        # VMEM (H, O_PAD)        fc1 weight, zero-padded lanes
    fc_b_ref,        # VMEM (1, O_PAD)        fc1 bias, padded lanes = -1e30
    h0_ref,          # VMEM (B, L*H)          initial hidden state (lane-dense slab)
    c0_ref,          # VMEM (B, L*H)          initial cell state   (lane-dense slab)
    out_ref,         # VMEM (T, B, O_PAD)     per-step log-softmax (lane dense)
    h_out_ref,       # VMEM (B, L*H)          final hidden state slab
    c_out_ref,       # VMEM (B, L*H)          final cell state slab
):
    T = gx_ref.shape[0]
    H = HIDDEN
    L = NUM_LAYERS

    # Weights are tiny; load once, live in vregs / VMEM across the whole loop.
    w_hh_bd = w_hh_bd_ref[...]          # (L*H, L*4H)
    fc_w = fc_w_ref[...]                # (H, O_PAD)
    fc_b = fc_b_ref[...]                # (1, O_PAD)

    def step(t, carry):
        h_slab, c_slab = carry          # (B, L*H) each

        # All recurrent contributions in ONE wide matmul (off the serial chain).
        hh_gates = jnp.dot(h_slab, w_hh_bd,
                           preferred_element_type=jnp.float32)   # (B, L*4H)
        gates_x0 = gx_ref[t]                                     # (B, 4H)

        h_parts, c_parts = [], []
        x = None
        for l in range(L):  # static unroll; layers are serially dependent
            c_prev = c_slab[:, l * H:(l + 1) * H]
            if l == 0:
                gates = gates_x0 + hh_gates[:, :4 * H]
            else:
                gates = (jnp.dot(x, w_ih_rest_ref[l - 1],
                                 preferred_element_type=jnp.float32)
                         + hh_gates[:, l * 4 * H:(l + 1) * 4 * H]
                         + b_rest_ref[l - 1])

            # PyTorch LSTM gate order: i, f, g, o.
            # 2 full-width EUP pushes (sigmoid + tanh on the (B, 4H) vreg).
            sg = jax.nn.sigmoid(gates)
            tg = jnp.tanh(gates)
            i_g = sg[:, 0 * H:1 * H]
            f_g = sg[:, 1 * H:2 * H]
            g_g = tg[:, 2 * H:3 * H]
            o_g = sg[:, 3 * H:4 * H]

            c_new = f_g * c_prev + i_g * g_g
            h_new = o_g * jnp.tanh(c_new)
            h_parts.append(h_new)
            c_parts.append(c_new)
            x = h_new  # feeds next layer

        h_slab_new = jnp.concatenate(h_parts, axis=-1)   # (B, L*H)
        c_slab_new = jnp.concatenate(c_parts, axis=-1)

        # fc1 + (dropout = identity in eval) + stable LogSoftmax, lane dense.
        logits = jnp.dot(x, fc_w, preferred_element_type=jnp.float32) + fc_b
        m = jnp.max(logits, axis=-1, keepdims=True)
        z = logits - m
        lse = jnp.log(jnp.sum(jnp.exp(z), axis=-1, keepdims=True))
        out_ref[t] = z - lse

        return (h_slab_new, c_slab_new)

    h_fin, c_fin = lax.fori_loop(0, T, step, (h0_ref[...], c0_ref[...]),
                                 unroll=(T <= 16))
    h_out_ref[...] = h_fin
    c_out_ref[...] = c_fin


# ------------------------------- python wrapper --------------------------------
def _const_spec(a):
    zeros = (0,) * a.ndim
    return pl.BlockSpec(a.shape, lambda g: zeros)   # resident across the grid


@jax.jit
def decoder_decode_fused(input_ids_seq, lng_ids_seq, h0, c0, kparams):
    """T teacher-forced Decoder.forward steps fused into ONE pallas_call.

    input_ids_seq : (T, B) int32 in [0, input_size)
    lng_ids_seq   : (T, B) int32 in [0, hidden_size)
    h0, c0        : (L, B, H) float32
    returns       : (log_probs (T, B, O), (h_T, c_T))
    """
    T, Btot = input_ids_seq.shape
    L, _, H = h0.shape
    G = Btot // BATCH            # independent batch groups -> parallel grid axis

    # Precompute the layer-0 input gates (embedding lookups + x@W_ih0 + b0 folded).
    gx = (kparams["g_in"][input_ids_seq]
          + kparams["g_lng"][lng_ids_seq]).astype(jnp.float32)     # (T, Btot, 4H)

    # Lane-dense initial state slabs.
    h0_slab = jnp.transpose(h0, (1, 0, 2)).reshape(Btot, L * H)
    c0_slab = jnp.transpose(c0, (1, 0, 2)).reshape(Btot, L * H)

    weights = (kparams["w_hh_bd"], kparams["w_ih_rest"], kparams["b_rest"],
               kparams["fc_w_pad"], kparams["fc_b_pad"])

    # Cost hint (per group, per step: one (8,128)x(128,512) matmul dominates).
    flops = T * G * (2 * BATCH * (L * H) * (L * 4 * H)
                     + (L - 1) * 2 * BATCH * H * (4 * H)
                     + 2 * BATCH * H * O_PAD)
    trans = T * G * (L * (2 * BATCH * 4 * H + BATCH * H) + BATCH * O_PAD)
    weight_bytes = 4 * sum(int(np.prod(w.shape)) for w in weights)
    bytes_accessed = (weight_bytes
                      + gx.size * 4
                      + 2 * 2 * Btot * L * H * 4
                      + T * Btot * O_PAD * 4)

    out_pad, h_slab, c_slab = pl.pallas_call(
        decoder_seq_kernel,
        out_shape=(
            jax.ShapeDtypeStruct((T, Btot, O_PAD), jnp.float32),
            jax.ShapeDtypeStruct((Btot, L * H), jnp.float32),
            jax.ShapeDtypeStruct((Btot, L * H), jnp.float32),
        ),
        grid_spec=pltpu.PrefetchScalarGridSpec(
            num_scalar_prefetch=0,
            grid=(G,),
            in_specs=[pl.BlockSpec((T, BATCH, 4 * H), lambda g: (0, g, 0))]
                     + [_const_spec(w) for w in weights]
                     + [pl.BlockSpec((BATCH, L * H), lambda g: (g, 0)),
                        pl.BlockSpec((BATCH, L * H), lambda g: (g, 0))],
            out_specs=(
                pl.BlockSpec((T, BATCH, O_PAD), lambda g: (0, g, 0)),
                pl.BlockSpec((BATCH, L * H), lambda g: (g, 0)),
                pl.BlockSpec((BATCH, L * H), lambda g: (g, 0)),
            ),
        ),
        compiler_params=pltpu.CompilerParams(dimension_semantics=("parallel",)),
        cost_estimate=pl.CostEstimate(flops=flops, transcendentals=trans,
                                      bytes_accessed=bytes_accessed),
    )(gx, *weights, h0_slab, c0_slab)

    log_probs = out_pad[:, :, :N_LETTER]
    h_T = jnp.transpose(h_slab.reshape(Btot, L, H), (1, 0, 2))
    c_T = jnp.transpose(c_slab.reshape(Btot, L, H), (1, 0, 2))
    return log_probs, (h_T, c_T)


def decoder_forward(input_ids, lng_ids, h0, c0, kparams):
    """Mirrors Decoder.forward exactly (one timestep): returns ((1, B, O), (h, c))."""
    return decoder_decode_fused(input_ids[None], lng_ids[None], h0, c0, kparams)


# --------------------------- deterministic parameters ---------------------------
def init_raw_params(key):
    ks = jax.random.split(key, 11)
    s = 0.1
    embed_w = s * jax.random.normal(ks[0], (N_LETTER, EMBED), jnp.float32)
    len_embed_w = s * jax.random.normal(ks[1], (HIDDEN, EMBED), jnp.float32)
    w_ih = [s * jax.random.normal(ks[2], (4 * HIDDEN, 2 * EMBED), jnp.float32)]
    for l in range(1, NUM_LAYERS):
        w_ih.append(s * jax.random.normal(ks[2 + l], (4 * HIDDEN, HIDDEN), jnp.float32))
    w_hh = s * jax.random.normal(ks[6], (NUM_LAYERS, 4 * HIDDEN, HIDDEN), jnp.float32)
    b_ih = s * jax.random.normal(ks[7], (NUM_LAYERS, 4 * HIDDEN), jnp.float32)
    b_hh = s * jax.random.normal(ks[8], (NUM_LAYERS, 4 * HIDDEN), jnp.float32)
    fc_w = s * jax.random.normal(ks[9], (N_LETTER, HIDDEN), jnp.float32)
    fc_b = s * jax.random.normal(ks[10], (N_LETTER,), jnp.float32)
    return {"embed_w": embed_w, "len_embed_w": len_embed_w, "w_ih": w_ih, "w_hh": w_hh,
            "b_ih": b_ih, "b_hh": b_hh, "fc_w": fc_w, "fc_b": fc_b}


def prepare_params(raw):
    """One-time transform of PyTorch-convention weights into the kernel layout."""
    E, H, L, O = EMBED, HIDDEN, NUM_LAYERS, N_LETTER
    w_ih0_t = raw["w_ih"][0].T                               # (2E, 4H)
    b0 = raw["b_ih"][0] + raw["b_hh"][0]                     # (4H,)
    g_in = raw["embed_w"] @ w_ih0_t[:E] + b0[None, :]        # (N_LETTER, 4H), bias folded
    g_lng = raw["len_embed_w"] @ w_ih0_t[E:]                 # (HIDDEN, 4H)

    # Block-diagonal recurrent weights: (L*H, L*4H).
    w_hh_bd = jnp.zeros((L * H, L * 4 * H), jnp.float32)
    for l in range(L):
        w_hh_bd = w_hh_bd.at[l * H:(l + 1) * H,
                             l * 4 * H:(l + 1) * 4 * H].set(raw["w_hh"][l].T)

    w_ih_rest = jnp.stack([raw["w_ih"][l].T for l in range(1, L)])        # (L-1, H, 4H)
    b_rest = (raw["b_ih"] + raw["b_hh"])[1:, None, :]                      # (L-1, 1, 4H)

    fc_w_pad = jnp.zeros((H, O_PAD), jnp.float32).at[:, :O].set(raw["fc_w"].T)
    fc_b_pad = jnp.full((O_PAD,), -1e30, jnp.float32).at[:O].set(raw["fc_b"])[None, :]
    return {"g_in": g_in, "g_lng": g_lng, "w_hh_bd": w_hh_bd,
            "w_ih_rest": w_ih_rest, "b_rest": b_rest,
            "fc_w_pad": fc_w_pad, "fc_b_pad": fc_b_pad}


# ------------------------------ pure-JAX reference ------------------------------
def decoder_forward_ref(input_ids, lng_ids, h0, c0, raw):
    emb = raw["embed_w"][input_ids]
    lemb = raw["len_embed_w"][lng_ids]
    x = jnp.concatenate([emb, lemb], axis=1)
    H = h0.shape[2]
    hs, cs = [], []
    for l in range(h0.shape[0]):
        gates = (x @ raw["w_ih"][l].T + h0[l] @ raw["w_hh"][l].T
                 + raw["b_ih"][l] + raw["b_hh"][l])
        i_g = jax.nn.sigmoid(gates[:, :H])
        f_g = jax.nn.sigmoid(gates[:, H:2 * H])
        g_g = jnp.tanh(gates[:, 2 * H:3 * H])
        o_g = jax.nn.sigmoid(gates[:, 3 * H:])
        c_new = f_g * c0[l] + i_g * g_g
        h_new = o_g * jnp.tanh(c_new)
        hs.append(h_new)
        cs.append(c_new)
        x = h_new
    logits = x @ raw["fc_w"].T + raw["fc_b"]
    out = jax.nn.log_softmax(logits, axis=-1)
    return out[None], (jnp.stack(hs), jnp.stack(cs))


# ------------------------------------ main ------------------------------------
if __name__ == "__main__":
    key = jax.random.PRNGKey(0)
    kp, ki, kl = jax.random.split(key, 3)

    raw = init_raw_params(kp)
    kparams = prepare_params(raw)

    T = 6
    input_ids_seq = jax.random.randint(ki, (T, BATCH), 0, N_LETTER, dtype=jnp.int32)
    lng_ids = jax.random.randint(kl, (BATCH,), 0, HIDDEN, dtype=jnp.int32)
    lng_ids_seq = jnp.tile(lng_ids[None, :], (T, 1))

    # initHidden(batch_size=BATCH)
    h0 = jnp.zeros((NUM_LAYERS, BATCH, HIDDEN), jnp.float32)
    c0 = jnp.zeros((NUM_LAYERS, BATCH, HIDDEN), jnp.float32)

    # ---- fused T-step decode: one pallas_call, one grid point, fori_loop inside ----
    log_probs, (h_T, c_T) = decoder_decode_fused(input_ids_seq, lng_ids_seq, h0, c0, kparams)
    jax.block_until_ready((log_probs, h_T, c_T))

    # ---- reference: T sequential Decoder.forward calls in pure JAX ----
    h, c = h0, c0
    ref_outs = []
    for t in range(T):
        o, (h, c) = decoder_forward_ref(input_ids_seq[t], lng_ids_seq[t], h, c, raw)
        ref_outs.append(o[0])
    ref_out = jnp.stack(ref_outs)

    np.testing.assert_allclose(np.asarray(log_probs), np.asarray(ref_out), atol=1e-5, rtol=1e-5)
    np.testing.assert_allclose(np.asarray(h_T), np.asarray(h), atol=1e-5, rtol=1e-5)
    np.testing.assert_allclose(np.asarray(c_T), np.asarray(c), atol=1e-5, rtol=1e-5)

    # ---- single-step path (exact Decoder.forward signature / semantics) ----
    step_out, (h1, c1) = decoder_forward(input_ids_seq[0], lng_ids_seq[0], h0, c0, kparams)
    jax.block_until_ready((step_out, h1, c1))
    ref_step, (ref_h1, ref_c1) = decoder_forward_ref(input_ids_seq[0], lng_ids_seq[0], h0, c0, raw)
    np.testing.assert_allclose(np.asarray(step_out), np.asarray(ref_step), atol=1e-5, rtol=1e-5)
    np.testing.assert_allclose(np.asarray(h1), np.asarray(ref_h1), atol=1e-5, rtol=1e-5)
    np.testing.assert_allclose(np.asarray(c1), np.asarray(ref_c1), atol=1e-5, rtol=1e-5)

    assert log_probs.shape == (T, BATCH, N_LETTER)
    assert step_out.shape == (1, BATCH, N_LETTER)
    assert h_T.shape == (NUM_LAYERS, BATCH, HIDDEN)
    assert c_T.shape == (NUM_LAYERS, BATCH, HIDDEN)

    # TODO(synk): nn.Dropout is modeled as eval-mode identity (no RNG mask).
    print("KERNEL_OK")
</pallas_src>

<mosaic_0001>
module attributes {stable_mosaic.version = 11 : i64} {
  func.func @decoder_seq_kernel(%arg0: i32, %arg1: memref<6x8x128xf32, #tpu.memory_space<vmem>>, %arg2: memref<128x512xf32, #tpu.memory_space<vmem>>, %arg3: memref<3x32x128xf32, #tpu.memory_space<vmem>>, %arg4: memref<3x1x128xf32, #tpu.memory_space<vmem>>, %arg5: memref<32x128xf32, #tpu.memory_space<vmem>>, %arg6: memref<1x128xf32, #tpu.memory_space<vmem>>, %arg7: memref<8x128xf32, #tpu.memory_space<vmem>>, %arg8: memref<8x128xf32, #tpu.memory_space<vmem>>, %arg9: memref<6x8x128xf32, #tpu.memory_space<vmem>>, %arg10: memref<8x128xf32, #tpu.memory_space<vmem>>, %arg11: memref<8x128xf32, #tpu.memory_space<vmem>>) attributes {dimension_semantics = [#tpu.dimension_semantics<parallel>], iteration_bounds = array<i64: 1>, scalar_prefetch = 0 : i64, scratch_operands = 0 : i64, tpu.core_type = #tpu.core_type<tc>, window_params = [{transform_indices = @transform_0, window_bounds = array<i64: 6, 8, 128>}, {pipeline_mode = #tpu.pipeline_mode<synchronous>, transform_indices = @transform_1, window_bounds = array<i64: 128, 512>}, {pipeline_mode = #tpu.pipeline_mode<synchronous>, transform_indices = @transform_2, window_bounds = array<i64: 3, 32, 128>}, {pipeline_mode = #tpu.pipeline_mode<synchronous>, transform_indices = @transform_3, window_bounds = array<i64: 3, 1, 128>}, {pipeline_mode = #tpu.pipeline_mode<synchronous>, transform_indices = @transform_4, window_bounds = array<i64: 32, 128>}, {pipeline_mode = #tpu.pipeline_mode<synchronous>, transform_indices = @transform_5, window_bounds = array<i64: 1, 128>}, {transform_indices = @transform_6, window_bounds = array<i64: 8, 128>}, {transform_indices = @transform_7, window_bounds = array<i64: 8, 128>}, {transform_indices = @transform_8, window_bounds = array<i64: 6, 8, 128>}, {transform_indices = @transform_9, window_bounds = array<i64: 8, 128>}, {transform_indices = @transform_10, window_bounds = array<i64: 8, 128>}]} {
    %c0 = arith.constant 0 : index
    %c0_0 = arith.constant 0 : index
    %0 = vector.load %arg2[%c0, %c0_0] : memref<128x512xf32, #tpu.memory_space<vmem>>, vector<128x512xf32>
    %c0_1 = arith.constant 0 : index
    %c0_2 = arith.constant 0 : index
    %1 = vector.load %arg5[%c0_1, %c0_2] : memref<32x128xf32, #tpu.memory_space<vmem>>, vector<32x128xf32>
    %c0_3 = arith.constant 0 : index
    %c0_4 = arith.constant 0 : index
    %2 = vector.load %arg6[%c0_3, %c0_4] : memref<1x128xf32, #tpu.memory_space<vmem>>, vector<1x128xf32>
    %c0_5 = arith.constant 0 : index
    %c0_6 = arith.constant 0 : index
    %3 = vector.load %arg7[%c0_5, %c0_6] : memref<8x128xf32, #tpu.memory_space<vmem>>, vector<8x128xf32>
    %c0_7 = arith.constant 0 : index
    %c0_8 = arith.constant 0 : index
    %4 = vector.load %arg8[%c0_7, %c0_8] : memref<8x128xf32, #tpu.memory_space<vmem>>, vector<8x128xf32>
    %c0_i32 = arith.constant 0 : i32
    %cst = arith.constant dense<0.000000e+00> : vector<8x512xf32>
    %5 = tpu.matmul %3, %0, %cst {dimension_numbers = #tpu.dot_dimension_numbers<[1], [0], [0], [1], [0, 0, 1, 1], [], []>} : vector<8x128xf32>, vector<128x512xf32>, vector<8x512xf32> -> vector<8x512xf32>
    %6 = arith.index_cast %c0_i32 : i32 to index
    %c0_9 = arith.constant 0 : index
    %c0_10 = arith.constant 0 : index
    %7 = vector.load %arg1[%6, %c0_9, %c0_10] : memref<6x8x128xf32, #tpu.memory_space<vmem>>, vector<1x8x128xf32>
    %8 = vector.shape_cast %7 : vector<1x8x128xf32> to vector<8x128xf32>
    %9 = vector.extract_strided_slice %4 {offsets = [0, 0], sizes = [8, 32], strides = [1, 1]} : vector<8x128xf32> to vector<8x32xf32>
    %10 = vector.extract_strided_slice %5 {offsets = [0, 0], sizes = [8, 128], strides = [1, 1]} : vector<8x512xf32> to vector<8x128xf32>
    %11 = arith.addf %8, %10 : vector<8x128xf32>
    %12 = arith.negf %11 : vector<8x128xf32>
    %13 = math.exp %12 : vector<8x128xf32>
    %cst_11 = arith.constant 1.000000e+00 : f32
    %14 = vector.broadcast %cst_11 : f32 to vector<8x128xf32>
    %15 = arith.addf %14, %13 : vector<8x128xf32>
    %16 = arith.divf %14, %15 : vector<8x128xf32>
    %17 = math.tanh %11 : vector<8x128xf32>
    %18 = vector.extract_strided_slice %16 {offsets = [0, 0], sizes = [8, 32], strides = [1, 1]} : vector<8x128xf32> to vector<8x32xf32>
    %19 = vector.extract_strided_slice %16 {offsets = [0, 32], sizes = [8, 32], strides = [1, 1]} : vector<8x128xf32> to vector<8x32xf32>
    %20 = vector.extract_strided_slice %17 {offsets = [0, 64], sizes = [8, 32], strides = [1, 1]} : vector<8x128xf32> to vector<8x32xf32>
    %21 = vector.extract_strided_slice %16 {offsets = [0, 96], sizes = [8, 32], strides = [1, 1]} : vector<8x128xf32> to vector<8x32xf32>
    %22 = arith.mulf %19, %9 : vector<8x32xf32>
    %23 = arith.mulf %18, %20 : vector<8x32xf32>
    %24 = arith.addf %22, %23 : vector<8x32xf32>
    %25 = math.tanh %24 : vector<8x32xf32>
    %26 = arith.mulf %21, %25 : vector<8x32xf32>
    %27 = vector.extract_strided_slice %4 {offsets = [0, 32], sizes = [8, 32], strides = [1, 1]} : vector<8x128xf32> to vector<8x32xf32>
    %c0_12 = arith.constant 0 : index
    %c0_13 = arith.constant 0 : index
    %c0_14 = arith.constant 0 : index
    %28 = vector.load %arg3[%c0_12, %c0_13, %c0_14] : memref<3x32x128xf32, #tpu.memory_space<vmem>>, vector<1x32x128xf32>
    %29 = vector.shape_cast %28 : vector<1x32x128xf32> to vector<32x128xf32>
    %cst_15 = arith.constant dense<0.000000e+00> : vector<8x128xf32>
    %30 = tpu.matmul %26, %29, %cst_15 {dimension_numbers = #tpu.dot_dimension_numbers<[1], [0], [0], [1], [0, 0, 1, 1], [], []>} : vector<8x32xf32>, vector<32x128xf32>, vector<8x128xf32> -> vector<8x128xf32>
    %31 = vector.extract_strided_slice %5 {offsets = [0, 128], sizes = [8, 128], strides = [1, 1]} : vector<8x512xf32> to vector<8x128xf32>
    %32 = arith.addf %30, %31 : vector<8x128xf32>
    %c0_16 = arith.constant 0 : index
    %c0_17 = arith.constant 0 : index
    %c0_18 = arith.constant 0 : index
    %33 = vector.load %arg4[%c0_16, %c0_17, %c0_18] : memref<3x1x128xf32, #tpu.memory_space<vmem>>, vector<1x1x128xf32>
    %34 = vector.shape_cast %33 : vector<1x1x128xf32> to vector<1x128xf32>
    %35 = vector.broadcast %34 : vector<1x128xf32> to vector<8x128xf32>
    %36 = arith.addf %32, %35 : vector<8x128xf32>
    %37 = arith.negf %36 : vector<8x128xf32>
    %38 = math.exp %37 : vector<8x128xf32>
    %cst_19 = arith.constant 1.000000e+00 : f32
    %39 = vector.broadcast %cst_19 : f32 to vector<8x128xf32>
    %40 = arith.addf %39, %38 : vector<8x128xf32>
    %41 = arith.divf %39, %40 : vector<8x128xf32>
    %42 = math.tanh %36 : vector<8x128xf32>
    %43 = vector.extract_strided_slice %41 {offsets = [0, 0], sizes = [8, 32], strides = [1, 1]} : vector<8x128xf32> to vector<8x32xf32>
    %44 = vector.extract_strided_slice %41 {offsets = [0, 32], sizes = [8, 32], strides = [1, 1]} : vector<8x128xf32> to vector<8x32xf32>
    %45 = vector.extract_strided_slice %42 {offsets = [0, 64], sizes = [8, 32], strides = [1, 1]} : vector<8x128xf32> to vector<8x32xf32>
    %46 = vector.extract_strided_slice %41 {offsets = [0, 96], sizes = [8, 32], strides = [1, 1]} : vector<8x128xf32> to vector<8x32xf32>
    %47 = arith.mulf %44, %27 : vector<8x32xf32>
    %48 = arith.mulf %43, %45 : vector<8x32xf32>
    %49 = arith.addf %47, %48 : vector<8x32xf32>
    %50 = math.tanh %49 : vector<8x32xf32>
    %51 = arith.mulf %46, %50 : vector<8x32xf32>
    %52 = vector.extract_strided_slice %4 {offsets = [0, 64], sizes = [8, 32], strides = [1, 1]} : vector<8x128xf32> to vector<8x32xf32>
    %c1 = arith.constant 1 : index
    %c0_20 = arith.constant 0 : index
    %c0_21 = arith.constant 0 : index
    %53 = vector.load %arg3[%c1, %c0_20, %c0_21] : memref<3x32x128xf32, #tpu.memory_space<vmem>>, vector<1x32x128xf32>
    %54 = vector.shape_cast %53 : vector<1x32x128xf32> to vector<32x128xf32>
    %cst_22 = arith.constant dense<0.000000e+00> : vector<8x128xf32>
    %55 = tpu.matmul %51, %54, %cst_22 {dimension_numbers = #tpu.dot_dimension_numbers<[1], [0], [0], [1], [0, 0, 1, 1], [], []>} : vector<8x32xf32>, vector<32x128xf32>, vector<8x128xf32> -> vector<8x128xf32>
    %56 = vector.extract_strided_slice %5 {offsets = [0, 256], sizes = [8, 128], strides = [1, 1]} : vector<8x512xf32> to vector<8x128xf32>
    %57 = arith.addf %55, %56 : vector<8x128xf32>
    %c1_23 = arith.constant 1 : index
    %c0_24 = arith.constant 0 : index
    %c0_25 = arith.constant 0 : index
    %58 = vector.load %arg4[%c1_23, %c0_24, %c0_25] : memref<3x1x128xf32, #tpu.memory_space<vmem>>, vector<1x1x128xf32>
    %59 = vector.shape_cast %58 : vector<1x1x128xf32> to vector<1x128xf32>
    %60 = vector.broadcast %59 : vector<1x128xf32> to vector<8x128xf32>
    %61 = arith.addf %57, %60 : vector<8x128xf32>
    %62 = arith.negf %61 : vector<8x128xf32>
    %63 = math.exp %62 : vector<8x128xf32>
    %cst_26 = arith.constant 1.000000e+00 : f32
    %64 = vector.broadcast %cst_26 : f32 to vector<8x128xf32>
    %65 = arith.addf %64, %63 : vector<8x128xf32>
    %66 = arith.divf %64, %65 : vector<8x128xf32>
    %67 = math.tanh %61 : vector<8x128xf32>
    %68 = vector.extract_strided_slice %66 {offsets = [0, 0], sizes = [8, 32], strides = [1, 1]} : vector<8x128xf32> to vector<8x32xf32>
    %69 = vector.extract_strided_slice %66 {offsets = [0, 32], sizes = [8, 32], strides = [1, 1]} : vector<8x128xf32> to vector<8x32xf32>
    %70 = vector.extract_strided_slice %67 {offsets = [0, 64], sizes = [8, 32], strides = [1, 1]} : vector<8x128xf32> to vector<8x32xf32>
    %71 = vector.extract_strided_slice %66 {offsets = [0, 96], sizes = [8, 32], strides = [1, 1]} : vector<8x128xf32> to vector<8x32xf32>
    %72 = arith.mulf %69, %52 : vector<8x32xf32>
    %73 = arith.mulf %68, %70 : vector<8x32xf32>
    %74 = arith.addf %72, %73 : vector<8x32xf32>
    %75 = math.tanh %74 : vector<8x32xf32>
    %76 = arith.mulf %71, %75 : vector<8x32xf32>
    %77 = vector.extract_strided_slice %4 {offsets = [0, 96], sizes = [8, 32], strides = [1, 1]} : vector<8x128xf32> to vector<8x32xf32>
    %c2 = arith.constant 2 : index
    %c0_27 = arith.constant 0 : index
    %c0_28 = arith.constant 0 : index
    %78 = vector.load %arg3[%c2, %c0_27, %c0_28] : memref<3x32x128xf32, #tpu.memory_space<vmem>>, vector<1x32x128xf32>
    %79 = vector.shape_cast %78 : vector<1x32x128xf32> to vector<32x128xf32>
    %cst_29 = arith.constant dense<0.000000e+00> : vector<8x128xf32>
    %80 = tpu.matmul %76, %79, %cst_29 {dimension_numbers = #tpu.dot_dimension_numbers<[1], [0], [0], [1], [0, 0, 1, 1], [], []>} : vector<8x32xf32>, vector<32x128xf32>, vector<8x128xf32> -> vector<8x128xf32>
    %81 = vector.extract_strided_slice %5 {offsets = [0, 384], sizes = [8, 128], strides = [1, 1]} : vector<8x512xf32> to vector<8x128xf32>
    %82 = arith.addf %80, %81 : vector<8x128xf32>
    %c2_30 = arith.constant 2 : index
    %c0_31 = arith.constant 0 : index
    %c0_32 = arith.constant 0 : index
    %83 = vector.load %arg4[%c2_30, %c0_31, %c0_32] : memref<3x1x128xf32, #tpu.memory_space<vmem>>, vector<1x1x128xf32>
    %84 = vector.shape_cast %83 : vector<1x1x128xf32> to vector<1x128xf32>
    %85 = vector.broadcast %84 : vector<1x128xf32> to vector<8x128xf32>
    %86 = arith.addf %82, %85 : vector<8x128xf32>
    %87 = arith.negf %86 : vector<8x128xf32>
    %88 = math.exp %87 : vector<8x128xf32>
    %cst_33 = arith.constant 1.000000e+00 : f32
    %89 = vector.broadcast %cst_33 : f32 to vector<8x128xf32>
    %90 = arith.addf %89, %88 : vector<8x128xf32>
    %91 = arith.divf %89, %90 : vector<8x128xf32>
    %92 = math.tanh %86 : vector<8x128xf32>
    %93 = vector.extract_strided_slice %91 {offsets = [0, 0], sizes = [8, 32], strides = [1, 1]} : vector<8x128xf32> to vector<8x32xf32>
    %94 = vector.extract_strided_slice %91 {offsets = [0, 32], sizes = [8, 32], strides = [1, 1]} : vector<8x128xf32> to vector<8x32xf32>
    %95 = vector.extract_strided_slice %92 {offsets = [0, 64], sizes = [8, 32], strides = [1, 1]} : vector<8x128xf32> to vector<8x32xf32>
    %96 = vector.extract_strided_slice %91 {offsets = [0, 96], sizes = [8, 32], strides = [1, 1]} : vector<8x128xf32> to vector<8x32xf32>
    %97 = arith.mulf %94, %77 : vector<8x32xf32>
    %98 = arith.mulf %93, %95 : vector<8x32xf32>
    %99 = arith.addf %97, %98 : vector<8x32xf32>
    %100 = math.tanh %99 : vector<8x32xf32>
    %101 = arith.mulf %96, %100 : vector<8x32xf32>
    %102 = tpu.concatenate %26, %51, %76, %101 in 1 : vector<8x32xf32>, vector<8x32xf32>, vector<8x32xf32>, vector<8x32xf32> -> vector<8x128xf32>
    %103 = tpu.concatenate %24, %49, %74, %99 in 1 : vector<8x32xf32>, vector<8x32xf32>, vector<8x32xf32>, vector<8x32xf32> -> vector<8x128xf32>
    %cst_34 = arith.constant dense<0.000000e+00> : vector<8x128xf32>
    %104 = tpu.matmul %101, %1, %cst_34 {dimension_numbers = #tpu.dot_dimension_numbers<[1], [0], [0], [1], [0, 0, 1, 1], [], []>} : vector<8x32xf32>, vector<32x128xf32>, vector<8x128xf32> -> vector<8x128xf32>
    %105 = vector.broadcast %2 : vector<1x128xf32> to vector<8x128xf32>
    %106 = arith.addf %104, %105 : vector<8x128xf32>
    %cst_35 = arith.constant dense<0xFF800000> : vector<8xf32>
    %107 = vector.multi_reduction <maximumf>, %106, %cst_35 [1] : vector<8x128xf32> to vector<8xf32>
    %108 = vector.shape_cast %107 : vector<8xf32> to vector<8x1xf32>
    %109 = vector.broadcast %108 : vector<8x1xf32> to vector<8x128xf32>
    %110 = arith.subf %106, %109 : vector<8x128xf32>
    %111 = math.exp %110 : vector<8x128xf32>
    %cst_36 = arith.constant dense<0.000000e+00> : vector<8xf32>
    %112 = vector.multi_reduction <add>, %111, %cst_36 [1] : vector<8x128xf32> to vector<8xf32>
    %113 = vector.shape_cast %112 : vector<8xf32> to vector<8x1xf32>
    %114 = math.log %113 : vector<8x1xf32>
    %115 = vector.broadcast %114 : vector<8x1xf32> to vector<8x128xf32>
    %116 = arith.subf %110, %115 : vector<8x128xf32>
    %117 = arith.index_cast %c0_i32 : i32 to index
    %c0_37 = arith.constant 0 : index
    %c0_38 = arith.constant 0 : index
    %118 = vector.load %arg9[%117, %c0_37, %c0_38] : memref<6x8x128xf32, #tpu.memory_space<vmem>>, vector<1x8x128xf32>
    %119 = vector.shape_cast %118 : vector<1x8x128xf32> to vector<8x128xf32>
    %120 = vector.shape_cast %116 : vector<8x128xf32> to vector<1x8x128xf32>
    tpu.vector_store %arg9[%117, %c0_37, %c0_38], %120 {strides = array<i32>} : memref<6x8x128xf32, #tpu.memory_space<vmem>>, vector<1x8x128xf32>,
    %c1_i32 = arith.constant 1 : i32
    %cst_39 = arith.constant dense<0.000000e+00> : vector<8x512xf32>
    %121 = tpu.matmul %102, %0, %cst_39 {dimension_numbers = #tpu.dot_dimension_numbers<[1], [0], [0], [1], [0, 0, 1, 1], [], []>} : vector<8x128xf32>, vector<128x512xf32>, vector<8x512xf32> -> vector<8x512xf32>
    %122 = arith.index_cast %c1_i32 : i32 to index
    %c0_40 = arith.constant 0 : index
    %c0_41 = arith.constant 0 : index
    %123 = vector.load %arg1[%122, %c0_40, %c0_41] : memref<6x8x128xf32, #tpu.memory_space<vmem>>, vector<1x8x128xf32>
    %124 = vector.shape_cast %123 : vector<1x8x128xf32> to vector<8x128xf32>
    %125 = vector.extract_strided_slice %103 {offsets = [0, 0], sizes = [8, 32], strides = [1, 1]} : vector<8x128xf32> to vector<8x32xf32>
    %126 = vector.extract_strided_slice %121 {offsets = [0, 0], sizes = [8, 128], strides = [1, 1]} : vector<8x512xf32> to vector<8x128xf32>
    %127 = arith.addf %124, %126 : vector<8x128xf32>
    %128 = arith.negf %127 : vector<8x128xf32>
    %129 = math.exp %128 : vector<8x128xf32>
    %cst_42 = arith.constant 1.000000e+00 : f32
    %130 = vector.broadcast %cst_42 : f32 to vector<8x128xf32>
    %131 = arith.addf %130, %129 : vector<8x128xf32>
    %132 = arith.divf %130, %131 : vector<8x128xf32>
    %133 = math.tanh %127 : vector<8x128xf32>
    %134 = vector.extract_strided_slice %132 {offsets = [0, 0], sizes = [8, 32], strides = [1, 1]} : vector<8x128xf32> to vector<8x32xf32>
    %135 = vector.extract_strided_slice %132 {offsets = [0, 32], sizes = [8, 32], strides = [1, 1]} : vector<8x128xf32> to vector<8x32xf32>
    %136 = vector.extract_strided_slice %133 {offsets = [0, 64], sizes = [8, 32], strides = [1, 1]} : vector<8x128xf32> to vector<8x32xf32>
    %137 = vector.extract_strided_slice %132 {offsets = [0, 96], sizes = [8, 32], strides = [1, 1]} : vector<8x128xf32> to vector<8x32xf32>
    %138 = arith.mulf %135, %125 : vector<8x32xf32>
    %139 = arith.mulf %134, %136 : vector<8x32xf32>
    %140 = arith.addf %138, %139 : vector<8x32xf32>
    %141 = math.tanh %140 : vector<8x32xf32>
    %142 = arith.mulf %137, %141 : vector<8x32xf32>
    %143 = vector.extract_strided_slice %103 {offsets = [0, 32], sizes = [8, 32], strides = [1, 1]} : vector<8x128xf32> to vector<8x32xf32>
    %c0_43 = arith.constant 0 : index
    %c0_44 = arith.constant 0 : index
    %c0_45 = arith.constant 0 : index
    %144 = vector.load %arg3[%c0_43, %c0_44, %c0_45] : memref<3x32x128xf32, #tpu.memory_space<vmem>>, vector<1x32x128xf32>
    %145 = vector.shape_cast %144 : vector<1x32x128xf32> to vector<32x128xf32>
    %cst_46 = arith.constant dense<0.000000e+00> : vector<8x128xf32>
    %146 = tpu.matmul %142, %145, %cst_46 {dimension_numbers = #tpu.dot_dimension_numbers<[1], [0], [0], [1], [0, 0, 1, 1], [], []>} : vector<8x32xf32>, vector<32x128xf32>, vector<8x128xf32> -> vector<8x128xf32>
    %147 = vector.extract_strided_slice %121 {offsets = [0, 128], sizes = [8, 128], strides = [1, 1]} : vector<8x512xf32> to vector<8x128xf32>
    %148 = arith.addf %146, %147 : vector<8x128xf32>
    %c0_47 = arith.constant 0 : index
    %c0_48 = arith.constant 0 : index
    %c0_49 = arith.constant 0 : index
    %149 = vector.load %arg4[%c0_47, %c0_48, %c0_49] : memref<3x1x128xf32, #tpu.memory_space<vmem>>, vector<1x1x128xf32>
    %150 = vector.shape_cast %149 : vector<1x1x128xf32> to vector<1x128xf32>
    %151 = vector.broadcast %150 : vector<1x128xf32> to vector<8x128xf32>
    %152 = arith.addf %148, %151 : vector<8x128xf32>
    %153 = arith.negf %152 : vector<8x128xf32>
    %154 = math.exp %153 : vector<8x128xf32>
    %cst_50 = arith.constant 1.000000e+00 : f32
    %155 = vector.broadcast %cst_50 : f32 to vector<8x128xf32>
    %156 = arith.addf %155, %154 : vector<8x128xf32>
    %157 = arith.divf %155, %156 : vector<8x128xf32>
    %158 = math.tanh %152 : vector<8x128xf32>
    %159 = vector.extract_strided_slice %157 {offsets = [0, 0], sizes = [8, 32], strides = [1, 1]} : vector<8x128xf32> to vector<8x32xf32>
    %160 = vector.extract_strided_slice %157 {offsets = [0, 32], sizes = [8, 32], strides = [1, 1]} : vector<8x128xf32> to vector<8x32xf32>
    %161 = vector.extract_strided_slice %158 {offsets = [0, 64], sizes = [8, 32], strides = [1, 1]} : vector<8x128xf32> to vector<8x32xf32>
    %162 = vector.extract_strided_slice %157 {offsets = [0, 96], sizes = [8, 32], strides = [1, 1]} : vector<8x128xf32> to vector<8x32xf32>
    %163 = arith.mulf %160, %143 : vector<8x32xf32>
    %164 = arith.mulf %159, %161 : vector<8x32xf32>
    %165 = arith.addf %163, %164 : vector<8x32xf32>
    %166 = math.tanh %165 : vector<8x32xf32>
    %167 = arith.mulf %162, %166 : vector<8x32xf32>
    %168 = vector.extract_strided_slice %103 {offsets = [0, 64], sizes = [8, 32], strides = [1, 1]} : vector<8x128xf32> to vector<8x32xf32>
    %c1_51 = arith.constant 1 : index
    %c0_52 = arith.constant 0 : index
    %c0_53 = arith.constant 0 : index
    %169 = vector.load %arg3[%c1_51, %c0_52, %c0_53] : memref<3x32x128xf32, #tpu.memory_space<vmem>>, vector<1x32x128xf32>
    %170 = vector.shape_cast %169 : vector<1x32x128xf32> to vector<32x128xf32>
    %cst_54 = arith.constant dense<0.000000e+00> : vector<8x128xf32>
    %171 = tpu.matmul %167, %170, %cst_54 {dimension_numbers = #tpu.dot_dimension_numbers<[1], [0], [0], [1], [0, 0, 1, 1], [], []>} : vector<8x32xf32>, vector<32x128xf32>, vector<8x128xf32> -> vector<8x128xf32>
    %172 = vector.extract_strided_slice %121 {offsets = [0, 256], sizes = [8, 128], strides = [1, 1]} : vector<8x512xf32> to vector<8x128xf32>
    %173 = arith.addf %171, %172 : vector<8x128xf32>
    %c1_55 = arith.constant 1 : index
    %c0_56 = arith.constant 0 : index
    %c0_57 = arith.constant 0 : index
    %174 = vector.load %arg4[%c1_55, %c0_56, %c0_57] : memref<3x1x128xf32, #tpu.memory_space<vmem>>, vector<1x1x128xf32>
    %175 = vector.shape_cast %174 : vector<1x1x128xf32> to vector<1x128xf32>
    %176 = vector.broadcast %175 : vector<1x128xf32> to vector<8x128xf32>
    %177 = arith.addf %173, %176 : vector<8x128xf32>
    %178 = arith.negf %177 : vector<8x128xf32>
    %179 = math.exp %178 : vector<8x128xf32>
    %cst_58 = arith.constant 1.000000e+00 : f32
    %180 = vector.broadcast %cst_58 : f32 to vector<8x128xf32>
    %181 = arith.addf %180, %179 : vector<8x128xf32>
    %182 = arith.divf %180, %181 : vector<8x128xf32>
    %183 = math.tanh %177 : vector<8x128xf32>
    %184 = vector.extract_strided_slice %182 {offsets = [0, 0], sizes = [8, 32], strides = [1, 1]} : vector<8x128xf32> to vector<8x32xf32>
    %185 = vector.extract_strided_slice %182 {offsets = [0, 32], sizes = [8, 32], strides = [1, 1]} : vector<8x128xf32> to vector<8x32xf32>
    %186 = vector.extract_strided_slice %183 {offsets = [0, 64], sizes = [8, 32], strides = [1, 1]} : vector<8x128xf32> to vector<8x32xf32>
    %187 = vector.extract_strided_slice %182 {offsets = [0, 96], sizes = [8, 32], strides = [1, 1]} : vector<8x128xf32> to vector<8x32xf32>
    %188 = arith.mulf %185, %168 : vector<8x32xf32>
    %189 = arith.mulf %184, %186 : vector<8x32xf32>
    %190 = arith.addf %188, %189 : vector<8x32xf32>
    %191 = math.tanh %190 : vector<8x32xf32>
    %192 = arith.mulf %187, %191 : vector<8x32xf32>
    %193 = vector.extract_strided_slice %103 {offsets = [0, 96], sizes = [8, 32], strides = [1, 1]} : vector<8x128xf32> to vector<8x32xf32>
    %c2_59 = arith.constant 2 : index
    %c0_60 = arith.constant 0 : index
    %c0_61 = arith.constant 0 : index
    %194 = vector.load %arg3[%c2_59, %c0_60, %c0_61] : memref<3x32x128xf32, #tpu.memory_space<vmem>>, vector<1x32x128xf32>
    %195 = vector.shape_cast %194 : vector<1x32x128xf32> to vector<32x128xf32>
    %cst_62 = arith.constant dense<0.000000e+00> : vector<8x128xf32>
    %196 = tpu.matmul %192, %195, %cst_62 {dimension_numbers = #tpu.dot_dimension_numbers<[1], [0], [0], [1], [0, 0, 1, 1], [], []>} : vector<8x32xf32>, vector<32x128xf32>, vector<8x128xf32> -> vector<8x128xf32>
    %197 = vector.extract_strided_slice %121 {offsets = [0, 384], sizes = [8, 128], strides = [1, 1]} : vector<8x512xf32> to vector<8x128xf32>
    %198 = arith.addf %196, %197 : vector<8x128xf32>
    %c2_63 = arith.constant 2 : index
    %c0_64 = arith.constant 0 : index
    %c0_65 = arith.constant 0 : index
    %199 = vector.load %arg4[%c2_63, %c0_64, %c0_65] : memref<3x1x128xf32, #tpu.memory_space<vmem>>, vector<1x1x128xf32>
    %200 = vector.shape_cast %199 : vector<1x1x128xf32> to vector<1x128xf32>
    %201 = vector.broadcast %200 : vector<1x128xf32> to vector<8x128xf32>
    %202 = arith.addf %198, %201 : vector<8x128xf32>
    %203 = arith.negf %202 : vector<8x128xf32>
    %204 = math.exp %203 : vector<8x128xf32>
    %cst_66 = arith.constant 1.000000e+00 : f32
    %205 = vector.broadcast %cst_66 : f32 to vector<8x128xf32>
    %206 = arith.addf %205, %204 : vector<8x128xf32>
    %207 = arith.divf %205, %206 : vector<8x128xf32>
    %208 = math.tanh %202 : vector<8x128xf32>
    %209 = vector.extract_strided_slice %207 {offsets = [0, 0], sizes = [8, 32], strides = [1, 1]} : vector<8x128xf32> to vector<8x32xf32>
    %210 = vector.extract_strided_slice %207 {offsets = [0, 32], sizes = [8, 32], strides = [1, 1]} : vector<8x128xf32> to vector<8x32xf32>
    %211 = vector.extract_strided_slice %208 {offsets = [0, 64], sizes = [8, 32], strides = [1, 1]} : vector<8x128xf32> to vector<8x32xf32>
    %212 = vector.extract_strided_slice %207 {offsets = [0, 96], sizes = [8, 32], strides = [1, 1]} : vector<8x128xf32> to vector<8x32xf32>
    %213 = arith.mulf %210, %193 : vector<8x32xf32>
    %214 = arith.mulf %209, %211 : vector<8x32xf32>
    %215 = arith.addf %213, %214 : vector<8x32xf32>
    %216 = math.tanh %215 : vector<8x32xf32>
    %217 = arith.mulf %212, %216 : vector<8x32xf32>
    %218 = tpu.concatenate %142, %167, %192, %217 in 1 : vector<8x32xf32>, vector<8x32xf32>, vector<8x32xf32>, vector<8x32xf32> -> vector<8x128xf32>
    %219 = tpu.concatenate %140, %165, %190, %215 in 1 : vector<8x32xf32>, vector<8x32xf32>, vector<8x32xf32>, vector<8x32xf32> -> vector<8x128xf32>
    %cst_67 = arith.constant dense<0.000000e+00> : vector<8x128xf32>
    %220 = tpu.matmul %217, %1, %cst_67 {dimension_numbers = #tpu.dot_dimension_numbers<[1], [0], [0], [1], [0, 0, 1, 1], [], []>} : vector<8x32xf32>, vector<32x128xf32>, vector<8x128xf32> -> vector<8x128xf32>
    %221 = vector.broadcast %2 : vector<1x128xf32> to vector<8x128xf32>
    %222 = arith.addf %220, %221 : vector<8x128xf32>
    %cst_68 = arith.constant dense<0xFF800000> : vector<8xf32>
    %223 = vector.multi_reduction <maximumf>, %222, %cst_68 [1] : vector<8x128xf32> to vector<8xf32>
    %224 = vector.shape_cast %223 : vector<8xf32> to vector<8x1xf32>
    %225 = vector.broadcast %224 : vector<8x1xf32> to vector<8x128xf32>
    %226 = arith.subf %222, %225 : vector<8x128xf32>
    %227 = math.exp %226 : vector<8x128xf32>
    %cst_69 = arith.constant dense<0.000000e+00> : vector<8xf32>
    %228 = vector.multi_reduction <add>, %227, %cst_69 [1] : vector<8x128xf32> to vector<8xf32>
    %229 = vector.shape_cast %228 : vector<8xf32> to vector<8x1xf32>
    %230 = math.log %229 : vector<8x1xf32>
    %231 = vector.broadcast %230 : vector<8x1xf32> to vector<8x128xf32>
    %232 = arith.subf %226, %231 : vector<8x128xf32>
    %233 = arith.index_cast %c1_i32 : i32 to index
    %c0_70 = arith.constant 0 : index
    %c0_71 = arith.constant 0 : index
    %234 = vector.load %arg9[%233, %c0_70, %c0_71] : memref<6x8x128xf32, #tpu.memory_space<vmem>>, vector<1x8x128xf32>
    %235 = vector.shape_cast %234 : vector<1x8x128xf32> to vector<8x128xf32>
    %236 = vector.shape_cast %232 : vector<8x128xf32> to vector<1x8x128xf32>
    tpu.vector_store %arg9[%233, %c0_70, %c0_71], %236 {strides = array<i32>} : memref<6x8x128xf32, #tpu.memory_space<vmem>>, vector<1x8x128xf32>,
    %c2_i32 = arith.constant 2 : i32
    %cst_72 = arith.constant dense<0.000000e+00> : vector<8x512xf32>
    %237 = tpu.matmul %218, %0, %cst_72 {dimension_numbers = #tpu.dot_dimension_numbers<[1], [0], [0], [1], [0, 0, 1, 1], [], []>} : vector<8x128xf32>, vector<128x512xf32>, vector<8x512xf32> -> vector<8x512xf32>
    %238 = arith.index_cast %c2_i32 : i32 to index
    %c0_73 = arith.constant 0 : index
    %c0_74 = arith.constant 0 : index
    %239 = vector.load %arg1[%238, %c0_73, %c0_74] : memref<6x8x128xf32, #tpu.memory_space<vmem>>, vector<1x8x128xf32>
    %240 = vector.shape_cast %239 : vector<1x8x128xf32> to vector<8x128xf32>
    %241 = vector.extract_strided_slice %219 {offsets = [0, 0], sizes = [8, 32], strides = [1, 1]} : vector<8x128xf32> to vector<8x32xf32>
    %242 = vector.extract_strided_slice %237 {offsets = [0, 0], sizes = [8, 128], strides = [1, 1]} : vector<8x512xf32> to vector<8x128xf32>
    %243 = arith.addf %240, %242 : vector<8x128xf32>
    %244 = arith.negf %243 : vector<8x128xf32>
    %245 = math.exp %244 : vector<8x128xf32>
    %cst_75 = arith.constant 1.000000e+00 : f32
    %246 = vector.broadcast %cst_75 : f32 to vector<8x128xf32>
    %247 = arith.addf %246, %245 : vector<8x128xf32>
    %248 = arith.divf %246, %247 : vector<8x128xf32>
    %249 = math.tanh %243 : vector<8x128xf32>
    %250 = vector.extract_strided_slice %248 {offsets = [0, 0], sizes = [8, 32], strides = [1, 1]} : vector<8x128xf32> to vector<8x32xf32>
    %251 = vector.extract_strided_slice %248 {offsets = [0, 32], sizes = [8, 32], strides = [1, 1]} : vector<8x128xf32> to vector<8x32xf32>
    %252 = vector.extract_strided_slice %249 {offsets = [0, 64], sizes = [8, 32], strides = [1, 1]} : vector<8x128xf32> to vector<8x32xf32>
    %253 = vector.extract_strided_slice %248 {offsets = [0, 96], sizes = [8, 32], strides = [1, 1]} : vector<8x128xf32> to vector<8x32xf32>
    %254 = arith.mulf %251, %241 : vector<8x32xf32>
    %255 = arith.mulf %250, %252 : vector<8x32xf32>
    %256 = arith.addf %254, %255 : vector<8x32xf32>
    %257 = math.tanh %256 : vector<8x32xf32>
    %258 = arith.mulf %253, %257 : vector<8x32xf32>
    %259 = vector.extract_strided_slice %219 {offsets = [0, 32], sizes = [8, 32], strides = [1, 1]} : vector<8x128xf32> to vector<8x32xf32>
    %c0_76 = arith.constant 0 : index
    %c0_77 = arith.constant 0 : index
    %c0_78 = arith.constant 0 : index
    %260 = vector.load %arg3[%c0_76, %c0_77, %c0_78] : memref<3x32x128xf32, #tpu.memory_space<vmem>>, vector<1x32x128xf32>
    %261 = vector.shape_cast %260 : vector<1x32x128xf32> to vector<32x128xf32>
    %cst_79 = arith.constant dense<0.000000e+00> : vector<8x128xf32>
    %262 = tpu.matmul %258, %261, %cst_79 {dimension_numbers = #tpu.dot_dimension_numbers<[1], [0], [0], [1], [0, 0, 1, 1], [], []>} : vector<8x32xf32>, vector<32x128xf32>, vector<8x128xf32> -> vector<8x128xf32>
    %263 = vector.extract_strided_slice %237 {offsets = [0, 128], sizes = [8, 128], strides = [1, 1]} : vector<8x512xf32> to vector<8x128xf32>
    %264 = arith.addf %262, %263 : vector<8x128xf32>
    %c0_80 = arith.constant 0 : index
    %c0_81 = arith.constant 0 : index
    %c0_82 = arith.constant 0 : index
    %265 = vector.load %arg4[%c0_80, %c0_81, %c0_82] : memref<3x1x128xf32, #tpu.memory_space<vmem>>, vector<1x1x128xf32>
    %266 = vector.shape_cast %265 : vector<1x1x128xf32> to vector<1x128xf32>
    %267 = vector.broadcast %266 : vector<1x128xf32> to vector<8x128xf32>
    %268 = arith.addf %264, %267 : vector<8x128xf32>
    %269 = arith.negf %268 : vector<8x128xf32>
    %270 = math.exp %269 : vector<8x128xf32>
    %cst_83 = arith.constant 1.000000e+00 : f32
    %271 = vector.broadcast %cst_83 : f32 to vector<8x128xf32>
    %272 = arith.addf %271, %270 : vector<8x128xf32>
    %273 = arith.divf %271, %272 : vector<8x128xf32>
    %274 = math.tanh %268 : vector<8x128xf32>
    %275 = vector.extract_strided_slice %273 {offsets = [0, 0], sizes = [8, 32], strides = [1, 1]} : vector<8x128xf32> to vector<8x32xf32>
    %276 = vector.extract_strided_slice %273 {offsets = [0, 32], sizes = [8, 32], strides = [1, 1]} : vector<8x128xf32> to vector<8x32xf32>
    %277 = vector.extract_strided_slice %274 {offsets = [0, 64], sizes = [8, 32], strides = [1, 1]} : vector<8x128xf32> to vector<8x32xf32>
    %278 = vector.extract_strided_slice %273 {offsets = [0, 96], sizes = [8, 32], strides = [1, 1]} : vector<8x128xf32> to vector<8x32xf32>
    %279 = arith.mulf %276, %259 : vector<8x32xf32>
    %280 = arith.mulf %275, %277 : vector<8x32xf32>
    %281 = arith.addf %279, %280 : vector<8x32xf32>
    %282 = math.tanh %281 : vector<8x32xf32>
    %283 = arith.mulf %278, %282 : vector<8x32xf32>
    %284 = vector.extract_strided_slice %219 {offsets = [0, 64], sizes = [8, 32], strides = [1, 1]} : vector<8x128xf32> to vector<8x32xf32>
    %c1_84 = arith.constant 1 : index
    %c0_85 = arith.constant 0 : index
    %c0_86 = arith.constant 0 : index
    %285 = vector.load %arg3[%c1_84, %c0_85, %c0_86] : memref<3x32x128xf32, #tpu.memory_space<vmem>>, vector<1x32x128xf32>
    %286 = vector.shape_cast %285 : vector<1x32x128xf32> to vector<32x128xf32>
    %cst_87 = arith.constant dense<0.000000e+00> : vector<8x128xf32>
    %287 = tpu.matmul %283, %286, %cst_87 {dimension_numbers = #tpu.dot_dimension_numbers<[1], [0], [0], [1], [0, 0, 1, 1], [], []>} : vector<8x32xf32>, vector<32x128xf32>, vector<8x128xf32> -> vector<8x128xf32>
    %288 = vector.extract_strided_slice %237 {offsets = [0, 256], sizes = [8, 128], strides = [1, 1]} : vector<8x512xf32> to vector<8x128xf32>
    %289 = arith.addf %287, %288 : vector<8x128xf32>
    %c1_88 = arith.constant 1 : index
    %c0_89 = arith.constant 0 : index
    %c0_90 = arith.constant 0 : index
    %290 = vector.load %arg4[%c1_88, %c0_89, %c0_90] : memref<3x1x128xf32, #tpu.memory_space<vmem>>, vector<1x1x128xf32>
    %291 = vector.shape_cast %290 : vector<1x1x128xf32> to vector<1x128xf32>
    %292 = vector.broadcast %291 : vector<1x128xf32> to vector<8x128xf32>
    %293 = arith.addf %289, %292 : vector<8x128xf32>
    %294 = arith.negf %293 : vector<8x128xf32>
    %295 = math.exp %294 : vector<8x128xf32>
    %cst_91 = arith.constant 1.000000e+00 : f32
    %296 = vector.broadcast %cst_91 : f32 to vector<8x128xf32>
    %297 = arith.addf %296, %295 : vector<8x128xf32>
    %298 = arith.divf %296, %297 : vector<8x128xf32>
    %299 = math.tanh %293 : vector<8x128xf32>
    %300 = vector.extract_strided_slice %298 {offsets = [0, 0], sizes = [8, 32], strides = [1, 1]} : vector<8x128xf32> to vector<8x32xf32>
    %301 = vector.extract_strided_slice %298 {offsets = [0, 32], sizes = [8, 32], strides = [1, 1]} : vector<8x128xf32> to vector<8x32xf32>
    %302 = vector.extract_strided_slice %299 {offsets = [0, 64], sizes = [8, 32], strides = [1, 1]} : vector<8x128xf32> to vector<8x32xf32>
    %303 = vector.extract_strided_slice %298 {offsets = [0, 96], sizes = [8, 32], strides = [1, 1]} : vector<8x128xf32> to vector<8x32xf32>
    %304 = arith.mulf %301, %284 : vector<8x32xf32>
    %305 = arith.mulf %300, %302 : vector<8x32xf32>
    %306 = arith.addf %304, %305 : vector<8x32xf32>
    %307 = math.tanh %306 : vector<8x32xf32>
    %308 = arith.mulf %303, %307 : vector<8x32xf32>
    %309 = vector.extract_strided_slice %219 {offsets = [0, 96], sizes = [8, 32], strides = [1, 1]} : vector<8x128xf32> to vector<8x32xf32>
    %c2_92 = arith.constant 2 : index
    %c0_93 = arith.constant 0 : index
    %c0_94 = arith.constant 0 : index
    %310 = vector.load %arg3[%c2_92, %c0_93, %c0_94] : memref<3x32x128xf32, #tpu.memory_space<vmem>>, vector<1x32x128xf32>
    %311 = vector.shape_cast %310 : vector<1x32x128xf32> to vector<32x128xf32>
    %cst_95 = arith.constant dense<0.000000e+00> : vector<8x128xf32>
    %312 = tpu.matmul %308, %311, %cst_95 {dimension_numbers = #tpu.dot_dimension_numbers<[1], [0], [0], [1], [0, 0, 1, 1], [], []>} : vector<8x32xf32>, vector<32x128xf32>, vector<8x128xf32> -> vector<8x128xf32>
    %313 = vector.extract_strided_slice %237 {offsets = [0, 384], sizes = [8, 128], strides = [1, 1]} : vector<8x512xf32> to vector<8x128xf32>
    %314 = arith.addf %312, %313 : vector<8x128xf32>
    %c2_96 = arith.constant 2 : index
    %c0_97 = arith.constant 0 : index
    %c0_98 = arith.constant 0 : index
    %315 = vector.load %arg4[%c2_96, %c0_97, %c0_98] : memref<3x1x128xf32, #tpu.memory_space<vmem>>, vector<1x1x128xf32>
    %316 = vector.shape_cast %315 : vector<1x1x128xf32> to vector<1x128xf32>
    %317 = vector.broadcast %316 : vector<1x128xf32> to vector<8x128xf32>
    %318 = arith.addf %314, %317 : vector<8x128xf32>
    %319 = arith.negf %318 : vector<8x128xf32>
    %320 = math.exp %319 : vector<8x128xf32>
    %cst_99 = arith.constant 1.000000e+00 : f32
    %321 = vector.broadcast %cst_99 : f32 to vector<8x128xf32>
    %322 = arith.addf %321, %320 : vector<8x128xf32>
    %323 = arith.divf %321, %322 : vector<8x128xf32>
    %324 = math.tanh %318 : vector<8x128xf32>
    %325 = vector.extract_strided_slice %323 {offsets = [0, 0], sizes = [8, 32], strides = [1, 1]} : vector<8x128xf32> to vector<8x32xf32>
    %326 = vector.extract_strided_slice %323 {offsets = [0, 32], sizes = [8, 32], strides = [1, 1]} : vector<8x128xf32> to vector<8x32xf32>
    %327 = vector.extract_strided_slice %324 {offsets = [0, 64], sizes = [8, 32], strides = [1, 1]} : vector<8x128xf32> to vector<8x32xf32>
    %328 = vector.extract_strided_slice %323 {offsets = [0, 96], sizes = [8, 32], strides = [1, 1]} : vector<8x128xf32> to vector<8x32xf32>
    %329 = arith.mulf %326, %309 : vector<8x32xf32>
    %330 = arith.mulf %325, %327 : vector<8x32xf32>
    %331 = arith.addf %329, %330 : vector<8x32xf32>
    %332 = math.tanh %331 : vector<8x32xf32>
    %333 = arith.mulf %328, %332 : vector<8x32xf32>
    %334 = tpu.concatenate %258, %283, %308, %333 in 1 : vector<8x32xf32>, vector<8x32xf32>, vector<8x32xf32>, vector<8x32xf32> -> vector<8x128xf32>
    %335 = tpu.concatenate %256, %281, %306, %331 in 1 : vector<8x32xf32>, vector<8x32xf32>, vector<8x32xf32>, vector<8x32xf32> -> vector<8x128xf32>
    %cst_100 = arith.constant dense<0.000000e+00> : vector<8x128xf32>
    %336 = tpu.matmul %333, %1, %cst_100 {dimension_numbers = #tpu.dot_dimension_numbers<[1], [0], [0], [1], [0, 0, 1, 1], [], []>} : vector<8x32xf32>, vector<32x128xf32>, vector<8x128xf32> -> vector<8x128xf32>
    %337 = vector.broadcast %2 : vector<1x128xf32> to vector<8x128xf32>
    %338 = arith.addf %336, %337 : vector<8x128xf32>
    %cst_101 = arith.constant dense<0xFF800000> : vector<8xf32>
    %339 = vector.multi_reduction <maximumf>, %338, %cst_101 [1] : vector<8x128xf32> to vector<8xf32>
    %340 = vector.shape_cast %339 : vector<8xf32> to vector<8x1xf32>
    %341 = vector.broadcast %340 : vector<8x1xf32> to vector<8x128xf32>
    %342 = arith.subf %338, %341 : vector<8x128xf32>
    %343 = math.exp %342 : vector<8x128xf32>
    %cst_102 = arith.constant dense<0.000000e+00> : vector<8xf32>
    %344 = vector.multi_reduction <add>, %343, %cst_102 [1] : vector<8x128xf32> to vector<8xf32>
    %345 = vector.shape_cast %344 : vector<8xf32> to vector<8x1xf32>
    %346 = math.log %345 : vector<8x1xf32>
    %347 = vector.broadcast %346 : vector<8x1xf32> to vector<8x128xf32>
    %348 = arith.subf %342, %347 : vector<8x128xf32>
    %349 = arith.index_cast %c2_i32 : i32 to index
    %c0_103 = arith.constant 0 : index
    %c0_104 = arith.constant 0 : index
    %350 = vector.load %arg9[%349, %c0_103, %c0_104] : memref<6x8x128xf32, #tpu.memory_space<vmem>>, vector<1x8x128xf32>
    %351 = vector.shape_cast %350 : vector<1x8x128xf32> to vector<8x128xf32>
    %352 = vector.shape_cast %348 : vector<8x128xf32> to vector<1x8x128xf32>
    tpu.vector_store %arg9[%349, %c0_103, %c0_104], %352 {strides = array<i32>} : memref<6x8x128xf32, #tpu.memory_space<vmem>>, vector<1x8x128xf32>,
    %c3_i32 = arith.constant 3 : i32
    %cst_105 = arith.constant dense<0.000000e+00> : vector<8x512xf32>
    %353 = tpu.matmul %334, %0, %cst_105 {dimension_numbers = #tpu.dot_dimension_numbers<[1], [0], [0], [1], [0, 0, 1, 1], [], []>} : vector<8x128xf32>, vector<128x512xf32>, vector<8x512xf32> -> vector<8x512xf32>
    %354 = arith.index_cast %c3_i32 : i32 to index
    %c0_106 = arith.constant 0 : index
    %c0_107 = arith.constant 0 : index
    %355 = vector.load %arg1[%354, %c0_106, %c0_107] : memref<6x8x128xf32, #tpu.memory_space<vmem>>, vector<1x8x128xf32>
    %356 = vector.shape_cast %355 : vector<1x8x128xf32> to vector<8x128xf32>
    %357 = vector.extract_strided_slice %335 {offsets = [0, 0], sizes = [8, 32], strides = [1, 1]} : vector<8x128xf32> to vector<8x32xf32>
    %358 = vector.extract_strided_slice %353 {offsets = [0, 0], sizes = [8, 128], strides = [1, 1]} : vector<8x512xf32> to vector<8x128xf32>
    %359 = arith.addf %356, %358 : vector<8x128xf32>
    %360 = arith.negf %359 : vector<8x128xf32>
    %361 = math.exp %360 : vector<8x128xf32>
    %cst_108 = arith.constant 1.000000e+00 : f32
    %362 = vector.broadcast %cst_108 : f32 to vector<8x128xf32>
    %363 = arith.addf %362, %361 : vector<8x128xf32>
    %364 = arith.divf %362, %363 : vector<8x128xf32>
    %365 = math.tanh %359 : vector<8x128xf32>
    %366 = vector.extract_strided_slice %364 {offsets = [0, 0], sizes = [8, 32], strides = [1, 1]} : vector<8x128xf32> to vector<8x32xf32>
    %367 = vector.extract_strided_slice %364 {offsets = [0, 32], sizes = [8, 32], strides = [1, 1]} : vector<8x128xf32> to vector<8x32xf32>
    %368 = vector.extract_strided_slice %365 {offsets = [0, 64], sizes = [8, 32], strides = [1, 1]} : vector<8x128xf32> to vector<8x32xf32>
    %369 = vector.extract_strided_slice %364 {offsets = [0, 96], sizes = [8, 32], strides = [1, 1]} : vector<8x128xf32> to vector<8x32xf32>
    %370 = arith.mulf %367, %357 : vector<8x32xf32>
    %371 = arith.mulf %366, %368 : vector<8x32xf32>
    %372 = arith.addf %370, %371 : vector<8x32xf32>
    %373 = math.tanh %372 : vector<8x32xf32>
    %374 = arith.mulf %369, %373 : vector<8x32xf32>
    %375 = vector.extract_strided_slice %335 {offsets = [0, 32], sizes = [8, 32], strides = [1, 1]} : vector<8x128xf32> to vector<8x32xf32>
    %c0_109 = arith.constant 0 : index
    %c0_110 = arith.constant 0 : index
    %c0_111 = arith.constant 0 : index
    %376 = vector.load %arg3[%c0_109, %c0_110, %c0_111] : memref<3x32x128xf32, #tpu.memory_space<vmem>>, vector<1x32x128xf32>
    %377 = vector.shape_cast %376 : vector<1x32x128xf32> to vector<32x128xf32>
    %cst_112 = arith.constant dense<0.000000e+00> : vector<8x128xf32>
    %378 = tpu.matmul %374, %377, %cst_112 {dimension_numbers = #tpu.dot_dimension_numbers<[1], [0], [0], [1], [0, 0, 1, 1], [], []>} : vector<8x32xf32>, vector<32x128xf32>, vector<8x128xf32> -> vector<8x128xf32>
    %379 = vector.extract_strided_slice %353 {offsets = [0, 128], sizes = [8, 128], strides = [1, 1]} : vector<8x512xf32> to vector<8x128xf32>
    %380 = arith.addf %378, %379 : vector<8x128xf32>
    %c0_113 = arith.constant 0 : index
    %c0_114 = arith.constant 0 : index
    %c0_115 = arith.constant 0 : index
    %381 = vector.load %arg4[%c0_113, %c0_114, %c0_115] : memref<3x1x128xf32, #tpu.memory_space<vmem>>, vector<1x1x128xf32>
    %382 = vector.shape_cast %381 : vector<1x1x128xf32> to vector<1x128xf32>
    %383 = vector.broadcast %382 : vector<1x128xf32> to vector<8x128xf32>
    %384 = arith.addf %380, %383 : vector<8x128xf32>
    %385 = arith.negf %384 : vector<8x128xf32>
    %386 = math.exp %385 : vector<8x128xf32>
    %cst_116 = arith.constant 1.000000e+00 : f32
    %387 = vector.broadcast %cst_116 : f32 to vector<8x128xf32>
    %388 = arith.addf %387, %386 : vector<8x128xf32>
    %389 = arith.divf %387, %388 : vector<8x128xf32>
    %390 = math.tanh %384 : vector<8x128xf32>
    %391 = vector.extract_strided_slice %389 {offsets = [0, 0], sizes = [8, 32], strides = [1, 1]} : vector<8x128xf32> to vector<8x32xf32>
    %392 = vector.extract_strided_slice %389 {offsets = [0, 32], sizes = [8, 32], strides = [1, 1]} : vector<8x128xf32> to vector<8x32xf32>
    %393 = vector.extract_strided_slice %390 {offsets = [0, 64], sizes = [8, 32], strides = [1, 1]} : vector<8x128xf32> to vector<8x32xf32>
    %394 = vector.extract_strided_slice %389 {offsets = [0, 96], sizes = [8, 32], strides = [1, 1]} : vector<8x128xf32> to vector<8x32xf32>
    %395 = arith.mulf %392, %375 : vector<8x32xf32>
    %396 = arith.mulf %391, %393 : vector<8x32xf32>
    %397 = arith.addf %395, %396 : vector<8x32xf32>
    %398 = math.tanh %397 : vector<8x32xf32>
    %399 = arith.mulf %394, %398 : vector<8x32xf32>
    %400 = vector.extract_strided_slice %335 {offsets = [0, 64], sizes = [8, 32], strides = [1, 1]} : vector<8x128xf32> to vector<8x32xf32>
    %c1_117 = arith.constant 1 : index
    %c0_118 = arith.constant 0 : index
    %c0_119 = arith.constant 0 : index
    %401 = vector.load %arg3[%c1_117, %c0_118, %c0_119] : memref<3x32x128xf32, #tpu.memory_space<vmem>>, vector<1x32x128xf32>
    %402 = vector.shape_cast %401 : vector<1x32x128xf32> to vector<32x128xf32>
    %cst_120 = arith.constant dense<0.000000e+00> : vector<8x128xf32>
    %403 = tpu.matmul %399, %402, %cst_120 {dimension_numbers = #tpu.dot_dimension_numbers<[1], [0], [0], [1], [0, 0, 1, 1], [], []>} : vector<8x32xf32>, vector<32x128xf32>, vector<8x128xf32> -> vector<8x128xf32>
    %404 = vector.extract_strided_slice %353 {offsets = [0, 256], sizes = [8, 128], strides = [1, 1]} : vector<8x512xf32> to vector<8x128xf32>
    %405 = arith.addf %403, %404 : vector<8x128xf32>
    %c1_121 = arith.constant 1 : index
    %c0_122 = arith.constant 0 : index
    %c0_123 = arith.constant 0 : index
    %406 = vector.load %arg4[%c1_121, %c0_122, %c0_123] : memref<3x1x128xf32, #tpu.memory_space<vmem>>, vector<1x1x128xf32>
    %407 = vector.shape_cast %406 : vector<1x1x128xf32> to vector<1x128xf32>
    %408 = vector.broadcast %407 : vector<1x128xf32> to vector<8x128xf32>
    %409 = arith.addf %405, %408 : vector<8x128xf32>
    %410 = arith.negf %409 : vector<8x128xf32>
    %411 = math.exp %410 : vector<8x128xf32>
    %cst_124 = arith.constant 1.000000e+00 : f32
    %412 = vector.broadcast %cst_124 : f32 to vector<8x128xf32>
    %413 = arith.addf %412, %411 : vector<8x128xf32>
    %414 = arith.divf %412, %413 : vector<8x128xf32>
    %415 = math.tanh %409 : vector<8x128xf32>
    %416 = vector.extract_strided_slice %414 {offsets = [0, 0], sizes = [8, 32], strides = [1, 1]} : vector<8x128xf32> to vector<8x32xf32>
    %417 = vector.extract_strided_slice %414 {offsets = [0, 32], sizes = [8, 32], strides = [1, 1]} : vector<8x128xf32> to vector<8x32xf32>
    %418 = vector.extract_strided_slice %415 {offsets = [0, 64], sizes = [8, 32], strides = [1, 1]} : vector<8x128xf32> to vector<8x32xf32>
    %419 = vector.extract_strided_slice %414 {offsets = [0, 96], sizes = [8, 32], strides = [1, 1]} : vector<8x128xf32> to vector<8x32xf32>
    %420 = arith.mulf %417, %400 : vector<8x32xf32>
    %421 = arith.mulf %416, %418 : vector<8x32xf32>
    %422 = arith.addf %420, %421 : vector<8x32xf32>
    %423 = math.tanh %422 : vector<8x32xf32>
    %424 = arith.mulf %419, %423 : vector<8x32xf32>
    %425 = vector.extract_strided_slice %335 {offsets = [0, 96], sizes = [8, 32], strides = [1, 1]} : vector<8x128xf32> to vector<8x32xf32>
    %c2_125 = arith.constant 2 : index
    %c0_126 = arith.constant 0 : index
    %c0_127 = arith.constant 0 : index
    %426 = vector.load %arg3[%c2_125, %c0_126, %c0_127] : memref<3x32x128xf32, #tpu.memory_space<vmem>>, vector<1x32x128xf32>
    %427 = vector.shape_cast %426 : vector<1x32x128xf32> to vector<32x128xf32>
    %cst_128 = arith.constant dense<0.000000e+00> : vector<8x128xf32>
    %428 = tpu.matmul %424, %427, %cst_128 {dimension_numbers = #tpu.dot_dimension_numbers<[1], [0], [0], [1], [0, 0, 1, 1], [], []>} : vector<8x32xf32>, vector<32x128xf32>, vector<8x128xf32> -> vector<8x128xf32>
    %429 = vector.extract_strided_slice %353 {offsets = [0, 384], sizes = [8, 128], strides = [1, 1]} : vector<8x512xf32> to vector<8x128xf32>
    %430 = arith.addf %428, %429 : vector<8x128xf32>
    %c2_129 = arith.constant 2 : index
    %c0_130 = arith.constant 0 : index
    %c0_131 = arith.constant 0 : index
    %431 = vector.load %arg4[%c2_129, %c0_130, %c0_131] : memref<3x1x128xf32, #tpu.memory_space<vmem>>, vector<1x1x128xf32>
    %432 = vector.shape_cast %431 : vector<1x1x128xf32> to vector<1x128xf32>
    %433 = vector.broadcast %432 : vector<1x128xf32> to vector<8x128xf32>
    %434 = arith.addf %430, %433 : vector<8x128xf32>
    %435 = arith.negf %434 : vector<8x128xf32>
    %436 = math.exp %435 : vector<8x128xf32>
    %cst_132 = arith.constant 1.000000e+00 : f32
    %437 = vector.broadcast %cst_132 : f32 to vector<8x128xf32>
    %438 = arith.addf %437, %436 : vector<8x128xf32>
    %439 = arith.divf %437, %438 : vector<8x128xf32>
    %440 = math.tanh %434 : vector<8x128xf32>
    %441 = vector.extract_strided_slice %439 {offsets = [0, 0], sizes = [8, 32], strides = [1, 1]} : vector<8x128xf32> to vector<8x32xf32>
    %442 = vector.extract_strided_slice %439 {offsets = [0, 32], sizes = [8, 32], strides = [1, 1]} : vector<8x128xf32> to vector<8x32xf32>
    %443 = vector.extract_strided_slice %440 {offsets = [0, 64], sizes = [8, 32], strides = [1, 1]} : vector<8x128xf32> to vector<8x32xf32>
    %444 = vector.extract_strided_slice %439 {offsets = [0, 96], sizes = [8, 32], strides = [1, 1]} : vector<8x128xf32> to vector<8x32xf32>
    %445 = arith.mulf %442, %425 : vector<8x32xf32>
    %446 = arith.mulf %441, %443 : vector<8x32xf32>
    %447 = arith.addf %445, %446 : vector<8x32xf32>
    %448 = math.tanh %447 : vector<8x32xf32>
    %449 = arith.mulf %444, %448 : vector<8x32xf32>
    %450 = tpu.concatenate %374, %399, %424, %449 in 1 : vector<8x32xf32>, vector<8x32xf32>, vector<8x32xf32>, vector<8x32xf32> -> vector<8x128xf32>
    %451 = tpu.concatenate %372, %397, %422, %447 in 1 : vector<8x32xf32>, vector<8x32xf32>, vector<8x32xf32>, vector<8x32xf32> -> vector<8x128xf32>
    %cst_133 = arith.constant dense<0.000000e+00> : vector<8x128xf32>
    %452 = tpu.matmul %449, %1, %cst_133 {dimension_numbers = #tpu.dot_dimension_numbers<[1], [0], [0], [1], [0, 0, 1, 1], [], []>} : vector<8x32xf32>, vector<32x128xf32>, vector<8x128xf32> -> vector<8x128xf32>
    %453 = vector.broadcast %2 : vector<1x128xf32> to vector<8x128xf32>
    %454 = arith.addf %452, %453 : vector<8x128xf32>
    %cst_134 = arith.constant dense<0xFF800000> : vector<8xf32>
    %455 = vector.multi_reduction <maximumf>, %454, %cst_134 [1] : vector<8x128xf32> to vector<8xf32>
    %456 = vector.shape_cast %455 : vector<8xf32> to vector<8x1xf32>
    %457 = vector.broadcast %456 : vector<8x1xf32> to vector<8x128xf32>
    %458 = arith.subf %454, %457 : vector<8x128xf32>
    %459 = math.exp %458 : vector<8x128xf32>
    %cst_135 = arith.constant dense<0.000000e+00> : vector<8xf32>
    %460 = vector.multi_reduction <add>, %459, %cst_135 [1] : vector<8x128xf32> to vector<8xf32>
    %461 = vector.shape_cast %460 : vector<8xf32> to vector<8x1xf32>
    %462 = math.log %461 : vector<8x1xf32>
    %463 = vector.broadcast %462 : vector<8x1xf32> to vector<8x128xf32>
    %464 = arith.subf %458, %463 : vector<8x128xf32>
    %465 = arith.index_cast %c3_i32 : i32 to index
    %c0_136 = arith.constant 0 : index
    %c0_137 = arith.constant 0 : index
    %466 = vector.load %arg9[%465, %c0_136, %c0_137] : memref<6x8x128xf32, #tpu.memory_space<vmem>>, vector<1x8x128xf32>
    %467 = vector.shape_cast %466 : vector<1x8x128xf32> to vector<8x128xf32>
    %468 = vector.shape_cast %464 : vector<8x128xf32> to vector<1x8x128xf32>
    tpu.vector_store %arg9[%465, %c0_136, %c0_137], %468 {strides = array<i32>} : memref<6x8x128xf32, #tpu.memory_space<vmem>>, vector<1x8x128xf32>,
    %c4_i32 = arith.constant 4 : i32
    %cst_138 = arith.constant dense<0.000000e+00> : vector<8x512xf32>
    %469 = tpu.matmul %450, %0, %cst_138 {dimension_numbers = #tpu.dot_dimension_numbers<[1], [0], [0], [1], [0, 0, 1, 1], [], []>} : vector<8x128xf32>, vector<128x512xf32>, vector<8x512xf32> -> vector<8x512xf32>
    %470 = arith.index_cast %c4_i32 : i32 to index
    %c0_139 = arith.constant 0 : index
    %c0_140 = arith.constant 0 : index
    %471 = vector.load %arg1[%470, %c0_139, %c0_140] : memref<6x8x128xf32, #tpu.memory_space<vmem>>, vector<1x8x128xf32>
    %472 = vector.shape_cast %471 : vector<1x8x128xf32> to vector<8x128xf32>
    %473 = vector.extract_strided_slice %451 {offsets = [0, 0], sizes = [8, 32], strides = [1, 1]} : vector<8x128xf32> to vector<8x32xf32>
    %474 = vector.extract_strided_slice %469 {offsets = [0, 0], sizes = [8, 128], strides = [1, 1]} : vector<8x512xf32> to vector<8x128xf32>
    %475 = arith.addf %472, %474 : vector<8x128xf32>
    %476 = arith.negf %475 : vector<8x128xf32>
    %477 = math.exp %476 : vector<8x128xf32>
    %cst_141 = arith.constant 1.000000e+00 : f32
    %478 = vector.broadcast %cst_141 : f32 to vector<8x128xf32>
    %479 = arith.addf %478, %477 : vector<8x128xf32>
    %480 = arith.divf %478, %479 : vector<8x128xf32>
    %481 = math.tanh %475 : vector<8x128xf32>
    %482 = vector.extract_strided_slice %480 {offsets = [0, 0], sizes = [8, 32], strides = [1, 1]} : vector<8x128xf32> to vector<8x32xf32>
    %483 = vector.extract_strided_slice %480 {offsets = [0, 32], sizes = [8, 32], strides = [1, 1]} : vector<8x128xf32> to vector<8x32xf32>
    %484 = vector.extract_strided_slice %481 {offsets = [0, 64], sizes = [8, 32], strides = [1, 1]} : vector<8x128xf32> to vector<8x32xf32>
    %485 = vector.extract_strided_slice %480 {offsets = [0, 96], sizes = [8, 32], strides = [1, 1]} : vector<8x128xf32> to vector<8x32xf32>
    %486 = arith.mulf %483, %473 : vector<8x32xf32>
    %487 = arith.mulf %482, %484 : vector<8x32xf32>
    %488 = arith.addf %486, %487 : vector<8x32xf32>
    %489 = math.tanh %488 : vector<8x32xf32>
    %490 = arith.mulf %485, %489 : vector<8x32xf32>
    %491 = vector.extract_strided_slice %451 {offsets = [0, 32], sizes = [8, 32], strides = [1, 1]} : vector<8x128xf32> to vector<8x32xf32>
    %c0_142 = arith.constant 0 : index
    %c0_143 = arith.constant 0 : index
    %c0_144 = arith.constant 0 : index
    %492 = vector.load %arg3[%c0_142, %c0_143, %c0_144] : memref<3x32x128xf32, #tpu.memory_space<vmem>>, vector<1x32x128xf32>
    %493 = vector.shape_cast %492 : vector<1x32x128xf32> to vector<32x128xf32>
    %cst_145 = arith.constant dense<0.000000e+00> : vector<8x128xf32>
    %494 = tpu.matmul %490, %493, %cst_145 {dimension_numbers = #tpu.dot_dimension_numbers<[1], [0], [0], [1], [0, 0, 1, 1], [], []>} : vector<8x32xf32>, vector<32x128xf32>, vector<8x128xf32> -> vector<8x128xf32>
    %495 = vector.extract_strided_slice %469 {offsets = [0, 128], sizes = [8, 128], strides = [1, 1]} : vector<8x512xf32> to vector<8x128xf32>
    %496 = arith.addf %494, %495 : vector<8x128xf32>
    %c0_146 = arith.constant 0 : index
    %c0_147 = arith.constant 0 : index
    %c0_148 = arith.constant 0 : index
    %497 = vector.load %arg4[%c0_146, %c0_147, %c0_148] : memref<3x1x128xf32, #tpu.memory_space<vmem>>, vector<1x1x128xf32>
    %498 = vector.shape_cast %497 : vector<1x1x128xf32> to vector<1x128xf32>
    %499 = vector.broadcast %498 : vector<1x128xf32> to vector<8x128xf32>
    %500 = arith.addf %496, %499 : vector<8x128xf32>
    %501 = arith.negf %500 : vector<8x128xf32>
    %502 = math.exp %501 : vector<8x128xf32>
    %cst_149 = arith.constant 1.000000e+00 : f32
    %503 = vector.broadcast %cst_149 : f32 to vector<8x128xf32>
    %504 = arith.addf %503, %502 : vector<8x128xf32>
    %505 = arith.divf %503, %504 : vector<8x128xf32>
    %506 = math.tanh %500 : vector<8x128xf32>
    %507 = vector.extract_strided_slice %505 {offsets = [0, 0], sizes = [8, 32], strides = [1, 1]} : vector<8x128xf32> to vector<8x32xf32>
    %508 = vector.extract_strided_slice %505 {offsets = [0, 32], sizes = [8, 32], strides = [1, 1]} : vector<8x128xf32> to vector<8x32xf32>
    %509 = vector.extract_strided_slice %506 {offsets = [0, 64], sizes = [8, 32], strides = [1, 1]} : vector<8x128xf32> to vector<8x32xf32>
    %510 = vector.extract_strided_slice %505 {offsets = [0, 96], sizes = [8, 32], strides = [1, 1]} : vector<8x128xf32> to vector<8x32xf32>
    %511 = arith.mulf %508, %491 : vector<8x32xf32>
    %512 = arith.mulf %507, %509 : vector<8x32xf32>
    %513 = arith.addf %511, %512 : vector<8x32xf32>
    %514 = math.tanh %513 : vector<8x32xf32>
    %515 = arith.mulf %510, %514 : vector<8x32xf32>
    %516 = vector.extract_strided_slice %451 {offsets = [0, 64], sizes = [8, 32], strides = [1, 1]} : vector<8x128xf32> to vector<8x32xf32>
    %c1_150 = arith.constant 1 : index
    %c0_151 = arith.constant 0 : index
    %c0_152 = arith.constant 0 : index
    %517 = vector.load %arg3[%c1_150, %c0_151, %c0_152] : memref<3x32x128xf32, #tpu.memory_space<vmem>>, vector<1x32x128xf32>
    %518 = vector.shape_cast %517 : vector<1x32x128xf32> to vector<32x128xf32>
    %cst_153 = arith.constant dense<0.000000e+00> : vector<8x128xf32>
    %519 = tpu.matmul %515, %518, %cst_153 {dimension_numbers = #tpu.dot_dimension_numbers<[1], [0], [0], [1], [0, 0, 1, 1], [], []>} : vector<8x32xf32>, vector<32x128xf32>, vector<8x128xf32> -> vector<8x128xf32>
    %520 = vector.extract_strided_slice %469 {offsets = [0, 256], sizes = [8, 128], strides = [1, 1]} : vector<8x512xf32> to vector<8x128xf32>
    %521 = arith.addf %519, %520 : vector<8x128xf32>
    %c1_154 = arith.constant 1 : index
    %c0_155 = arith.constant 0 : index
    %c0_156 = arith.constant 0 : index
    %522 = vector.load %arg4[%c1_154, %c0_155, %c0_156] : memref<3x1x128xf32, #tpu.memory_space<vmem>>, vector<1x1x128xf32>
    %523 = vector.shape_cast %522 : vector<1x1x128xf32> to vector<1x128xf32>
    %524 = vector.broadcast %523 : vector<1x128xf32> to vector<8x128xf32>
    %525 = arith.addf %521, %524 : vector<8x128xf32>
    %526 = arith.negf %525 : vector<8x128xf32>
    %527 = math.exp %526 : vector<8x128xf32>
    %cst_157 = arith.constant 1.000000e+00 : f32
    %528 = vector.broadcast %cst_157 : f32 to vector<8x128xf32>
    %529 = arith.addf %528, %527 : vector<8x128xf32>
    %530 = arith.divf %528, %529 : vector<8x128xf32>
    %531 = math.tanh %525 : vector<8x128xf32>
    %532 = vector.extract_strided_slice %530 {offsets = [0, 0], sizes = [8, 32], strides = [1, 1]} : vector<8x128xf32> to vector<8x32xf32>
    %533 = vector.extract_strided_slice %530 {offsets = [0, 32], sizes = [8, 32], strides = [1, 1]} : vector<8x128xf32> to vector<8x32xf32>
    %534 = vector.extract_strided_slice %531 {offsets = [0, 64], sizes = [8, 32], strides = [1, 1]} : vector<8x128xf32> to vector<8x32xf32>
    %535 = vector.extract_strided_slice %530 {offsets = [0, 96], sizes = [8, 32], strides = [1, 1]} : vector<8x128xf32> to vector<8x32xf32>
    %536 = arith.mulf %533, %516 : vector<8x32xf32>
    %537 = arith.mulf %532, %534 : vector<8x32xf32>
    %538 = arith.addf %536, %537 : vector<8x32xf32>
    %539 = math.tanh %538 : vector<8x32xf32>
    %540 = arith.mulf %535, %539 : vector<8x32xf32>
    %541 = vector.extract_strided_slice %451 {offsets = [0, 96], sizes = [8, 32], strides = [1, 1]} : vector<8x128xf32> to vector<8x32xf32>
    %c2_158 = arith.constant 2 : index
    %c0_159 = arith.constant 0 : index
    %c0_160 = arith.constant 0 : index
    %542 = vector.load %arg3[%c2_158, %c0_159, %c0_160] : memref<3x32x128xf32, #tpu.memory_space<vmem>>, vector<1x32x128xf32>
    %543 = vector.shape_cast %542 : vector<1x32x128xf32> to vector<32x128xf32>
    %cst_161 = arith.constant dense<0.000000e+00> : vector<8x128xf32>
    %544 = tpu.matmul %540, %543, %cst_161 {dimension_numbers = #tpu.dot_dimension_numbers<[1], [0], [0], [1], [0, 0, 1, 1], [], []>} : vector<8x32xf32>, vector<32x128xf32>, vector<8x128xf32> -> vector<8x128xf32>
    %545 = vector.extract_strided_slice %469 {offsets = [0, 384], sizes = [8, 128], strides = [1, 1]} : vector<8x512xf32> to vector<8x128xf32>
    %546 = arith.addf %544, %545 : vector<8x128xf32>
    %c2_162 = arith.constant 2 : index
    %c0_163 = arith.constant 0 : index
    %c0_164 = arith.constant 0 : index
    %547 = vector.load %arg4[%c2_162, %c0_163, %c0_164] : memref<3x1x128xf32, #tpu.memory_space<vmem>>, vector<1x1x128xf32>
    %548 = vector.shape_cast %547 : vector<1x1x128xf32> to vector<1x128xf32>
    %549 = vector.broadcast %548 : vector<1x128xf32> to vector<8x128xf32>
    %550 = arith.addf %546, %549 : vector<8x128xf32>
    %551 = arith.negf %550 : vector<8x128xf32>
    %552 = math.exp %551 : vector<8x128xf32>
    %cst_165 = arith.constant 1.000000e+00 : f32
    %553 = vector.broadcast %cst_165 : f32 to vector<8x128xf32>
    %554 = arith.addf %553, %552 : vector<8x128xf32>
    %555 = arith.divf %553, %554 : vector<8x128xf32>
    %556 = math.tanh %550 : vector<8x128xf32>
    %557 = vector.extract_strided_slice %555 {offsets = [0, 0], sizes = [8, 32], strides = [1, 1]} : vector<8x128xf32> to vector<8x32xf32>
    %558 = vector.extract_strided_slice %555 {offsets = [0, 32], sizes = [8, 32], strides = [1, 1]} : vector<8x128xf32> to vector<8x32xf32>
    %559 = vector.extract_strided_slice %556 {offsets = [0, 64], sizes = [8, 32], strides = [1, 1]} : vector<8x128xf32> to vector<8x32xf32>
    %560 = vector.extract_strided_slice %555 {offsets = [0, 96], sizes = [8, 32], strides = [1, 1]} : vector<8x128xf32> to vector<8x32xf32>
    %561 = arith.mulf %558, %541 : vector<8x32xf32>
    %562 = arith.mulf %557, %559 : vector<8x32xf32>
    %563 = arith.addf %561, %562 : vector<8x32xf32>
    %564 = math.tanh %563 : vector<8x32xf32>
    %565 = arith.mulf %560, %564 : vector<8x32xf32>
    %566 = tpu.concatenate %490, %515, %540, %565 in 1 : vector<8x32xf32>, vector<8x32xf32>, vector<8x32xf32>, vector<8x32xf32> -> vector<8x128xf32>
    %567 = tpu.concatenate %488, %513, %538, %563 in 1 : vector<8x32xf32>, vector<8x32xf32>, vector<8x32xf32>, vector<8x32xf32> -> vector<8x128xf32>
    %cst_166 = arith.constant dense<0.000000e+00> : vector<8x128xf32>
    %568 = tpu.matmul %565, %1, %cst_166 {dimension_numbers = #tpu.dot_dimension_numbers<[1], [0], [0], [1], [0, 0, 1, 1], [], []>} : vector<8x32xf32>, vector<32x128xf32>, vector<8x128xf32> -> vector<8x128xf32>
    %569 = vector.broadcast %2 : vector<1x128xf32> to vector<8x128xf32>
    %570 = arith.addf %568, %569 : vector<8x128xf32>
    %cst_167 = arith.constant dense<0xFF800000> : vector<8xf32>
    %571 = vector.multi_reduction <maximumf>, %570, %cst_167 [1] : vector<8x128xf32> to vector<8xf32>
    %572 = vector.shape_cast %571 : vector<8xf32> to vector<8x1xf32>
    %573 = vector.broadcast %572 : vector<8x1xf32> to vector<8x128xf32>
    %574 = arith.subf %570, %573 : vector<8x128xf32>
    %575 = math.exp %574 : vector<8x128xf32>
    %cst_168 = arith.constant dense<0.000000e+00> : vector<8xf32>
    %576 = vector.multi_reduction <add>, %575, %cst_168 [1] : vector<8x128xf32> to vector<8xf32>
    %577 = vector.shape_cast %576 : vector<8xf32> to vector<8x1xf32>
    %578 = math.log %577 : vector<8x1xf32>
    %579 = vector.broadcast %578 : vector<8x1xf32> to vector<8x128xf32>
    %580 = arith.subf %574, %579 : vector<8x128xf32>
    %581 = arith.index_cast %c4_i32 : i32 to index
    %c0_169 = arith.constant 0 : index
    %c0_170 = arith.constant 0 : index
    %582 = vector.load %arg9[%581, %c0_169, %c0_170] : memref<6x8x128xf32, #tpu.memory_space<vmem>>, vector<1x8x128xf32>
    %583 = vector.shape_cast %582 : vector<1x8x128xf32> to vector<8x128xf32>
    %584 = vector.shape_cast %580 : vector<8x128xf32> to vector<1x8x128xf32>
    tpu.vector_store %arg9[%581, %c0_169, %c0_170], %584 {strides = array<i32>} : memref<6x8x128xf32, #tpu.memory_space<vmem>>, vector<1x8x128xf32>,
    %c5_i32 = arith.constant 5 : i32
    %cst_171 = arith.constant dense<0.000000e+00> : vector<8x512xf32>
    %585 = tpu.matmul %566, %0, %cst_171 {dimension_numbers = #tpu.dot_dimension_numbers<[1], [0], [0], [1], [0, 0, 1, 1], [], []>} : vector<8x128xf32>, vector<128x512xf32>, vector<8x512xf32> -> vector<8x512xf32>
    %586 = arith.index_cast %c5_i32 : i32 to index
    %c0_172 = arith.constant 0 : index
    %c0_173 = arith.constant 0 : index
    %587 = vector.load %arg1[%586, %c0_172, %c0_173] : memref<6x8x128xf32, #tpu.memory_space<vmem>>, vector<1x8x128xf32>
    %588 = vector.shape_cast %587 : vector<1x8x128xf32> to vector<8x128xf32>
    %589 = vector.extract_strided_slice %567 {offsets = [0, 0], sizes = [8, 32], strides = [1, 1]} : vector<8x128xf32> to vector<8x32xf32>
    %590 = vector.extract_strided_slice %585 {offsets = [0, 0], sizes = [8, 128], strides = [1, 1]} : vector<8x512xf32> to vector<8x128xf32>
    %591 = arith.addf %588, %590 : vector<8x128xf32>
    %592 = arith.negf %591 : vector<8x128xf32>
    %593 = math.exp %592 : vector<8x128xf32>
    %cst_174 = arith.constant 1.000000e+00 : f32
    %594 = vector.broadcast %cst_174 : f32 to vector<8x128xf32>
    %595 = arith.addf %594, %593 : vector<8x128xf32>
    %596 = arith.divf %594, %595 : vector<8x128xf32>
    %597 = math.tanh %591 : vector<8x128xf32>
    %598 = vector.extract_strided_slice %596 {offsets = [0, 0], sizes = [8, 32], strides = [1, 1]} : vector<8x128xf32> to vector<8x32xf32>
    %599 = vector.extract_strided_slice %596 {offsets = [0, 32], sizes = [8, 32], strides = [1, 1]} : vector<8x128xf32> to vector<8x32xf32>
    %600 = vector.extract_strided_slice %597 {offsets = [0, 64], sizes = [8, 32], strides = [1, 1]} : vector<8x128xf32> to vector<8x32xf32>
    %601 = vector.extract_strided_slice %596 {offsets = [0, 96], sizes = [8, 32], strides = [1, 1]} : vector<8x128xf32> to vector<8x32xf32>
    %602 = arith.mulf %599, %589 : vector<8x32xf32>
    %603 = arith.mulf %598, %600 : vector<8x32xf32>
    %604 = arith.addf %602, %603 : vector<8x32xf32>
    %605 = math.tanh %604 : vector<8x32xf32>
    %606 = arith.mulf %601, %605 : vector<8x32xf32>
    %607 = vector.extract_strided_slice %567 {offsets = [0, 32], sizes = [8, 32], strides = [1, 1]} : vector<8x128xf32> to vector<8x32xf32>
    %c0_175 = arith.constant 0 : index
    %c0_176 = arith.constant 0 : index
    %c0_177 = arith.constant 0 : index
    %608 = vector.load %arg3[%c0_175, %c0_176, %c0_177] : memref<3x32x128xf32, #tpu.memory_space<vmem>>, vector<1x32x128xf32>
    %609 = vector.shape_cast %608 : vector<1x32x128xf32> to vector<32x128xf32>
    %cst_178 = arith.constant dense<0.000000e+00> : vector<8x128xf32>
    %610 = tpu.matmul %606, %609, %cst_178 {dimension_numbers = #tpu.dot_dimension_numbers<[1], [0], [0], [1], [0, 0, 1, 1], [], []>} : vector<8x32xf32>, vector<32x128xf32>, vector<8x128xf32> -> vector<8x128xf32>
    %611 = vector.extract_strided_slice %585 {offsets = [0, 128], sizes = [8, 128], strides = [1, 1]} : vector<8x512xf32> to vector<8x128xf32>
    %612 = arith.addf %610, %611 : vector<8x128xf32>
    %c0_179 = arith.constant 0 : index
    %c0_180 = arith.constant 0 : index
    %c0_181 = arith.constant 0 : index
    %613 = vector.load %arg4[%c0_179, %c0_180, %c0_181] : memref<3x1x128xf32, #tpu.memory_space<vmem>>, vector<1x1x128xf32>
    %614 = vector.shape_cast %613 : vector<1x1x128xf32> to vector<1x128xf32>
    %615 = vector.broadcast %614 : vector<1x128xf32> to vector<8x128xf32>
    %616 = arith.addf %612, %615 : vector<8x128xf32>
    %617 = arith.negf %616 : vector<8x128xf32>
    %618 = math.exp %617 : vector<8x128xf32>
    %cst_182 = arith.constant 1.000000e+00 : f32
    %619 = vector.broadcast %cst_182 : f32 to vector<8x128xf32>
    %620 = arith.addf %619, %618 : vector<8x128xf32>
    %621 = arith.divf %619, %620 : vector<8x128xf32>
    %622 = math.tanh %616 : vector<8x128xf32>
    %623 = vector.extract_strided_slice %621 {offsets = [0, 0], sizes = [8, 32], strides = [1, 1]} : vector<8x128xf32> to vector<8x32xf32>
    %624 = vector.extract_strided_slice %621 {offsets = [0, 32], sizes = [8, 32], strides = [1, 1]} : vector<8x128xf32> to vector<8x32xf32>
    %625 = vector.extract_strided_slice %622 {offsets = [0, 64], sizes = [8, 32], strides = [1, 1]} : vector<8x128xf32> to vector<8x32xf32>
    %626 = vector.extract_strided_slice %621 {offsets = [0, 96], sizes = [8, 32], strides = [1, 1]} : vector<8x128xf32> to vector<8x32xf32>
    %627 = arith.mulf %624, %607 : vector<8x32xf32>
    %628 = arith.mulf %623, %625 : vector<8x32xf32>
    %629 = arith.addf %627, %628 : vector<8x32xf32>
    %630 = math.tanh %629 : vector<8x32xf32>
    %631 = arith.mulf %626, %630 : vector<8x32xf32>
    %632 = vector.extract_strided_slice %567 {offsets = [0, 64], sizes = [8, 32], strides = [1, 1]} : vector<8x128xf32> to vector<8x32xf32>
    %c1_183 = arith.constant 1 : index
    %c0_184 = arith.constant 0 : index
    %c0_185 = arith.constant 0 : index
    %633 = vector.load %arg3[%c1_183, %c0_184, %c0_185] : memref<3x32x128xf32, #tpu.memory_space<vmem>>, vector<1x32x128xf32>
    %634 = vector.shape_cast %633 : vector<1x32x128xf32> to vector<32x128xf32>
    %cst_186 = arith.constant dense<0.000000e+00> : vector<8x128xf32>
    %635 = tpu.matmul %631, %634, %cst_186 {dimension_numbers = #tpu.dot_dimension_numbers<[1], [0], [0], [1], [0, 0, 1, 1], [], []>} : vector<8x32xf32>, vector<32x128xf32>, vector<8x128xf32> -> vector<8x128xf32>
    %636 = vector.extract_strided_slice %585 {offsets = [0, 256], sizes = [8, 128], strides = [1, 1]} : vector<8x512xf32> to vector<8x128xf32>
    %637 = arith.addf %635, %636 : vector<8x128xf32>
    %c1_187 = arith.constant 1 : index
    %c0_188 = arith.constant 0 : index
    %c0_189 = arith.constant 0 : index
    %638 = vector.load %arg4[%c1_187, %c0_188, %c0_189] : memref<3x1x128xf32, #tpu.memory_space<vmem>>, vector<1x1x128xf32>
    %639 = vector.shape_cast %638 : vector<1x1x128xf32> to vector<1x128xf32>
    %640 = vector.broadcast %639 : vector<1x128xf32> to vector<8x128xf32>
    %641 = arith.addf %637, %640 : vector<8x128xf32>
    %642 = arith.negf %641 : vector<8x128xf32>
    %643 = math.exp %642 : vector<8x128xf32>
    %cst_190 = arith.constant 1.000000e+00 : f32
    %644 = vector.broadcast %cst_190 : f32 to vector<8x128xf32>
    %645 = arith.addf %644, %643 : vector<8x128xf32>
    %646 = arith.divf %644, %645 : vector<8x128xf32>
    %647 = math.tanh %641 : vector<8x128xf32>
    %648 = vector.extract_strided_slice %646 {offsets = [0, 0], sizes = [8, 32], strides = [1, 1]} : vector<8x128xf32> to vector<8x32xf32>
    %649 = vector.extract_strided_slice %646 {offsets = [0, 32], sizes = [8, 32], strides = [1, 1]} : vector<8x128xf32> to vector<8x32xf32>
    %650 = vector.extract_strided_slice %647 {offsets = [0, 64], sizes = [8, 32], strides = [1, 1]} : vector<8x128xf32> to vector<8x32xf32>
    %651 = vector.extract_strided_slice %646 {offsets = [0, 96], sizes = [8, 32], strides = [1, 1]} : vector<8x128xf32> to vector<8x32xf32>
    %652 = arith.mulf %649, %632 : vector<8x32xf32>
    %653 = arith.mulf %648, %650 : vector<8x32xf32>
    %654 = arith.addf %652, %653 : vector<8x32xf32>
    %655 = math.tanh %654 : vector<8x32xf32>
    %656 = arith.mulf %651, %655 : vector<8x32xf32>
    %657 = vector.extract_strided_slice %567 {offsets = [0, 96], sizes = [8, 32], strides = [1, 1]} : vector<8x128xf32> to vector<8x32xf32>
    %c2_191 = arith.constant 2 : index
    %c0_192 = arith.constant 0 : index
    %c0_193 = arith.constant 0 : index
    %658 = vector.load %arg3[%c2_191, %c0_192, %c0_193] : memref<3x32x128xf32, #tpu.memory_space<vmem>>, vector<1x32x128xf32>
    %659 = vector.shape_cast %658 : vector<1x32x128xf32> to vector<32x128xf32>
    %cst_194 = arith.constant dense<0.000000e+00> : vector<8x128xf32>
    %660 = tpu.matmul %656, %659, %cst_194 {dimension_numbers = #tpu.dot_dimension_numbers<[1], [0], [0], [1], [0, 0, 1, 1], [], []>} : vector<8x32xf32>, vector<32x128xf32>, vector<8x128xf32> -> vector<8x128xf32>
    %661 = vector.extract_strided_slice %585 {offsets = [0, 384], sizes = [8, 128], strides = [1, 1]} : vector<8x512xf32> to vector<8x128xf32>
    %662 = arith.addf %660, %661 : vector<8x128xf32>
    %c2_195 = arith.constant 2 : index
    %c0_196 = arith.constant 0 : index
    %c0_197 = arith.constant 0 : index
    %663 = vector.load %arg4[%c2_195, %c0_196, %c0_197] : memref<3x1x128xf32, #tpu.memory_space<vmem>>, vector<1x1x128xf32>
    %664 = vector.shape_cast %663 : vector<1x1x128xf32> to vector<1x128xf32>
    %665 = vector.broadcast %664 : vector<1x128xf32> to vector<8x128xf32>
    %666 = arith.addf %662, %665 : vector<8x128xf32>
    %667 = arith.negf %666 : vector<8x128xf32>
    %668 = math.exp %667 : vector<8x128xf32>
    %cst_198 = arith.constant 1.000000e+00 : f32
    %669 = vector.broadcast %cst_198 : f32 to vector<8x128xf32>
    %670 = arith.addf %669, %668 : vector<8x128xf32>
    %671 = arith.divf %669, %670 : vector<8x128xf32>
    %672 = math.tanh %666 : vector<8x128xf32>
    %673 = vector.extract_strided_slice %671 {offsets = [0, 0], sizes = [8, 32], strides = [1, 1]} : vector<8x128xf32> to vector<8x32xf32>
    %674 = vector.extract_strided_slice %671 {offsets = [0, 32], sizes = [8, 32], strides = [1, 1]} : vector<8x128xf32> to vector<8x32xf32>
    %675 = vector.extract_strided_slice %672 {offsets = [0, 64], sizes = [8, 32], strides = [1, 1]} : vector<8x128xf32> to vector<8x32xf32>
    %676 = vector.extract_strided_slice %671 {offsets = [0, 96], sizes = [8, 32], strides = [1, 1]} : vector<8x128xf32> to vector<8x32xf32>
    %677 = arith.mulf %674, %657 : vector<8x32xf32>
    %678 = arith.mulf %673, %675 : vector<8x32xf32>
    %679 = arith.addf %677, %678 : vector<8x32xf32>
    %680 = math.tanh %679 : vector<8x32xf32>
    %681 = arith.mulf %676, %680 : vector<8x32xf32>
    %682 = tpu.concatenate %606, %631, %656, %681 in 1 : vector<8x32xf32>, vector<8x32xf32>, vector<8x32xf32>, vector<8x32xf32> -> vector<8x128xf32>
    %683 = tpu.concatenate %604, %629, %654, %679 in 1 : vector<8x32xf32>, vector<8x32xf32>, vector<8x32xf32>, vector<8x32xf32> -> vector<8x128xf32>
    %cst_199 = arith.constant dense<0.000000e+00> : vector<8x128xf32>
    %684 = tpu.matmul %681, %1, %cst_199 {dimension_numbers = #tpu.dot_dimension_numbers<[1], [0], [0], [1], [0, 0, 1, 1], [], []>} : vector<8x32xf32>, vector<32x128xf32>, vector<8x128xf32> -> vector<8x128xf32>
    %685 = vector.broadcast %2 : vector<1x128xf32> to vector<8x128xf32>
    %686 = arith.addf %684, %685 : vector<8x128xf32>
    %cst_200 = arith.constant dense<0xFF800000> : vector<8xf32>
    %687 = vector.multi_reduction <maximumf>, %686, %cst_200 [1] : vector<8x128xf32> to vector<8xf32>
    %688 = vector.shape_cast %687 : vector<8xf32> to vector<8x1xf32>
    %689 = vector.broadcast %688 : vector<8x1xf32> to vector<8x128xf32>
    %690 = arith.subf %686, %689 : vector<8x128xf32>
    %691 = math.exp %690 : vector<8x128xf32>
    %cst_201 = arith.constant dense<0.000000e+00> : vector<8xf32>
    %692 = vector.multi_reduction <add>, %691, %cst_201 [1] : vector<8x128xf32> to vector<8xf32>
    %693 = vector.shape_cast %692 : vector<8xf32> to vector<8x1xf32>
    %694 = math.log %693 : vector<8x1xf32>
    %695 = vector.broadcast %694 : vector<8x1xf32> to vector<8x128xf32>
    %696 = arith.subf %690, %695 : vector<8x128xf32>
    %697 = arith.index_cast %c5_i32 : i32 to index
    %c0_202 = arith.constant 0 : index
    %c0_203 = arith.constant 0 : index
    %698 = vector.load %arg9[%697, %c0_202, %c0_203] : memref<6x8x128xf32, #tpu.memory_space<vmem>>, vector<1x8x128xf32>
    %699 = vector.shape_cast %698 : vector<1x8x128xf32> to vector<8x128xf32>
    %700 = vector.shape_cast %696 : vector<8x128xf32> to vector<1x8x128xf32>
    tpu.vector_store %arg9[%697, %c0_202, %c0_203], %700 {strides = array<i32>} : memref<6x8x128xf32, #tpu.memory_space<vmem>>, vector<1x8x128xf32>,
    %c6_i32 = arith.constant 6 : i32
    %c0_204 = arith.constant 0 : index
    %c0_205 = arith.constant 0 : index
    %701 = vector.load %arg10[%c0_204, %c0_205] : memref<8x128xf32, #tpu.memory_space<vmem>>, vector<8x128xf32>
    tpu.vector_store %arg10[%c0_204, %c0_205], %682 {strides = array<i32>} : memref<8x128xf32, #tpu.memory_space<vmem>>, vector<8x128xf32>,
    %c0_206 = arith.constant 0 : index
    %c0_207 = arith.constant 0 : index
    %702 = vector.load %arg11[%c0_206, %c0_207] : memref<8x128xf32, #tpu.memory_space<vmem>>, vector<8x128xf32>
    tpu.vector_store %arg11[%c0_206, %c0_207], %683 {strides = array<i32>} : memref<8x128xf32, #tpu.memory_space<vmem>>, vector<8x128xf32>,
    return
  }
  func.func @transform_0(%arg0: i32) -> (i32, i32, i32) {
    %c0_i32 = arith.constant 0 : i32
    %c0_i32_0 = arith.constant 0 : i32
    %c0_i32_1 = arith.constant 0 : i32
    return %c0_i32, %arg0, %c0_i32_0 : i32, i32, i32
  }
  func.func @transform_1(%arg0: i32) -> (i32, i32) {
    %c0_i32 = arith.constant 0 : i32
    %c0_i32_0 = arith.constant 0 : i32
    %c0_i32_1 = arith.constant 0 : i32
    return %c0_i32, %c0_i32_0 : i32, i32
  }
  func.func @transform_2(%arg0: i32) -> (i32, i32, i32) {
    %c0_i32 = arith.constant 0 : i32
    %c0_i32_0 = arith.constant 0 : i32
    %c0_i32_1 = arith.constant 0 : i32
    %c0_i32_2 = arith.constant 0 : i32
    return %c0_i32, %c0_i32_0, %c0_i32_1 : i32, i32, i32
  }
  func.func @transform_3(%arg0: i32) -> (i32, i32, i32) {
    %c0_i32 = arith.constant 0 : i32
    %c0_i32_0 = arith.constant 0 : i32
    %c0_i32_1 = arith.constant 0 : i32
    %c0_i32_2 = arith.constant 0 : i32
    return %c0_i32, %c0_i32_0, %c0_i32_1 : i32, i32, i32
  }
  func.func @transform_4(%arg0: i32) -> (i32, i32) {
    %c0_i32 = arith.constant 0 : i32
    %c0_i32_0 = arith.constant 0 : i32
    %c0_i32_1 = arith.constant 0 : i32
    return %c0_i32, %c0_i32_0 : i32, i32
  }
  func.func @transform_5(%arg0: i32) -> (i32, i32) {
    %c0_i32 = arith.constant 0 : i32
    %c0_i32_0 = arith.constant 0 : i32
    %c0_i32_1 = arith.constant 0 : i32
    return %c0_i32, %c0_i32_0 : i32, i32
  }
  func.func @transform_6(%arg0: i32) -> (i32, i32) {
    %c0_i32 = arith.constant 0 : i32
    %c0_i32_0 = arith.constant 0 : i32
    return %arg0, %c0_i32 : i32, i32
  }
  func.func @transform_7(%arg0: i32) -> (i32, i32) {
    %c0_i32 = arith.constant 0 : i32
    %c0_i32_0 = arith.constant 0 : i32
    return %arg0, %c0_i32 : i32, i32
  }
  func.func @transform_8(%arg0: i32) -> (i32, i32, i32) {
    %c0_i32 = arith.constant 0 : i32
    %c0_i32_0 = arith.constant 0 : i32
    %c0_i32_1 = arith.constant 0 : i32
    return %c0_i32, %arg0, %c0_i32_0 : i32, i32, i32
  }
  func.func @transform_9(%arg0: i32) -> (i32, i32) {
    %c0_i32 = arith.constant 0 : i32
    %c0_i32_0 = arith.constant 0 : i32
    return %arg0, %c0_i32 : i32, i32
  }
  func.func @transform_10(%arg0: i32) -> (i32, i32) {
    %c0_i32 = arith.constant 0 : i32
    %c0_i32_0 = arith.constant 0 : i32
    return %arg0, %c0_i32 : i32, i32
  }
}

</mosaic_0001>

<llo_original>
// kernel: decoder_decode_fused.1
$region0: #{decoder_decode_fused.1}
  #allocation0 [shape = 'u32[]', space=smem, size = 0x4, offset = 0x4, fixed_abs, tag = 'smem constant byte address 0x4 - core index']
  #allocation1 [shape = 'u32[72,128]{1,0:T(1,128)}', space=vmem, size = 0x9000, scoped, tag = 'internal scratch']
  %s0 = inlined_call_operand.vmem [shape: f32[6,8,128], index: 0, kind: input, shape index: {}]
  %s1 = inlined_call_operand.vmem [shape: f32[128,512], index: 1, kind: input, shape index: {}]
  %s2 = inlined_call_operand.vmem [shape: f32[3,32,128], index: 2, kind: input, shape index: {}]
  %s3 = inlined_call_operand.vmem [shape: f32[3,1,128], index: 3, kind: input, shape index: {}]
  %s4 = inlined_call_operand.vmem [shape: f32[32,128], index: 4, kind: input, shape index: {}]
  %s5 = inlined_call_operand.vmem [shape: f32[1,128], index: 5, kind: input, shape index: {}]
  %s6 = inlined_call_operand.vmem [shape: f32[8,128], index: 6, kind: input, shape index: {}]
  %s7 = inlined_call_operand.vmem [shape: f32[8,128], index: 7, kind: input, shape index: {}]
  %s8 = inlined_call_operand.hbm [shape: f32[6,8,128], index: 8, kind: output, shape index: {0}]
  %s9 = inlined_call_operand.vmem [shape: f32[8,128], index: 9, kind: output, shape index: {1}]
  %s10 = inlined_call_operand.vmem [shape: f32[8,128], index: 10, kind: output, shape index: {2}]
  %11 = xla_tuple %s8, %s9, %s10
  %s12 = sld [smem:[#allocation0]]
  $region58: #{decoder_decode_fused.1} parent=0
    _
  %s14 = ssub.s32 1, %s12
  %s15 = scalar_select 0, %s14, %s12
  $region1: #{decoder_decode_fused.1} parent=0
    #allocation2 [shape = 'u8[24576]{0}', space=vmem, size = 0x6000, scoped, tag = 'output window, operand 0, single buffered']
    #allocation3 [shape = 's32[1]{0}', space=sflag, size = 0x4, scoped, tag = 'scoped memory for decoder_decode_fused.1']
    %16 = vsyncpa [#allocation3], 0
    // Predicated region
    $region2: #{decoder_decode_fused.1} parent=1 // pred_check
      _
    $region3: #{decoder_decode_fused.1} parent=1 // pred_check_branch
      %18 = sbr.rel (0) target = $region5
    $region4: #{decoder_decode_fused.1} parent=1 // pred_region
      _
    $region5: #{decoder_decode_fused.1} parent=1 // pred_fallthru
      _
    // Predicated region
    $region6: #{decoder_decode_fused.1} parent=1 // pred_check
      _
    $region7: #{decoder_decode_fused.1} parent=1 // pred_check_branch
      %20 = sbr.rel (0) target = $region9
    $region8: #{decoder_decode_fused.1} parent=1 // pred_region
      _
    $region9: #{decoder_decode_fused.1} parent=1 // pred_fallthru
      _
    // Predicated region
    $region10: #{decoder_decode_fused.1} parent=1 // pred_check
      _
    $region11: #{decoder_decode_fused.1} parent=1 // pred_check_branch
      %22 = sbr.rel (0) target = $region13
    $region12: #{decoder_decode_fused.1} parent=1 // pred_region
      _
    $region13: #{decoder_decode_fused.1} parent=1 // pred_fallthru
      _
    // Predicated region
    $region14: #{decoder_decode_fused.1} parent=1 // pred_check
      _
    $region15: #{decoder_decode_fused.1} parent=1 // pred_check_branch
      %24 = sbr.rel (0) target = $region17
    $region16: #{decoder_decode_fused.1} parent=1 // pred_region
      _
    $region17: #{decoder_decode_fused.1} parent=1 // pred_fallthru
      _
    // Predicated region
    $region18: #{decoder_decode_fused.1} parent=1 // pred_check
      _
    $region19: #{decoder_decode_fused.1} parent=1 // pred_check_branch
      %26 = sbr.rel (0) target = $region21
    $region20: #{decoder_decode_fused.1} parent=1 // pred_region
      _
    $region21: #{decoder_decode_fused.1} parent=1 // pred_fallthru
      _
    // Predicated region
    $region22: #{decoder_decode_fused.1} parent=1 // pred_check
      _
    $region23: #{decoder_decode_fused.1} parent=1 // pred_check_branch
      %28 = sbr.rel (0) target = $region25
    $region24: #{decoder_decode_fused.1} parent=1 // pred_region
      _
    $region25: #{decoder_decode_fused.1} parent=1 // pred_fallthru
      _
    // Predicated region
    $region26: #{decoder_decode_fused.1} parent=1 // pred_check
      _
    $region27: #{decoder_decode_fused.1} parent=1 // pred_check_branch
      %30 = sbr.rel (0) target = $region29
    $region28: #{decoder_decode_fused.1} parent=1 // pred_region
      _
    $region29: #{decoder_decode_fused.1} parent=1 // pred_fallthru
      _
    // Predicated region
    $region30: #{decoder_decode_fused.1} parent=1 // pred_check
      _
    $region31: #{decoder_decode_fused.1} parent=1 // pred_check_branch
      %32 = sbr.rel (0) target = $region33
    $region32: #{decoder_decode_fused.1} parent=1 // pred_region
      _
    $region33: #{decoder_decode_fused.1} parent=1 // pred_fallthru
      _
    %v33 = vld [vmem:[%s1] sm:$0xff]
    %v34 = vld [vmem:[%s1 + $0x8] sm:$0xff]
    %v35 = vld [vmem:[%s1 + $0x10] sm:$0xff]
    %v36 = vld [vmem:[%s1 + $0x18] sm:$0xff]
    %v37 = vld [vmem:[%s1 + $0x20] sm:$0xff]
    %v38 = vld [vmem:[%s1 + $0x28] sm:$0xff]
    %v39 = vld [vmem:[%s1 + $0x30] sm:$0xff]
    %v40 = vld [vmem:[%s1 + $0x38] sm:$0xff]
    %v41 = vld [vmem:[%s1 + $0x40] sm:$0xff]
    %v42 = vld [vmem:[%s1 + $0x48] sm:$0xff]
    %v43 = vld [vmem:[%s1 + $0x50] sm:$0xff]
    %v44 = vld [vmem:[%s1 + $0x58] sm:$0xff]
    %v45 = vld [vmem:[%s1 + $0x60] sm:$0xff]
    %v46 = vld [vmem:[%s1 + $0x68] sm:$0xff]
    %v47 = vld [vmem:[%s1 + $0x70] sm:$0xff]
    %v48 = vld [vmem:[%s1 + $0x78] sm:$0xff]
    %v49 = vld [vmem:[%s1 + $0x80] sm:$0xff]
    %v50 = vld [vmem:[%s1 + $0x88] sm:$0xff]
    %v51 = vld [vmem:[%s1 + $0x90] sm:$0xff]
    %v52 = vld [vmem:[%s1 + $0x98] sm:$0xff]
    %v53 = vld [vmem:[%s1 + $0xa0] sm:$0xff]
    %v54 = vld [vmem:[%s1 + $0xa8] sm:$0xff]
    %v55 = vld [vmem:[%s1 + $0xb0] sm:$0xff]
    %v56 = vld [vmem:[%s1 + $0xb8] sm:$0xff]
    %v57 = vld [vmem:[%s1 + $0xc0] sm:$0xff]
    %v58 = vld [vmem:[%s1 + $0xc8] sm:$0xff]
    %v59 = vld [vmem:[%s1 + $0xd0] sm:$0xff]
    %v60 = vld [vmem:[%s1 + $0xd8] sm:$0xff]
    %v61 = vld [vmem:[%s1 + $0xe0] sm:$0xff]
    %v62 = vld [vmem:[%s1 + $0xe8] sm:$0xff]
    %v63 = vld [vmem:[%s1 + $0xf0] sm:$0xff]
    %v64 = vld [vmem:[%s1 + $0xf8] sm:$0xff]
    %v65 = vld [vmem:[%s1 + $0x100] sm:$0xff]
    %v66 = vld [vmem:[%s1 + $0x108] sm:$0xff]
    %v67 = vld [vmem:[%s1 + $0x110] sm:$0xff]
    %v68 = vld [vmem:[%s1 + $0x118] sm:$0xff]
    %v69 = vld [vmem:[%s1 + $0x120] sm:$0xff]
    %v70 = vld [vmem:[%s1 + $0x128] sm:$0xff]
    %v71 = vld [vmem:[%s1 + $0x130] sm:$0xff]
    %v72 = vld [vmem:[%s1 + $0x138] sm:$0xff]
    %v73 = vld [vmem:[%s1 + $0x140] sm:$0xff]
    %v74 = vld [vmem:[%s1 + $0x148] sm:$0xff]
    %v75 = vld [vmem:[%s1 + $0x150] sm:$0xff]
    %v76 = vld [vmem:[%s1 + $0x158] sm:$0xff]
    %v77 = vld [vmem:[%s1 + $0x160] sm:$0xff]
    %v78 = vld [vmem:[%s1 + $0x168] sm:$0xff]
    %v79 = vld [vmem:[%s1 + $0x170] sm:$0xff]
    %v80 = vld [vmem:[%s1 + $0x178] sm:$0xff]
    %v81 = vld [vmem:[%s1 + $0x180] sm:$0xff]
    %v82 = vld [vmem:[%s1 + $0x188] sm:$0xff]
    %v83 = vld [vmem:[%s1 + $0x190] sm:$0xff]
    %v84 = vld [vmem:[%s1 + $0x198] sm:$0xff]
    %v85 = vld [vmem:[%s1 + $0x1a0] sm:$0xff]
    %v86 = vld [vmem:[%s1 + $0x1a8] sm:$0xff]
    %v87 = vld [vmem:[%s1 + $0x1b0] sm:$0xff]
    %v88 = vld [vmem:[%s1 + $0x1b8] sm:$0xff]
    %v89 = vld [vmem:[%s1 + $0x1c0] sm:$0xff]
    %v90 = vld [vmem:[%s1 + $0x1c8] sm:$0xff]
    %v91 = vld [vmem:[%s1 + $0x1d0] sm:$0xff]
    %v92 = vld [vmem:[%s1 + $0x1d8] sm:$0xff]
    %v93 = vld [vmem:[%s1 + $0x1e0] sm:$0xff]
    %v94 = vld [vmem:[%s1 + $0x1e8] sm:$0xff]
    %v95 = vld [vmem:[%s1 + $0x1f0] sm:$0xff]
    %v96 = vld [vmem:[%s1 + $0x1f8] sm:$0xff]
    %v97 = vld [vmem:[%s4] sm:$0xff]
    %v98 = vld [vmem:[%s4 + $0x8] sm:$0xff]
    %v99 = vld [vmem:[%s4 + $0x10] sm:$0xff]
    %v100 = vld [vmem:[%s4 + $0x18] sm:$0xff]
    %v101 = vld [vmem:[%s5] sm:$0x1]
    %v102 = vld [vmem:[%s6] sm:$0xff]
    %v103 = vld [vmem:[%s7] sm:$0xff]
    %104 = vmatpush.msra.mxu0 %v93
    %105 = vmatpush.msra.mxu0 %v89
    %106 = vmatpush.msra.mxu0 %v85
    %107 = vmatpush.msra.mxu0 %v81
    %108 = vmatpush.msra.mxu0 %v77
    %109 = vmatpush.msra.mxu0 %v73
    %110 = vmatpush.msra.mxu0 %v69
    %111 = vmatpush.msra.mxu0 %v65
    %112 = vmatpush.msra.mxu0 %v61
    %113 = vmatpush.msra.mxu0 %v57
    %114 = vmatpush.msra.mxu0 %v53
    %115 = vmatpush.msra.mxu0 %v49
    %116 = vmatpush.msra.mxu0 %v45
    %117 = vmatpush.msra.mxu0 %v41
    %118 = vmatpush.msra.mxu0 %v37
    %119 = vmatpush.msra.mxu0 %v33
    %120 = vmatmul.f32.gmra.mxu0 %v102
    %v121 = vpop.f32.mrf.mxu0
    %v122 = vadd.f32 0.0, %v121
    %123 = vdwg.mxu0
    %124 = vmatpush.msra.mxu0 %v94
    %125 = vmatpush.msra.mxu0 %v90
    %126 = vmatpush.msra.mxu0 %v86
    %127 = vmatpush.msra.mxu0 %v82
    %128 = vmatpush.msra.mxu0 %v78
    %129 = vmatpush.msra.mxu0 %v74
    %130 = vmatpush.msra.mxu0 %v70
    %131 = vmatpush.msra.mxu0 %v66
    %132 = vmatpush.msra.mxu0 %v62
    %133 = vmatpush.msra.mxu0 %v58
    %134 = vmatpush.msra.mxu0 %v54
    %135 = vmatpush.msra.mxu0 %v50
    %136 = vmatpush.msra.mxu0 %v46
    %137 = vmatpush.msra.mxu0 %v42
    %138 = vmatpush.msra.mxu0 %v38
    %139 = vmatpush.msra.mxu0 %v34
    %140 = vmatmul.f32.gmra.mxu0 %v102
    %v141 = vpop.f32.mrf.mxu0
    %v142 = vadd.f32 0.0, %v141
    %143 = vdwg.mxu0
    %144 = vmatpush.msra.mxu0 %v95
    %145 = vmatpush.msra.mxu0 %v91
    %146 = vmatpush.msra.mxu0 %v87
    %147 = vmatpush.msra.mxu0 %v83
    %148 = vmatpush.msra.mxu0 %v79
    %149 = vmatpush.msra.mxu0 %v75
    %150 = vmatpush.msra.mxu0 %v71
    %151 = vmatpush.msra.mxu0 %v67
    %152 = vmatpush.msra.mxu0 %v63
    %153 = vmatpush.msra.mxu0 %v59
    %154 = vmatpush.msra.mxu0 %v55
    %155 = vmatpush.msra.mxu0 %v51
    %156 = vmatpush.msra.mxu0 %v47
    %157 = vmatpush.msra.mxu0 %v43
    %158 = vmatpush.msra.mxu0 %v39
    %159 = vmatpush.msra.mxu0 %v35
    %160 = vmatmul.f32.gmra.mxu0 %v102
    %v161 = vpop.f32.mrf.mxu0
    %v162 = vadd.f32 0.0, %v161
    %163 = vdwg.mxu0
    %164 = vmatpush.msra.mxu0 %v96
    %165 = vmatpush.msra.mxu0 %v92
    %166 = vmatpush.msra.mxu0 %v88
    %167 = vmatpush.msra.mxu0 %v84
    %168 = vmatpush.msra.mxu0 %v80
    %169 = vmatpush.msra.mxu0 %v76
    %170 = vmatpush.msra.mxu0 %v72
    %171 = vmatpush.msra.mxu0 %v68
    %172 = vmatpush.msra.mxu0 %v64
    %173 = vmatpush.msra.mxu0 %v60
    %174 = vmatpush.msra.mxu0 %v56
    %175 = vmatpush.msra.mxu0 %v52
    %176 = vmatpush.msra.mxu0 %v48
    %177 = vmatpush.msra.mxu0 %v44
    %178 = vmatpush.msra.mxu0 %v40
    %179 = vmatpush.msra.mxu0 %v36
    %180 = vmatmul.f32.gmra.mxu0 %v102
    %v181 = vpop.f32.mrf.mxu0
    %v182 = vadd.f32 0.0, %v181
    %183 = vdwg.mxu0
    %v184 = vld [vmem:[%s0] sm:$0xff]
    %v185 = vadd.f32 %v184, %v122
    %v186 = vxor.u32 %v185, 2147483648
    %v187 = vmul.f32 %v186, 1.442695
    %v188 = vpow.pop %v187
    %v189 = vadd.f32 %v188, 1.0
    %v190 = vrcp.pop %v189
    %v191 = vmul.f32 %v189, %v190
    %v192 = vsub.f32 1.0, %v191
    %v193 = vmul.f32 %v190, %v192
    %v194 = vadd.f32 %v190, %v193
    %vm195 = vweird.f32 %v189
    %vm196 = vweird.f32 %v190
    %vm197 = vmor %vm195, %vm196
    %v198 = vsel %vm197, %v190, %v194
    %v199 = vand.u32 2147483647, %v189
    %vm200 = vcmp.eq.f32.partialorder %v199, 8.507059e+37
    %v201 = vand.u32 %v189, 2147483648
    %v202 = vor.u32 1.1754944e-38, %v201
    %v203 = vsel %vm200, %v202, %v198
    %v204 = vmul.f32 1.0, %v203
    %v205 = vtanh.pop %v185
    %207 = vrot.lane.b32.xlu0 %v103, 32
    %v208 = vpop.permute.xlu0 %207
    %v210 = vmul.f32 %v204, %v208
    %212 = vrot.lane.b32.xlu0 %v205, 64
    %v213 = vpop.permute.xlu0 %212
    %v215 = vmul.f32 %v204, %v213
    %217 = vrot.lane.b32.xlu0 %v215, 32
    %v218 = vpop.permute.xlu0 %217
    %v220 = vadd.f32 %v210, %v218
    %v221 = vtanh.pop %v220
    %223 = vrot.lane.b32.xlu0 %v221, 64
    %v224 = vpop.permute.xlu0 %223
    %v226 = vmul.f32 %v204, %v224
    %v227 = vld [vmem:[%s2] sm:$0xff]
    %v228 = vld [vmem:[%s2 + $0x8] sm:$0xff]
    %v229 = vld [vmem:[%s2 + $0x10] sm:$0xff]
    %v230 = vld [vmem:[%s2 + $0x18] sm:$0xff]
    %232 = vrot.lane.b32.xlu0 %v226, 32
    %v233 = vpop.permute.xlu0 %232
    %vm234 = vcmask 261120
    %v235 = vsel %vm234, %v233, 0
    %237 = vmatpush.msra.mxu0 0.0
    %238 = vmatpush.msra.mxu0 0.0
    %239 = vmatpush.msra.mxu0 0.0
    %240 = vmatpush.msra.mxu0 0.0
    %241 = vmatpush.msra.mxu0 0.0
    %242 = vmatpush.msra.mxu0 0.0
    %243 = vmatpush.msra.mxu0 0.0
    %244 = vmatpush.msra.mxu0 0.0
    %245 = vmatpush.msra.mxu0 0.0
    %246 = vmatpush.msra.mxu0 0.0
    %247 = vmatpush.msra.mxu0 0.0
    %248 = vmatpush.msra.mxu0 0.0
    %249 = vmatpush.msra.mxu0 %v230
    %250 = vmatpush.msra.mxu0 %v229
    %251 = vmatpush.msra.mxu0 %v228
    %252 = vmatpush.msra.mxu0 %v227
    %253 = vmatmul.f32.gmra.mxu0 %v235
    %v254 = vpop.f32.mrf.mxu0
    %v255 = vadd.f32 %v142, %v254
    %256 = vdwg.mxu0
    %v257 = vld [vmem:[%s3] sm:$0x1]
    %v259 = vperm.slane %v257, 0
    %v261 = vadd.f32 %v255, %v259
    %v262 = vxor.u32 %v261, 2147483648
    %v263 = vmul.f32 %v262, 1.442695
    %v264 = vpow.pop %v263
    %v265 = vadd.f32 %v264, 1.0
    %v266 = vrcp.pop %v265
    %v267 = vmul.f32 %v265, %v266
    %v268 = vsub.f32 1.0, %v267
    %v269 = vmul.f32 %v266, %v268
    %v270 = vadd.f32 %v266, %v269
    %vm271 = vweird.f32 %v265
    %vm272 = vweird.f32 %v266
    %vm273 = vmor %vm271, %vm272
    %v274 = vsel %vm273, %v266, %v270
    %v275 = vand.u32 2147483647, %v265
    %vm276 = vcmp.eq.f32.partialorder %v275, 8.507059e+37
    %v277 = vand.u32 %v265, 2147483648
    %v278 = vor.u32 1.1754944e-38, %v277
    %v279 = vsel %vm276, %v278, %v274
    %v280 = vmul.f32 1.0, %v279
    %v281 = vtanh.pop %v261
    %v282 = vmul.f32 %v280, %v103
    %284 = vrot.lane.b32.xlu0 %v281, 64
    %v285 = vpop.permute.xlu0 %284
    %v287 = vmul.f32 %v280, %v285
    %289 = vrot.lane.b32.xlu0 %v287, 32
    %v290 = vpop.permute.xlu0 %289
    %v292 = vadd.f32 %v282, %v290
    %v293 = vtanh.pop %v292
    %295 = vrot.lane.b32.xlu0 %v293, 64
    %v296 = vpop.permute.xlu0 %295
    %v298 = vmul.f32 %v280, %v296
    %s299 = scalar_lea.vmem %s2, 32
    %v300 = vld [vmem:[%s299] sm:$0xff]
    %v301 = vld [vmem:[%s299 + $0x8] sm:$0xff]
    %v302 = vld [vmem:[%s299 + $0x10] sm:$0xff]
    %v303 = vld [vmem:[%s299 + $0x18] sm:$0xff]
    %305 = vrot.lane.b32.xlu0 %v298, 32
    %v306 = vpop.permute.xlu0 %305
    %v307 = vsel %vm234, %v306, 0
    %309 = vmatpush.msra.mxu0 0.0
    %310 = vmatpush.msra.mxu0 0.0
    %311 = vmatpush.msra.mxu0 0.0
    %312 = vmatpush.msra.mxu0 0.0
    %313 = vmatpush.msra.mxu0 0.0
    %314 = vmatpush.msra.mxu0 0.0
    %315 = vmatpush.msra.mxu0 0.0
    %316 = vmatpush.msra.mxu0 0.0
    %317 = vmatpush.msra.mxu0 0.0
    %318 = vmatpush.msra.mxu0 0.0
    %319 = vmatpush.msra.mxu0 0.0
    %320 = vmatpush.msra.mxu0 0.0
    %321 = vmatpush.msra.mxu0 %v303
    %322 = vmatpush.msra.mxu0 %v302
    %323 = vmatpush.msra.mxu0 %v301
    %324 = vmatpush.msra.mxu0 %v300
    %325 = vmatmul.f32.gmra.mxu0 %v307
    %v326 = vpop.f32.mrf.mxu0
    %v327 = vadd.f32 %v162, %v326
    %328 = vdwg.mxu0
    %s329 = scalar_lea.vmem %s3, 1
    %v330 = vld [vmem:[%s329] sm:$0x1]
    %v332 = vperm.slane %v330, 0
    %v334 = vadd.f32 %v327, %v332
    %v335 = vxor.u32 %v334, 2147483648
    %v336 = vmul.f32 %v335, 1.442695
    %v337 = vpow.pop %v336
    %v338 = vadd.f32 %v337, 1.0
    %v339 = vrcp.pop %v338
    %v340 = vmul.f32 %v338, %v339
    %v341 = vsub.f32 1.0, %v340
    %v342 = vmul.f32 %v339, %v341
    %v343 = vadd.f32 %v339, %v342
    %vm344 = vweird.f32 %v338
    %vm345 = vweird.f32 %v339
    %vm346 = vmor %vm344, %vm345
    %v347 = vsel %vm346, %v339, %v343
    %v348 = vand.u32 2147483647, %v338
    %vm349 = vcmp.eq.f32.partialorder %v348, 8.507059e+37
    %v350 = vand.u32 %v338, 2147483648
    %v351 = vor.u32 1.1754944e-38, %v350
    %v352 = vsel %vm349, %v351, %v347
    %v353 = vmul.f32 1.0, %v352
    %v354 = vtanh.pop %v334
    %355 = vrot.lane.b32.xlu0 %v103, 96
    %v356 = vpop.permute.xlu0 %355
    %v358 = vmul.f32 %v353, %v356
    %360 = vrot.lane.b32.xlu0 %v354, 64
    %v361 = vpop.permute.xlu0 %360
    %v363 = vmul.f32 %v353, %v361
    %365 = vrot.lane.b32.xlu0 %v363, 32
    %v366 = vpop.permute.xlu0 %365
    %v368 = vadd.f32 %v358, %v366
    %v369 = vtanh.pop %v368
    %371 = vrot.lane.b32.xlu0 %v369, 64
    %v372 = vpop.permute.xlu0 %371
    %v374 = vmul.f32 %v353, %v372
    %s375 = scalar_lea.vmem %s2, 64
    %v376 = vld [vmem:[%s375] sm:$0xff]
    %v377 = vld [vmem:[%s375 + $0x8] sm:$0xff]
    %v378 = vld [vmem:[%s375 + $0x10] sm:$0xff]
    %v379 = vld [vmem:[%s375 + $0x18] sm:$0xff]
    %381 = vrot.lane.b32.xlu0 %v374, 32
    %v382 = vpop.permute.xlu0 %381
    %v383 = vsel %vm234, %v382, 0
    %385 = vmatpush.msra.mxu0 0.0
    %386 = vmatpush.msra.mxu0 0.0
    %387 = vmatpush.msra.mxu0 0.0
    %388 = vmatpush.msra.mxu0 0.0
    %389 = vmatpush.msra.mxu0 0.0
    %390 = vmatpush.msra.mxu0 0.0
    %391 = vmatpush.msra.mxu0 0.0
    %392 = vmatpush.msra.mxu0 0.0
    %393 = vmatpush.msra.mxu0 0.0
    %394 = vmatpush.msra.mxu0 0.0
    %395 = vmatpush.msra.mxu0 0.0
    %396 = vmatpush.msra.mxu0 0.0
    %397 = vmatpush.msra.mxu0 %v379
    %398 = vmatpush.msra.mxu0 %v378
    %399 = vmatpush.msra.mxu0 %v377
    %400 = vmatpush.msra.mxu0 %v376
    %401 = vmatmul.f32.gmra.mxu0 %v383
    %v402 = vpop.f32.mrf.mxu0
    %v403 = vadd.f32 %v182, %v402
    %404 = vdwg.mxu0
    %s405 = scalar_lea.vmem %s3, 2
    %v406 = vld [vmem:[%s405] sm:$0x1]
    %v408 = vperm.slane %v406, 0
    %v410 = vadd.f32 %v403, %v408
    %v411 = vxor.u32 %v410, 2147483648
    %v412 = vmul.f32 %v411, 1.442695
    %v413 = vpow.pop %v412
    %v414 = vadd.f32 %v413, 1.0
    %v415 = vrcp.pop %v414
    %v416 = vmul.f32 %v414, %v415
    %v417 = vsub.f32 1.0, %v416
    %v418 = vmul.f32 %v415, %v417
    %v419 = vadd.f32 %v415, %v418
    %vm420 = vweird.f32 %v414
    %vm421 = vweird.f32 %v415
    %vm422 = vmor %vm420, %vm421
    %v423 = vsel %vm422, %v415, %v419
    %v424 = vand.u32 2147483647, %v414
    %vm425 = vcmp.eq.f32.partialorder %v424, 8.507059e+37
    %v426 = vand.u32 %v414, 2147483648
    %v427 = vor.u32 1.1754944e-38, %v426
    %v428 = vsel %vm425, %v427, %v423
    %v429 = vmul.f32 1.0, %v428
    %v430 = vtanh.pop %v410
    %431 = vrot.lane.b32.xlu0 %v103, 64
    %v432 = vpop.permute.xlu0 %431
    %v434 = vmul.f32 %v429, %v432
    %436 = vrot.lane.b32.xlu0 %v430, 64
    %v437 = vpop.permute.xlu0 %436
    %v439 = vmul.f32 %v429, %v437
    %441 = vrot.lane.b32.xlu0 %v439, 32
    %v442 = vpop.permute.xlu0 %441
    %v444 = vadd.f32 %v434, %v442
    %v445 = vtanh.pop %v444
    %447 = vrot.lane.b32.xlu0 %v445, 64
    %v448 = vpop.permute.xlu0 %447
    %v450 = vmul.f32 %v429, %v448
    %452 = vrot.lane.b32.xlu0 %v298, 64
    %v453 = vpop.permute.xlu0 %452
    %455 = vrot.lane.b32.xlu0 %v374, 96
    %v456 = vpop.permute.xlu0 %455
    %v458 = vsel %vm234, %v233, %v453
    %vm459 = vcmask 523264
    %v460 = vsel %vm459, %v458, %v456
    %vm461 = vcmask 785408
    %v462 = vsel %vm461, %v460, %v450
    %464 = vrot.lane.b32.xlu0 %v220, 96
    %v465 = vpop.permute.xlu0 %464
    %468 = vrot.lane.b32.xlu0 %v368, 32
    %v469 = vpop.permute.xlu0 %468
    %472 = vrot.lane.b32.xlu0 %v444, 64
    %v473 = vpop.permute.xlu0 %472
    %v475 = vsel %vm234, %v465, %v292
    %v476 = vsel %vm459, %v475, %v469
    %v477 = vsel %vm461, %v476, %v473
    %v479 = vperm.slane %v101, 0
    %482 = vrot.lane.b32.xlu0 %v450, 32
    %v483 = vpop.permute.xlu0 %482
    %v484 = vsel %vm234, %v483, 0
    %486 = vmatpush.msra.mxu0 0.0
    %487 = vmatpush.msra.mxu0 0.0
    %488 = vmatpush.msra.mxu0 0.0
    %489 = vmatpush.msra.mxu0 0.0
    %490 = vmatpush.msra.mxu0 0.0
    %491 = vmatpush.msra.mxu0 0.0
    %492 = vmatpush.msra.mxu0 0.0
    %493 = vmatpush.msra.mxu0 0.0
    %494 = vmatpush.msra.mxu0 0.0
    %495 = vmatpush.msra.mxu0 0.0
    %496 = vmatpush.msra.mxu0 0.0
    %497 = vmatpush.msra.mxu0 0.0
    %498 = vmatpush.msra.mxu0 %v100
    %499 = vmatpush.msra.mxu0 %v99
    %500 = vmatpush.msra.mxu0 %v98
    %501 = vmatpush.msra.mxu0 %v97
    %502 = vmatmul.f32.gmra.mxu0 %v484
    %v503 = vpop.f32.mrf.mxu0
    %v504 = vadd.f32 %v479, %v503
    %505 = vdwg.mxu0
    %506 = vmax.xlane.f32.xlu0 %v504
    %v507 = vpop.xlane.xlu0 %506
    %v508 = vsub.f32 %v504, %v507
    %v509 = vmul.f32 %v508, 1.442695
    %v510 = vpow.pop %v509
    %511 = vadd.xlane.f32.xlu0 %v510
    %v512 = vpop.xlane.xlu0 %511
    %v513 = vlog2.pop %v512
    %v514 = vmul.f32 %v513, 0.6931472
    %v515 = vsub.f32 %v508, %v514
    %516 = vst [vmem:[#allocation2] sm:$0xff] %v515
    %517 = vmatpush.msra.mxu0 %v93
    %518 = vmatpush.msra.mxu0 %v89
    %519 = vmatpush.msra.mxu0 %v85
    %520 = vmatpush.msra.mxu0 %v81
    %521 = vmatpush.msra.mxu0 %v77
    %522 = vmatpush.msra.mxu0 %v73
    %523 = vmatpush.msra.mxu0 %v69
    %524 = vmatpush.msra.mxu0 %v65
    %525 = vmatpush.msra.mxu0 %v61
    %526 = vmatpush.msra.mxu0 %v57
    %527 = vmatpush.msra.mxu0 %v53
    %528 = vmatpush.msra.mxu0 %v49
    %529 = vmatpush.msra.mxu0 %v45
    %530 = vmatpush.msra.mxu0 %v41
    %531 = vmatpush.msra.mxu0 %v37
    %532 = vmatpush.msra.mxu0 %v33
    %533 = vmatmul.f32.gmra.mxu0 %v462
    %v534 = vpop.f32.mrf.mxu0
    %v535 = vadd.f32 0.0, %v534
    %536 = vdwg.mxu0
    %537 = vmatpush.msra.mxu0 %v94
    %538 = vmatpush.msra.mxu0 %v90
    %539 = vmatpush.msra.mxu0 %v86
    %540 = vmatpush.msra.mxu0 %v82
    %541 = vmatpush.msra.mxu0 %v78
    %542 = vmatpush.msra.mxu0 %v74
    %543 = vmatpush.msra.mxu0 %v70
    %544 = vmatpush.msra.mxu0 %v66
    %545 = vmatpush.msra.mxu0 %v62
    %546 = vmatpush.msra.mxu0 %v58
    %547 = vmatpush.msra.mxu0 %v54
    %548 = vmatpush.msra.mxu0 %v50
    %549 = vmatpush.msra.mxu0 %v46
    %550 = vmatpush.msra.mxu0 %v42
    %551 = vmatpush.msra.mxu0 %v38
    %552 = vmatpush.msra.mxu0 %v34
    %553 = vmatmul.f32.gmra.mxu0 %v462
    %v554 = vpop.f32.mrf.mxu0
    %v555 = vadd.f32 0.0, %v554
    %556 = vdwg.mxu0
    %557 = vmatpush.msra.mxu0 %v95
    %558 = vmatpush.msra.mxu0 %v91
    %559 = vmatpush.msra.mxu0 %v87
    %560 = vmatpush.msra.mxu0 %v83
    %561 = vmatpush.msra.mxu0 %v79
    %562 = vmatpush.msra.mxu0 %v75
    %563 = vmatpush.msra.mxu0 %v71
    %564 = vmatpush.msra.mxu0 %v67
    %565 = vmatpush.msra.mxu0 %v63
    %566 = vmatpush.msra.mxu0 %v59
    %567 = vmatpush.msra.mxu0 %v55
    %568 = vmatpush.msra.mxu0 %v51
    %569 = vmatpush.msra.mxu0 %v47
    %570 = vmatpush.msra.mxu0 %v43
    %571 = vmatpush.msra.mxu0 %v39
    %572 = vmatpush.msra.mxu0 %v35
    %573 = vmatmul.f32.gmra.mxu0 %v462
    %v574 = vpop.f32.mrf.mxu0
    %v575 = vadd.f32 0.0, %v574
    %576 = vdwg.mxu0
    %577 = vmatpush.msra.mxu0 %v96
    %578 = vmatpush.msra.mxu0 %v92
    %579 = vmatpush.msra.mxu0 %v88
    %580 = vmatpush.msra.mxu0 %v84
    %581 = vmatpush.msra.mxu0 %v80
    %582 = vmatpush.msra.mxu0 %v76
    %583 = vmatpush.msra.mxu0 %v72
    %584 = vmatpush.msra.mxu0 %v68
    %585 = vmatpush.msra.mxu0 %v64
    %586 = vmatpush.msra.mxu0 %v60
    %587 = vmatpush.msra.mxu0 %v56
    %588 = vmatpush.msra.mxu0 %v52
    %589 = vmatpush.msra.mxu0 %v48
    %590 = vmatpush.msra.mxu0 %v44
    %591 = vmatpush.msra.mxu0 %v40
    %592 = vmatpush.msra.mxu0 %v36
    %593 = vmatmul.f32.gmra.mxu0 %v462
    %v594 = vpop.f32.mrf.mxu0
    %v595 = vadd.f32 0.0, %v594
    %596 = vdwg.mxu0
    %s597 = scalar_lea.vmem %s0, 8
    %v598 = vld [vmem:[%s597] sm:$0xff]
    %v599 = vadd.f32 %v598, %v535
    %v600 = vxor.u32 %v599, 2147483648
    %v601 = vmul.f32 %v600, 1.442695
    %v602 = vpow.pop %v601
    %v603 = vadd.f32 %v602, 1.0
    %v604 = vrcp.pop %v603
    %v605 = vmul.f32 %v603, %v604
    %v606 = vsub.f32 1.0, %v605
    %v607 = vmul.f32 %v604, %v606
    %v608 = vadd.f32 %v604, %v607
    %vm609 = vweird.f32 %v603
    %vm610 = vweird.f32 %v604
    %vm611 = vmor %vm609, %vm610
    %v612 = vsel %vm611, %v604, %v608
    %v613 = vand.u32 2147483647, %v603
    %vm614 = vcmp.eq.f32.partialorder %v613, 8.507059e+37
    %v615 = vand.u32 %v603, 2147483648
    %v616 = vor.u32 1.1754944e-38, %v615
    %v617 = vsel %vm614, %v616, %v612
    %v618 = vmul.f32 1.0, %v617
    %v619 = vtanh.pop %v599
    %621 = vrot.lane.b32.xlu0 %v477, 32
    %v622 = vpop.permute.xlu0 %621
    %v624 = vmul.f32 %v618, %v622
    %626 = vrot.lane.b32.xlu0 %v619, 64
    %v627 = vpop.permute.xlu0 %626
    %v629 = vmul.f32 %v618, %v627
    %631 = vrot.lane.b32.xlu0 %v629, 32
    %v632 = vpop.permute.xlu0 %631
    %v634 = vadd.f32 %v624, %v632
    %v635 = vtanh.pop %v634
    %637 = vrot.lane.b32.xlu0 %v635, 64
    %v638 = vpop.permute.xlu0 %637
    %v640 = vmul.f32 %v618, %v638
    %v641 = vld [vmem:[%s2] sm:$0xff]
    %v642 = vld [vmem:[%s2 + $0x8] sm:$0xff]
    %v643 = vld [vmem:[%s2 + $0x10] sm:$0xff]
    %v644 = vld [vmem:[%s2 + $0x18] sm:$0xff]
    %646 = vrot.lane.b32.xlu0 %v640, 32
    %v647 = vpop.permute.xlu0 %646
    %v648 = vsel %vm234, %v647, 0
    %650 = vmatpush.msra.mxu0 0.0
    %651 = vmatpush.msra.mxu0 0.0
    %652 = vmatpush.msra.mxu0 0.0
    %653 = vmatpush.msra.mxu0 0.0
    %654 = vmatpush.msra.mxu0 0.0
    %655 = vmatpush.msra.mxu0 0.0
    %656 = vmatpush.msra.mxu0 0.0
    %657 = vmatpush.msra.mxu0 0.0
    %658 = vmatpush.msra.mxu0 0.0
    %659 = vmatpush.msra.mxu0 0.0
    %660 = vmatpush.msra.mxu0 0.0
    %661 = vmatpush.msra.mxu0 0.0
    %662 = vmatpush.msra.mxu0 %v644
    %663 = vmatpush.msra.mxu0 %v643
    %664 = vmatpush.msra.mxu0 %v642
    %665 = vmatpush.msra.mxu0 %v641
    %666 = vmatmul.f32.gmra.mxu0 %v648
    %v667 = vpop.f32.mrf.mxu0
    %v668 = vadd.f32 %v555, %v667
    %669 = vdwg.mxu0
    %v670 = vld [vmem:[%s3] sm:$0x1]
    %v672 = vperm.slane %v670, 0
    %v674 = vadd.f32 %v668, %v672
    %v675 = vxor.u32 %v674, 2147483648
    %v676 = vmul.f32 %v675, 1.442695
    %v677 = vpow.pop %v676
    %v678 = vadd.f32 %v677, 1.0
    %v679 = vrcp.pop %v678
    %v680 = vmul.f32 %v678, %v679
    %v681 = vsub.f32 1.0, %v680
    %v682 = vmul.f32 %v679, %v681
    %v683 = vadd.f32 %v679, %v682
    %vm684 = vweird.f32 %v678
    %vm685 = vweird.f32 %v679
    %vm686 = vmor %vm684, %vm685
    %v687 = vsel %vm686, %v679, %v683
    %v688 = vand.u32 2147483647, %v678
    %vm689 = vcmp.eq.f32.partialorder %v688, 8.507059e+37
    %v690 = vand.u32 %v678, 2147483648
    %v691 = vor.u32 1.1754944e-38, %v690
    %v692 = vsel %vm689, %v691, %v687
    %v693 = vmul.f32 1.0, %v692
    %v694 = vtanh.pop %v674
    %v695 = vmul.f32 %v693, %v477
    %697 = vrot.lane.b32.xlu0 %v694, 64
    %v698 = vpop.permute.xlu0 %697
    %v700 = vmul.f32 %v693, %v698
    %702 = vrot.lane.b32.xlu0 %v700, 32
    %v703 = vpop.permute.xlu0 %702
    %v705 = vadd.f32 %v695, %v703
    %v706 = vtanh.pop %v705
    %708 = vrot.lane.b32.xlu0 %v706, 64
    %v709 = vpop.permute.xlu0 %708
    %v711 = vmul.f32 %v693, %v709
    %v712 = vld [vmem:[%s299] sm:$0xff]
    %v713 = vld [vmem:[%s299 + $0x8] sm:$0xff]
    %v714 = vld [vmem:[%s299 + $0x10] sm:$0xff]
    %v715 = vld [vmem:[%s299 + $0x18] sm:$0xff]
    %717 = vrot.lane.b32.xlu0 %v711, 32
    %v718 = vpop.permute.xlu0 %717
    %v719 = vsel %vm234, %v718, 0
    %721 = vmatpush.msra.mxu0 0.0
    %722 = vmatpush.msra.mxu0 0.0
    %723 = vmatpush.msra.mxu0 0.0
    %724 = vmatpush.msra.mxu0 0.0
    %725 = vmatpush.msra.mxu0 0.0
    %726 = vmatpush.msra.mxu0 0.0
    %727 = vmatpush.msra.mxu0 0.0
    %728 = vmatpush.msra.mxu0 0.0
    %729 = vmatpush.msra.mxu0 0.0
    %730 = vmatpush.msra.mxu0 0.0
    %731 = vmatpush.msra.mxu0 0.0
    %732 = vmatpush.msra.mxu0 0.0
    %733 = vmatpush.msra.mxu0 %v715
    %734 = vmatpush.msra.mxu0 %v714
    %735 = vmatpush.msra.mxu0 %v713
    %736 = vmatpush.msra.mxu0 %v712
    %737 = vmatmul.f32.gmra.mxu0 %v719
    %v738 = vpop.f32.mrf.mxu0
    %v739 = vadd.f32 %v575, %v738
    %740 = vdwg.mxu0
    %v741 = vld [vmem:[%s329] sm:$0x1]
    %v743 = vperm.slane %v741, 0
    %v745 = vadd.f32 %v739, %v743
    %v746 = vxor.u32 %v745, 2147483648
    %v747 = vmul.f32 %v746, 1.442695
    %v748 = vpow.pop %v747
    %v749 = vadd.f32 %v748, 1.0
    %v750 = vrcp.pop %v749
    %v751 = vmul.f32 %v749, %v750
    %v752 = vsub.f32 1.0, %v751
    %v753 = vmul.f32 %v750, %v752
    %v754 = vadd.f32 %v750, %v753
    %vm755 = vweird.f32 %v749
    %vm756 = vweird.f32 %v750
    %vm757 = vmor %vm755, %vm756
    %v758 = vsel %vm757, %v750, %v754
    %v759 = vand.u32 2147483647, %v749
    %vm760 = vcmp.eq.f32.partialorder %v759, 8.507059e+37
    %v761 = vand.u32 %v749, 2147483648
    %v762 = vor.u32 1.1754944e-38, %v761
    %v763 = vsel %vm760, %v762, %v758
    %v764 = vmul.f32 1.0, %v763
    %v765 = vtanh.pop %v745
    %766 = vrot.lane.b32.xlu0 %v477, 96
    %v767 = vpop.permute.xlu0 %766
    %v769 = vmul.f32 %v764, %v767
    %771 = vrot.lane.b32.xlu0 %v765, 64
    %v772 = vpop.permute.xlu0 %771
    %v774 = vmul.f32 %v764, %v772
    %776 = vrot.lane.b32.xlu0 %v774, 32
    %v777 = vpop.permute.xlu0 %776
    %v779 = vadd.f32 %v769, %v777
    %v780 = vtanh.pop %v779
    %782 = vrot.lane.b32.xlu0 %v780, 64
    %v783 = vpop.permute.xlu0 %782
    %v785 = vmul.f32 %v764, %v783
    %v786 = vld [vmem:[%s375] sm:$0xff]
    %v787 = vld [vmem:[%s375 + $0x8] sm:$0xff]
    %v788 = vld [vmem:[%s375 + $0x10] sm:$0xff]
    %v789 = vld [vmem:[%s375 + $0x18] sm:$0xff]
    %791 = vrot.lane.b32.xlu0 %v785, 32
    %v792 = vpop.permute.xlu0 %791
    %v793 = vsel %vm234, %v792, 0
    %795 = vmatpush.msra.mxu0 0.0
    %796 = vmatpush.msra.mxu0 0.0
    %797 = vmatpush.msra.mxu0 0.0
    %798 = vmatpush.msra.mxu0 0.0
    %799 = vmatpush.msra.mxu0 0.0
    %800 = vmatpush.msra.mxu0 0.0
    %801 = vmatpush.msra.mxu0 0.0
    %802 = vmatpush.msra.mxu0 0.0
    %803 = vmatpush.msra.mxu0 0.0
    %804 = vmatpush.msra.mxu0 0.0
    %805 = vmatpush.msra.mxu0 0.0
    %806 = vmatpush.msra.mxu0 0.0
    %807 = vmatpush.msra.mxu0 %v789
    %808 = vmatpush.msra.mxu0 %v788
    %809 = vmatpush.msra.mxu0 %v787
    %810 = vmatpush.msra.mxu0 %v786
    %811 = vmatmul.f32.gmra.mxu0 %v793
    %v812 = vpop.f32.mrf.mxu0
    %v813 = vadd.f32 %v595, %v812
    %814 = vdwg.mxu0
    %v815 = vld [vmem:[%s405] sm:$0x1]
    %v817 = vperm.slane %v815, 0
    %v819 = vadd.f32 %v813, %v817
    %v820 = vxor.u32 %v819, 2147483648
    %v821 = vmul.f32 %v820, 1.442695
    %v822 = vpow.pop %v821
    %v823 = vadd.f32 %v822, 1.0
    %v824 = vrcp.pop %v823
    %v825 = vmul.f32 %v823, %v824
    %v826 = vsub.f32 1.0, %v825
    %v827 = vmul.f32 %v824, %v826
    %v828 = vadd.f32 %v824, %v827
    %vm829 = vweird.f32 %v823
    %vm830 = vweird.f32 %v824
    %vm831 = vmor %vm829, %vm830
    %v832 = vsel %vm831, %v824, %v828
    %v833 = vand.u32 2147483647, %v823
    %vm834 = vcmp.eq.f32.partialorder %v833, 8.507059e+37
    %v835 = vand.u32 %v823, 2147483648
    %v836 = vor.u32 1.1754944e-38, %v835
    %v837 = vsel %vm834, %v836, %v832
    %v838 = vmul.f32 1.0, %v837
    %v839 = vtanh.pop %v819
    %840 = vrot.lane.b32.xlu0 %v477, 64
    %v841 = vpop.permute.xlu0 %840
    %v843 = vmul.f32 %v838, %v841
    %845 = vrot.lane.b32.xlu0 %v839, 64
    %v846 = vpop.permute.xlu0 %845
    %v848 = vmul.f32 %v838, %v846
    %850 = vrot.lane.b32.xlu0 %v848, 32
    %v851 = vpop.permute.xlu0 %850
    %v853 = vadd.f32 %v843, %v851
    %v854 = vtanh.pop %v853
    %856 = vrot.lane.b32.xlu0 %v854, 64
    %v857 = vpop.permute.xlu0 %856
    %v859 = vmul.f32 %v838, %v857
    %861 = vrot.lane.b32.xlu0 %v711, 64
    %v862 = vpop.permute.xlu0 %861
    %864 = vrot.lane.b32.xlu0 %v785, 96
    %v865 = vpop.permute.xlu0 %864
    %v867 = vsel %vm234, %v647, %v862
    %v868 = vsel %vm459, %v867, %v865
    %v869 = vsel %vm461, %v868, %v859
    %871 = vrot.lane.b32.xlu0 %v634, 96
    %v872 = vpop.permute.xlu0 %871
    %875 = vrot.lane.b32.xlu0 %v779, 32
    %v876 = vpop.permute.xlu0 %875
    %879 = vrot.lane.b32.xlu0 %v853, 64
    %v880 = vpop.permute.xlu0 %879
    %v882 = vsel %vm234, %v872, %v705
    %v883 = vsel %vm459, %v882, %v876
    %v884 = vsel %vm461, %v883, %v880
    %886 = vrot.lane.b32.xlu0 %v859, 32
    %v887 = vpop.permute.xlu0 %886
    %v888 = vsel %vm234, %v887, 0
    %890 = vmatpush.msra.mxu0 0.0
    %891 = vmatpush.msra.mxu0 0.0
    %892 = vmatpush.msra.mxu0 0.0
    %893 = vmatpush.msra.mxu0 0.0
    %894 = vmatpush.msra.mxu0 0.0
    %895 = vmatpush.msra.mxu0 0.0
    %896 = vmatpush.msra.mxu0 0.0
    %897 = vmatpush.msra.mxu0 0.0
    %898 = vmatpush.msra.mxu0 0.0
    %899 = vmatpush.msra.mxu0 0.0
    %900 = vmatpush.msra.mxu0 0.0
    %901 = vmatpush.msra.mxu0 0.0
    %902 = vmatpush.msra.mxu0 %v100
    %903 = vmatpush.msra.mxu0 %v99
    %904 = vmatpush.msra.mxu0 %v98
    %905 = vmatpush.msra.mxu0 %v97
    %906 = vmatmul.f32.gmra.mxu0 %v888
    %v907 = vpop.f32.mrf.mxu0
    %v908 = vadd.f32 %v479, %v907
    %909 = vdwg.mxu0
    %910 = vmax.xlane.f32.xlu0 %v908
    %v911 = vpop.xlane.xlu0 %910
    %v912 = vsub.f32 %v908, %v911
    %v913 = vmul.f32 %v912, 1.442695
    %v914 = vpow.pop %v913
    %915 = vadd.xlane.f32.xlu0 %v914
    %v916 = vpop.xlane.xlu0 %915
    %v917 = vlog2.pop %v916
    %v918 = vmul.f32 %v917, 0.6931472
    %v919 = vsub.f32 %v912, %v918
    %s920 = scalar_lea.vmem [#allocation2], 8
    %921 = vst [vmem:[%s920] sm:$0xff] %v919
    %922 = vmatpush.msra.mxu0 %v93
    %923 = vmatpush.msra.mxu0 %v89
    %924 = vmatpush.msra.mxu0 %v85
    %925 = vmatpush.msra.mxu0 %v81
    %926 = vmatpush.msra.mxu0 %v77
    %927 = vmatpush.msra.mxu0 %v73
    %928 = vmatpush.msra.mxu0 %v69
    %929 = vmatpush.msra.mxu0 %v65
    %930 = vmatpush.msra.mxu0 %v61
    %931 = vmatpush.msra.mxu0 %v57
    %932 = vmatpush.msra.mxu0 %v53
    %933 = vmatpush.msra.mxu0 %v49
    %934 = vmatpush.msra.mxu0 %v45
    %935 = vmatpush.msra.mxu0 %v41
    %936 = vmatpush.msra.mxu0 %v37
    %937 = vmatpush.msra.mxu0 %v33
    %938 = vmatmul.f32.gmra.mxu0 %v869
    %v939 = vpop.f32.mrf.mxu0
    %v940 = vadd.f32 0.0, %v939
    %941 = vdwg.mxu0
    %942 = vmatpush.msra.mxu0 %v94
    %943 = vmatpush.msra.mxu0 %v90
    %944 = vmatpush.msra.mxu0 %v86
    %945 = vmatpush.msra.mxu0 %v82
    %946 = vmatpush.msra.mxu0 %v78
    %947 = vmatpush.msra.mxu0 %v74
    %948 = vmatpush.msra.mxu0 %v70
    %949 = vmatpush.msra.mxu0 %v66
    %950 = vmatpush.msra.mxu0 %v62
    %951 = vmatpush.msra.mxu0 %v58
    %952 = vmatpush.msra.mxu0 %v54
    %953 = vmatpush.msra.mxu0 %v50
    %954 = vmatpush.msra.mxu0 %v46
    %955 = vmatpush.msra.mxu0 %v42
    %956 = vmatpush.msra.mxu0 %v38
    %957 = vmatpush.msra.mxu0 %v34
    %958 = vmatmul.f32.gmra.mxu0 %v869
    %v959 = vpop.f32.mrf.mxu0
    %v960 = vadd.f32 0.0, %v959
    %961 = vdwg.mxu0
    %962 = vmatpush.msra.mxu0 %v95
    %963 = vmatpush.msra.mxu0 %v91
    %964 = vmatpush.msra.mxu0 %v87
    %965 = vmatpush.msra.mxu0 %v83
    %966 = vmatpush.msra.mxu0 %v79
    %967 = vmatpush.msra.mxu0 %v75
    %968 = vmatpush.msra.mxu0 %v71
    %969 = vmatpush.msra.mxu0 %v67
    %970 = vmatpush.msra.mxu0 %v63
    %971 = vmatpush.msra.mxu0 %v59
    %972 = vmatpush.msra.mxu0 %v55
    %973 = vmatpush.msra.mxu0 %v51
    %974 = vmatpush.msra.mxu0 %v47
    %975 = vmatpush.msra.mxu0 %v43
    %976 = vmatpush.msra.mxu0 %v39
    %977 = vmatpush.msra.mxu0 %v35
    %978 = vmatmul.f32.gmra.mxu0 %v869
    %v979 = vpop.f32.mrf.mxu0
    %v980 = vadd.f32 0.0, %v979
    %981 = vdwg.mxu0
    %982 = vmatpush.msra.mxu0 %v96
    %983 = vmatpush.msra.mxu0 %v92
    %984 = vmatpush.msra.mxu0 %v88
    %985 = vmatpush.msra.mxu0 %v84
    %986 = vmatpush.msra.mxu0 %v80
    %987 = vmatpush.msra.mxu0 %v76
    %988 = vmatpush.msra.mxu0 %v72
    %989 = vmatpush.msra.mxu0 %v68
    %990 = vmatpush.msra.mxu0 %v64
    %991 = vmatpush.msra.mxu0 %v60
    %992 = vmatpush.msra.mxu0 %v56
    %993 = vmatpush.msra.mxu0 %v52
    %994 = vmatpush.msra.mxu0 %v48
    %995 = vmatpush.msra.mxu0 %v44
    %996 = vmatpush.msra.mxu0 %v40
    %997 = vmatpush.msra.mxu0 %v36
    %998 = vmatmul.f32.gmra.mxu0 %v869
    %v999 = vpop.f32.mrf.mxu0
    %v1000 = vadd.f32 0.0, %v999
    %1001 = vdwg.mxu0
    %s1002 = scalar_lea.vmem %s0, 16
    %v1003 = vld [vmem:[%s1002] sm:$0xff]
    %v1004 = vadd.f32 %v1003, %v940
    %v1005 = vxor.u32 %v1004, 2147483648
    %v1006 = vmul.f32 %v1005, 1.442695
    %v1007 = vpow.pop %v1006
    %v1008 = vadd.f32 %v1007, 1.0
    %v1009 = vrcp.pop %v1008
    %v1010 = vmul.f32 %v1008, %v1009
    %v1011 = vsub.f32 1.0, %v1010
    %v1012 = vmul.f32 %v1009, %v1011
    %v1013 = vadd.f32 %v1009, %v1012
    %vm1014 = vweird.f32 %v1008
    %vm1015 = vweird.f32 %v1009
    %vm1016 = vmor %vm1014, %vm1015
    %v1017 = vsel %vm1016, %v1009, %v1013
    %v1018 = vand.u32 2147483647, %v1008
    %vm1019 = vcmp.eq.f32.partialorder %v1018, 8.507059e+37
    %v1020 = vand.u32 %v1008, 2147483648
    %v1021 = vor.u32 1.1754944e-38, %v1020
    %v1022 = vsel %vm1019, %v1021, %v1017
    %v1023 = vmul.f32 1.0, %v1022
    %v1024 = vtanh.pop %v1004
    %1026 = vrot.lane.b32.xlu0 %v884, 32
    %v1027 = vpop.permute.xlu0 %1026
    %v1029 = vmul.f32 %v1023, %v1027
    %1031 = vrot.lane.b32.xlu0 %v1024, 64
    %v1032 = vpop.permute.xlu0 %1031
    %v1034 = vmul.f32 %v1023, %v1032
    %1036 = vrot.lane.b32.xlu0 %v1034, 32
    %v1037 = vpop.permute.xlu0 %1036
    %v1039 = vadd.f32 %v1029, %v1037
    %v1040 = vtanh.pop %v1039
    %1042 = vrot.lane.b32.xlu0 %v1040, 64
    %v1043 = vpop.permute.xlu0 %1042
    %v1045 = vmul.f32 %v1023, %v1043
    %v1046 = vld [vmem:[%s2] sm:$0xff]
    %v1047 = vld [vmem:[%s2 + $0x8] sm:$0xff]
    %v1048 = vld [vmem:[%s2 + $0x10] sm:$0xff]
    %v1049 = vld [vmem:[%s2 + $0x18] sm:$0xff]
    %1051 = vrot.lane.b32.xlu0 %v1045, 32
    %v1052 = vpop.permute.xlu0 %1051
    %v1053 = vsel %vm234, %v1052, 0
    %1055 = vmatpush.msra.mxu0 0.0
    %1056 = vmatpush.msra.mxu0 0.0
    %1057 = vmatpush.msra.mxu0 0.0
    %1058 = vmatpush.msra.mxu0 0.0
    %1059 = vmatpush.msra.mxu0 0.0
    %1060 = vmatpush.msra.mxu0 0.0
    %1061 = vmatpush.msra.mxu0 0.0
    %1062 = vmatpush.msra.mxu0 0.0
    %1063 = vmatpush.msra.mxu0 0.0
    %1064 = vmatpush.msra.mxu0 0.0
    %1065 = vmatpush.msra.mxu0 0.0
    %1066 = vmatpush.msra.mxu0 0.0
    %1067 = vmatpush.msra.mxu0 %v1049
    %1068 = vmatpush.msra.mxu0 %v1048
    %1069 = vmatpush.msra.mxu0 %v1047
    %1070 = vmatpush.msra.mxu0 %v1046
    %1071 = vmatmul.f32.gmra.mxu0 %v1053
    %v1072 = vpop.f32.mrf.mxu0
    %v1073 = vadd.f32 %v960, %v1072
    %1074 = vdwg.mxu0
    %v1075 = vld [vmem:[%s3] sm:$0x1]
    %v1077 = vperm.slane %v1075, 0
    %v1079 = vadd.f32 %v1073, %v1077
    %v1080 = vxor.u32 %v1079, 2147483648
    %v1081 = vmul.f32 %v1080, 1.442695
    %v1082 = vpow.pop %v1081
    %v1083 = vadd.f32 %v1082, 1.0
    %v1084 = vrcp.pop %v1083
    %v1085 = vmul.f32 %v1083, %v1084
    %v1086 = vsub.f32 1.0, %v1085
    %v1087 = vmul.f32 %v1084, %v1086
    %v1088 = vadd.f32 %v1084, %v1087
    %vm1089 = vweird.f32 %v1083
    %vm1090 = vweird.f32 %v1084
    %vm1091 = vmor %vm1089, %vm1090
    %v1092 = vsel %vm1091, %v1084, %v1088
    %v1093 = vand.u32 2147483647, %v1083
    %vm1094 = vcmp.eq.f32.partialorder %v1093, 8.507059e+37
    %v1095 = vand.u32 %v1083, 2147483648
    %v1096 = vor.u32 1.1754944e-38, %v1095
    %v1097 = vsel %vm1094, %v1096, %v1092
    %v1098 = vmul.f32 1.0, %v1097
    %v1099 = vtanh.pop %v1079
    %v1100 = vmul.f32 %v1098, %v884
    %1102 = vrot.lane.b32.xlu0 %v1099, 64
    %v1103 = vpop.permute.xlu0 %1102
    %v1105 = vmul.f32 %v1098, %v1103
    %1107 = vrot.lane.b32.xlu0 %v1105, 32
    %v1108 = vpop.permute.xlu0 %1107
    %v1110 = vadd.f32 %v1100, %v1108
    %v1111 = vtanh.pop %v1110
    %1113 = vrot.lane.b32.xlu0 %v1111, 64
    %v1114 = vpop.permute.xlu0 %1113
    %v1116 = vmul.f32 %v1098, %v1114
    %v1117 = vld [vmem:[%s299] sm:$0xff]
    %v1118 = vld [vmem:[%s299 + $0x8] sm:$0xff]
    %v1119 = vld [vmem:[%s299 + $0x10] sm:$0xff]
    %v1120 = vld [vmem:[%s299 + $0x18] sm:$0xff]
    %1122 = vrot.lane.b32.xlu0 %v1116, 32
    %v1123 = vpop.permute.xlu0 %1122
    %v1124 = vsel %vm234, %v1123, 0
    %1126 = vmatpush.msra.mxu0 0.0
    %1127 = vmatpush.msra.mxu0 0.0
    %1128 = vmatpush.msra.mxu0 0.0
    %1129 = vmatpush.msra.mxu0 0.0
    %1130 = vmatpush.msra.mxu0 0.0
    %1131 = vmatpush.msra.mxu0 0.0
    %1132 = vmatpush.msra.mxu0 0.0
    %1133 = vmatpush.msra.mxu0 0.0
    %1134 = vmatpush.msra.mxu0 0.0
    %1135 = vmatpush.msra.mxu0 0.0
    %1136 = vmatpush.msra.mxu0 0.0
    %1137 = vmatpush.msra.mxu0 0.0
    %1138 = vmatpush.msra.mxu0 %v1120
    %1139 = vmatpush.msra.mxu0 %v1119
    %1140 = vmatpush.msra.mxu0 %v1118
    %1141 = vmatpush.msra.mxu0 %v1117
    %1142 = vmatmul.f32.gmra.mxu0 %v1124
    %v1143 = vpop.f32.mrf.mxu0
    %v1144 = vadd.f32 %v980, %v1143
    %1145 = vdwg.mxu0
    %v1146 = vld [vmem:[%s329] sm:$0x1]
    %v1148 = vperm.slane %v1146, 0
    %v1150 = vadd.f32 %v1144, %v1148
    %v1151 = vxor.u32 %v1150, 2147483648
    %v1152 = vmul.f32 %v1151, 1.442695
    %v1153 = vpow.pop %v1152
    %v1154 = vadd.f32 %v1153, 1.0
    %v1155 = vrcp.pop %v1154
    %v1156 = vmul.f32 %v1154, %v1155
    %v1157 = vsub.f32 1.0, %v1156
    %v1158 = vmul.f32 %v1155, %v1157
    %v1159 = vadd.f32 %v1155, %v1158
    %vm1160 = vweird.f32 %v1154
    %vm1161 = vweird.f32 %v1155
    %vm1162 = vmor %vm1160, %vm1161
    %v1163 = vsel %vm1162, %v1155, %v1159
    %v1164 = vand.u32 2147483647, %v1154
    %vm1165 = vcmp.eq.f32.partialorder %v1164, 8.507059e+37
    %v1166 = vand.u32 %v1154, 2147483648
    %v1167 = vor.u32 1.1754944e-38, %v1166
    %v1168 = vsel %vm1165, %v1167, %v1163
    %v1169 = vmul.f32 1.0, %v1168
    %v1170 = vtanh.pop %v1150
    %1171 = vrot.lane.b32.xlu0 %v884, 96
    %v1172 = vpop.permute.xlu0 %1171
    %v1174 = vmul.f32 %v1169, %v1172
    %1176 = vrot.lane.b32.xlu0 %v1170, 64
    %v1177 = vpop.permute.xlu0 %1176
    %v1179 = vmul.f32 %v1169, %v1177
    %1181 = vrot.lane.b32.xlu0 %v1179, 32
    %v1182 = vpop.permute.xlu0 %1181
    %v1184 = vadd.f32 %v1174, %v1182
    %v1185 = vtanh.pop %v1184
    %1187 = vrot.lane.b32.xlu0 %v1185, 64
    %v1188 = vpop.permute.xlu0 %1187
    %v1190 = vmul.f32 %v1169, %v1188
    %v1191 = vld [vmem:[%s375] sm:$0xff]
    %v1192 = vld [vmem:[%s375 + $0x8] sm:$0xff]
    %v1193 = vld [vmem:[%s375 + $0x10] sm:$0xff]
    %v1194 = vld [vmem:[%s375 + $0x18] sm:$0xff]
    %1196 = vrot.lane.b32.xlu0 %v1190, 32
    %v1197 = vpop.permute.xlu0 %1196
    %v1198 = vsel %vm234, %v1197, 0
    %1200 = vmatpush.msra.mxu0 0.0
    %1201 = vmatpush.msra.mxu0 0.0
    %1202 = vmatpush.msra.mxu0 0.0
    %1203 = vmatpush.msra.mxu0 0.0
    %1204 = vmatpush.msra.mxu0 0.0
    %1205 = vmatpush.msra.mxu0 0.0
    %1206 = vmatpush.msra.mxu0 0.0
    %1207 = vmatpush.msra.mxu0 0.0
    %1208 = vmatpush.msra.mxu0 0.0
    %1209 = vmatpush.msra.mxu0 0.0
    %1210 = vmatpush.msra.mxu0 0.0
    %1211 = vmatpush.msra.mxu0 0.0
    %1212 = vmatpush.msra.mxu0 %v1194
    %1213 = vmatpush.msra.mxu0 %v1193
    %1214 = vmatpush.msra.mxu0 %v1192
    %1215 = vmatpush.msra.mxu0 %v1191
    %1216 = vmatmul.f32.gmra.mxu0 %v1198
    %v1217 = vpop.f32.mrf.mxu0
    %v1218 = vadd.f32 %v1000, %v1217
    %1219 = vdwg.mxu0
    %v1220 = vld [vmem:[%s405] sm:$0x1]
    %v1222 = vperm.slane %v1220, 0
    %v1224 = vadd.f32 %v1218, %v1222
    %v1225 = vxor.u32 %v1224, 2147483648
    %v1226 = vmul.f32 %v1225, 1.442695
    %v1227 = vpow.pop %v1226
    %v1228 = vadd.f32 %v1227, 1.0
    %v1229 = vrcp.pop %v1228
    %v1230 = vmul.f32 %v1228, %v1229
    %v1231 = vsub.f32 1.0, %v1230
    %v1232 = vmul.f32 %v1229, %v1231
    %v1233 = vadd.f32 %v1229, %v1232
    %vm1234 = vweird.f32 %v1228
    %vm1235 = vweird.f32 %v1229
    %vm1236 = vmor %vm1234, %vm1235
    %v1237 = vsel %vm1236, %v1229, %v1233
    %v1238 = vand.u32 2147483647, %v1228
    %vm1239 = vcmp.eq.f32.partialorder %v1238, 8.507059e+37
    %v1240 = vand.u32 %v1228, 2147483648
    %v1241 = vor.u32 1.1754944e-38, %v1240
    %v1242 = vsel %vm1239, %v1241, %v1237
    %v1243 = vmul.f32 1.0, %v1242
    %v1244 = vtanh.pop %v1224
    %1245 = vrot.lane.b32.xlu0 %v884, 64
    %v1246 = vpop.permute.xlu0 %1245
    %v1248 = vmul.f32 %v1243, %v1246
    %1250 = vrot.lane.b32.xlu0 %v1244, 64
    %v1251 = vpop.permute.xlu0 %1250
    %v1253 = vmul.f32 %v1243, %v1251
    %1255 = vrot.lane.b32.xlu0 %v1253, 32
    %v1256 = vpop.permute.xlu0 %1255
    %v1258 = vadd.f32 %v1248, %v1256
    %v1259 = vtanh.pop %v1258
    %1261 = vrot.lane.b32.xlu0 %v1259, 64
    %v1262 = vpop.permute.xlu0 %1261
    %v1264 = vmul.f32 %v1243, %v1262
    %1266 = vrot.lane.b32.xlu0 %v1116, 64
    %v1267 = vpop.permute.xlu0 %1266
    %1269 = vrot.lane.b32.xlu0 %v1190, 96
    %v1270 = vpop.permute.xlu0 %1269
    %v1272 = vsel %vm234, %v1052, %v1267
    %v1273 = vsel %vm459, %v1272, %v1270
    %v1274 = vsel %vm461, %v1273, %v1264
    %1276 = vrot.lane.b32.xlu0 %v1039, 96
    %v1277 = vpop.permute.xlu0 %1276
    %1280 = vrot.lane.b32.xlu0 %v1184, 32
    %v1281 = vpop.permute.xlu0 %1280
    %1284 = vrot.lane.b32.xlu0 %v1258, 64
    %v1285 = vpop.permute.xlu0 %1284
    %v1287 = vsel %vm234, %v1277, %v1110
    %v1288 = vsel %vm459, %v1287, %v1281
    %v1289 = vsel %vm461, %v1288, %v1285
    %1291 = vrot.lane.b32.xlu0 %v1264, 32
    %v1292 = vpop.permute.xlu0 %1291
    %v1293 = vsel %vm234, %v1292, 0
    %1295 = vmatpush.msra.mxu0 0.0
    %1296 = vmatpush.msra.mxu0 0.0
    %1297 = vmatpush.msra.mxu0 0.0
    %1298 = vmatpush.msra.mxu0 0.0
    %1299 = vmatpush.msra.mxu0 0.0
    %1300 = vmatpush.msra.mxu0 0.0
    %1301 = vmatpush.msra.mxu0 0.0
    %1302 = vmatpush.msra.mxu0 0.0
    %1303 = vmatpush.msra.mxu0 0.0
    %1304 = vmatpush.msra.mxu0 0.0
    %1305 = vmatpush.msra.mxu0 0.0
    %1306 = vmatpush.msra.mxu0 0.0
    %1307 = vmatpush.msra.mxu0 %v100
    %1308 = vmatpush.msra.mxu0 %v99
    %1309 = vmatpush.msra.mxu0 %v98
    %1310 = vmatpush.msra.mxu0 %v97
    %1311 = vmatmul.f32.gmra.mxu0 %v1293
    %v1312 = vpop.f32.mrf.mxu0
    %v1313 = vadd.f32 %v479, %v1312
    %1314 = vdwg.mxu0
    %1315 = vmax.xlane.f32.xlu0 %v1313
    %v1316 = vpop.xlane.xlu0 %1315
    %v1317 = vsub.f32 %v1313, %v1316
    %v1318 = vmul.f32 %v1317, 1.442695
    %v1319 = vpow.pop %v1318
    %1320 = vadd.xlane.f32.xlu0 %v1319
    %v1321 = vpop.xlane.xlu0 %1320
    %v1322 = vlog2.pop %v1321
    %v1323 = vmul.f32 %v1322, 0.6931472
    %v1324 = vsub.f32 %v1317, %v1323
    %s1325 = scalar_lea.vmem [#allocation2], 16
    %1326 = vst [vmem:[%s1325] sm:$0xff] %v1324
    %1327 = vmatpush.msra.mxu0 %v93
    %1328 = vmatpush.msra.mxu0 %v89
    %1329 = vmatpush.msra.mxu0 %v85
    %1330 = vmatpush.msra.mxu0 %v81
    %1331 = vmatpush.msra.mxu0 %v77
    %1332 = vmatpush.msra.mxu0 %v73
    %1333 = vmatpush.msra.mxu0 %v69
    %1334 = vmatpush.msra.mxu0 %v65
    %1335 = vmatpush.msra.mxu0 %v61
    %1336 = vmatpush.msra.mxu0 %v57
    %1337 = vmatpush.msra.mxu0 %v53
    %1338 = vmatpush.msra.mxu0 %v49
    %1339 = vmatpush.msra.mxu0 %v45
    %1340 = vmatpush.msra.mxu0 %v41
    %1341 = vmatpush.msra.mxu0 %v37
    %1342 = vmatpush.msra.mxu0 %v33
    %1343 = vmatmul.f32.gmra.mxu0 %v1274
    %v1344 = vpop.f32.mrf.mxu0
    %v1345 = vadd.f32 0.0, %v1344
    %1346 = vdwg.mxu0
    %1347 = vmatpush.msra.mxu0 %v94
    %1348 = vmatpush.msra.mxu0 %v90
    %1349 = vmatpush.msra.mxu0 %v86
    %1350 = vmatpush.msra.mxu0 %v82
    %1351 = vmatpush.msra.mxu0 %v78
    %1352 = vmatpush.msra.mxu0 %v74
    %1353 = vmatpush.msra.mxu0 %v70
    %1354 = vmatpush.msra.mxu0 %v66
    %1355 = vmatpush.msra.mxu0 %v62
    %1356 = vmatpush.msra.mxu0 %v58
    %1357 = vmatpush.msra.mxu0 %v54
    %1358 = vmatpush.msra.mxu0 %v50
    %1359 = vmatpush.msra.mxu0 %v46
    %1360 = vmatpush.msra.mxu0 %v42
    %1361 = vmatpush.msra.mxu0 %v38
    %1362 = vmatpush.msra.mxu0 %v34
    %1363 = vmatmul.f32.gmra.mxu0 %v1274
    %v1364 = vpop.f32.mrf.mxu0
    %v1365 = vadd.f32 0.0, %v1364
    %1366 = vdwg.mxu0
    %1367 = vmatpush.msra.mxu0 %v95
    %1368 = vmatpush.msra.mxu0 %v91
    %1369 = vmatpush.msra.mxu0 %v87
    %1370 = vmatpush.msra.mxu0 %v83
    %1371 = vmatpush.msra.mxu0 %v79
    %1372 = vmatpush.msra.mxu0 %v75
    %1373 = vmatpush.msra.mxu0 %v71
    %1374 = vmatpush.msra.mxu0 %v67
    %1375 = vmatpush.msra.mxu0 %v63
    %1376 = vmatpush.msra.mxu0 %v59
    %1377 = vmatpush.msra.mxu0 %v55
    %1378 = vmatpush.msra.mxu0 %v51
    %1379 = vmatpush.msra.mxu0 %v47
    %1380 = vmatpush.msra.mxu0 %v43
    %1381 = vmatpush.msra.mxu0 %v39
    %1382 = vmatpush.msra.mxu0 %v35
    %1383 = vmatmul.f32.gmra.mxu0 %v1274
    %v1384 = vpop.f32.mrf.mxu0
    %v1385 = vadd.f32 0.0, %v1384
    %1386 = vdwg.mxu0
    %1387 = vmatpush.msra.mxu0 %v96
    %1388 = vmatpush.msra.mxu0 %v92
    %1389 = vmatpush.msra.mxu0 %v88
    %1390 = vmatpush.msra.mxu0 %v84
    %1391 = vmatpush.msra.mxu0 %v80
    %1392 = vmatpush.msra.mxu0 %v76
    %1393 = vmatpush.msra.mxu0 %v72
    %1394 = vmatpush.msra.mxu0 %v68
    %1395 = vmatpush.msra.mxu0 %v64
    %1396 = vmatpush.msra.mxu0 %v60
    %1397 = vmatpush.msra.mxu0 %v56
    %1398 = vmatpush.msra.mxu0 %v52
    %1399 = vmatpush.msra.mxu0 %v48
    %1400 = vmatpush.msra.mxu0 %v44
    %1401 = vmatpush.msra.mxu0 %v40
    %1402 = vmatpush.msra.mxu0 %v36
    %1403 = vmatmul.f32.gmra.mxu0 %v1274
    %v1404 = vpop.f32.mrf.mxu0
    %v1405 = vadd.f32 0.0, %v1404
    %1406 = vdwg.mxu0
    %s1407 = scalar_lea.vmem %s0, 24
    %v1408 = vld [vmem:[%s1407] sm:$0xff]
    %v1409 = vadd.f32 %v1408, %v1345
    %v1410 = vxor.u32 %v1409, 2147483648
    %v1411 = vmul.f32 %v1410, 1.442695
    %v1412 = vpow.pop %v1411
    %v1413 = vadd.f32 %v1412, 1.0
    %v1414 = vrcp.pop %v1413
    %v1415 = vmul.f32 %v1413, %v1414
    %v1416 = vsub.f32 1.0, %v1415
    %v1417 = vmul.f32 %v1414, %v1416
    %v1418 = vadd.f32 %v1414, %v1417
    %vm1419 = vweird.f32 %v1413
    %vm1420 = vweird.f32 %v1414
    %vm1421 = vmor %vm1419, %vm1420
    %v1422 = vsel %vm1421, %v1414, %v1418
    %v1423 = vand.u32 2147483647, %v1413
    %vm1424 = vcmp.eq.f32.partialorder %v1423, 8.507059e+37
    %v1425 = vand.u32 %v1413, 2147483648
    %v1426 = vor.u32 1.1754944e-38, %v1425
    %v1427 = vsel %vm1424, %v1426, %v1422
    %v1428 = vmul.f32 1.0, %v1427
    %v1429 = vtanh.pop %v1409
    %1431 = vrot.lane.b32.xlu0 %v1289, 32
    %v1432 = vpop.permute.xlu0 %1431
    %v1434 = vmul.f32 %v1428, %v1432
    %1436 = vrot.lane.b32.xlu0 %v1429, 64
    %v1437 = vpop.permute.xlu0 %1436
    %v1439 = vmul.f32 %v1428, %v1437
    %1441 = vrot.lane.b32.xlu0 %v1439, 32
    %v1442 = vpop.permute.xlu0 %1441
    %v1444 = vadd.f32 %v1434, %v1442
    %v1445 = vtanh.pop %v1444
    %1447 = vrot.lane.b32.xlu0 %v1445, 64
    %v1448 = vpop.permute.xlu0 %1447
    %v1450 = vmul.f32 %v1428, %v1448
    %v1451 = vld [vmem:[%s2] sm:$0xff]
    %v1452 = vld [vmem:[%s2 + $0x8] sm:$0xff]
    %v1453 = vld [vmem:[%s2 + $0x10] sm:$0xff]
    %v1454 = vld [vmem:[%s2 + $0x18] sm:$0xff]
    %1456 = vrot.lane.b32.xlu0 %v1450, 32
    %v1457 = vpop.permute.xlu0 %1456
    %v1458 = vsel %vm234, %v1457, 0
    %1460 = vmatpush.msra.mxu0 0.0
    %1461 = vmatpush.msra.mxu0 0.0
    %1462 = vmatpush.msra.mxu0 0.0
    %1463 = vmatpush.msra.mxu0 0.0
    %1464 = vmatpush.msra.mxu0 0.0
    %1465 = vmatpush.msra.mxu0 0.0
    %1466 = vmatpush.msra.mxu0 0.0
    %1467 = vmatpush.msra.mxu0 0.0
    %1468 = vmatpush.msra.mxu0 0.0
    %1469 = vmatpush.msra.mxu0 0.0
    %1470 = vmatpush.msra.mxu0 0.0
    %1471 = vmatpush.msra.mxu0 0.0
    %1472 = vmatpush.msra.mxu0 %v1454
    %1473 = vmatpush.msra.mxu0 %v1453
    %1474 = vmatpush.msra.mxu0 %v1452
    %1475 = vmatpush.msra.mxu0 %v1451
    %1476 = vmatmul.f32.gmra.mxu0 %v1458
    %v1477 = vpop.f32.mrf.mxu0
    %v1478 = vadd.f32 %v1365, %v1477
    %1479 = vdwg.mxu0
    %v1480 = vld [vmem:[%s3] sm:$0x1]
    %v1482 = vperm.slane %v1480, 0
    %v1484 = vadd.f32 %v1478, %v1482
    %v1485 = vxor.u32 %v1484, 2147483648
    %v1486 = vmul.f32 %v1485, 1.442695
    %v1487 = vpow.pop %v1486
    %v1488 = vadd.f32 %v1487, 1.0
    %v1489 = vrcp.pop %v1488
    %v1490 = vmul.f32 %v1488, %v1489
    %v1491 = vsub.f32 1.0, %v1490
    %v1492 = vmul.f32 %v1489, %v1491
    %v1493 = vadd.f32 %v1489, %v1492
    %vm1494 = vweird.f32 %v1488
    %vm1495 = vweird.f32 %v1489
    %vm1496 = vmor %vm1494, %vm1495
    %v1497 = vsel %vm1496, %v1489, %v1493
    %v1498 = vand.u32 2147483647, %v1488
    %vm1499 = vcmp.eq.f32.partialorder %v1498, 8.507059e+37
    %v1500 = vand.u32 %v1488, 2147483648
    %v1501 = vor.u32 1.1754944e-38, %v1500
    %v1502 = vsel %vm1499, %v1501, %v1497
    %v1503 = vmul.f32 1.0, %v1502
    %v1504 = vtanh.pop %v1484
    %v1505 = vmul.f32 %v1503, %v1289
    %1507 = vrot.lane.b32.xlu0 %v1504, 64
    %v1508 = vpop.permute.xlu0 %1507
    %v1510 = vmul.f32 %v1503, %v1508
    %1512 = vrot.lane.b32.xlu0 %v1510, 32
    %v1513 = vpop.permute.xlu0 %1512
    %v1515 = vadd.f32 %v1505, %v1513
    %v1516 = vtanh.pop %v1515
    %1518 = vrot.lane.b32.xlu0 %v1516, 64
    %v1519 = vpop.permute.xlu0 %1518
    %v1521 = vmul.f32 %v1503, %v1519
    %v1522 = vld [vmem:[%s299] sm:$0xff]
    %v1523 = vld [vmem:[%s299 + $0x8] sm:$0xff]
    %v1524 = vld [vmem:[%s299 + $0x10] sm:$0xff]
    %v1525 = vld [vmem:[%s299 + $0x18] sm:$0xff]
    %1527 = vrot.lane.b32.xlu0 %v1521, 32
    %v1528 = vpop.permute.xlu0 %1527
    %v1529 = vsel %vm234, %v1528, 0
    %1531 = vmatpush.msra.mxu0 0.0
    %1532 = vmatpush.msra.mxu0 0.0
    %1533 = vmatpush.msra.mxu0 0.0
    %1534 = vmatpush.msra.mxu0 0.0
    %1535 = vmatpush.msra.mxu0 0.0
    %1536 = vmatpush.msra.mxu0 0.0
    %1537 = vmatpush.msra.mxu0 0.0
    %1538 = vmatpush.msra.mxu0 0.0
    %1539 = vmatpush.msra.mxu0 0.0
    %1540 = vmatpush.msra.mxu0 0.0
    %1541 = vmatpush.msra.mxu0 0.0
    %1542 = vmatpush.msra.mxu0 0.0
    %1543 = vmatpush.msra.mxu0 %v1525
    %1544 = vmatpush.msra.mxu0 %v1524
    %1545 = vmatpush.msra.mxu0 %v1523
    %1546 = vmatpush.msra.mxu0 %v1522
    %1547 = vmatmul.f32.gmra.mxu0 %v1529
    %v1548 = vpop.f32.mrf.mxu0
    %v1549 = vadd.f32 %v1385, %v1548
    %1550 = vdwg.mxu0
    %v1551 = vld [vmem:[%s329] sm:$0x1]
    %v1553 = vperm.slane %v1551, 0
    %v1555 = vadd.f32 %v1549, %v1553
    %v1556 = vxor.u32 %v1555, 2147483648
    %v1557 = vmul.f32 %v1556, 1.442695
    %v1558 = vpow.pop %v1557
    %v1559 = vadd.f32 %v1558, 1.0
    %v1560 = vrcp.pop %v1559
    %v1561 = vmul.f32 %v1559, %v1560
    %v1562 = vsub.f32 1.0, %v1561
    %v1563 = vmul.f32 %v1560, %v1562
    %v1564 = vadd.f32 %v1560, %v1563
    %vm1565 = vweird.f32 %v1559
    %vm1566 = vweird.f32 %v1560
    %vm1567 = vmor %vm1565, %vm1566
    %v1568 = vsel %vm1567, %v1560, %v1564
    %v1569 = vand.u32 2147483647, %v1559
    %vm1570 = vcmp.eq.f32.partialorder %v1569, 8.507059e+37
    %v1571 = vand.u32 %v1559, 2147483648
    %v1572 = vor.u32 1.1754944e-38, %v1571
    %v1573 = vsel %vm1570, %v1572, %v1568
    %v1574 = vmul.f32 1.0, %v1573
    %v1575 = vtanh.pop %v1555
    %1576 = vrot.lane.b32.xlu0 %v1289, 96
    %v1577 = vpop.permute.xlu0 %1576
    %v1579 = vmul.f32 %v1574, %v1577
    %1581 = vrot.lane.b32.xlu0 %v1575, 64
    %v1582 = vpop.permute.xlu0 %1581
    %v1584 = vmul.f32 %v1574, %v1582
    %1586 = vrot.lane.b32.xlu0 %v1584, 32
    %v1587 = vpop.permute.xlu0 %1586
    %v1589 = vadd.f32 %v1579, %v1587
    %v1590 = vtanh.pop %v1589
    %1592 = vrot.lane.b32.xlu0 %v1590, 64
    %v1593 = vpop.permute.xlu0 %1592
    %v1595 = vmul.f32 %v1574, %v1593
    %v1596 = vld [vmem:[%s375] sm:$0xff]
    %v1597 = vld [vmem:[%s375 + $0x8] sm:$0xff]
    %v1598 = vld [vmem:[%s375 + $0x10] sm:$0xff]
    %v1599 = vld [vmem:[%s375 + $0x18] sm:$0xff]
    %1601 = vrot.lane.b32.xlu0 %v1595, 32
    %v1602 = vpop.permute.xlu0 %1601
    %v1603 = vsel %vm234, %v1602, 0
    %1605 = vmatpush.msra.mxu0 0.0
    %1606 = vmatpush.msra.mxu0 0.0
    %1607 = vmatpush.msra.mxu0 0.0
    %1608 = vmatpush.msra.mxu0 0.0
    %1609 = vmatpush.msra.mxu0 0.0
    %1610 = vmatpush.msra.mxu0 0.0
    %1611 = vmatpush.msra.mxu0 0.0
    %1612 = vmatpush.msra.mxu0 0.0
    %1613 = vmatpush.msra.mxu0 0.0
    %1614 = vmatpush.msra.mxu0 0.0
    %1615 = vmatpush.msra.mxu0 0.0
    %1616 = vmatpush.msra.mxu0 0.0
    %1617 = vmatpush.msra.mxu0 %v1599
    %1618 = vmatpush.msra.mxu0 %v1598
    %1619 = vmatpush.msra.mxu0 %v1597
    %1620 = vmatpush.msra.mxu0 %v1596
    %1621 = vmatmul.f32.gmra.mxu0 %v1603
    %v1622 = vpop.f32.mrf.mxu0
    %v1623 = vadd.f32 %v1405, %v1622
    %1624 = vdwg.mxu0
    %v1625 = vld [vmem:[%s405] sm:$0x1]
    %v1627 = vperm.slane %v1625, 0
    %v1629 = vadd.f32 %v1623, %v1627
    %v1630 = vxor.u32 %v1629, 2147483648
    %v1631 = vmul.f32 %v1630, 1.442695
    %v1632 = vpow.pop %v1631
    %v1633 = vadd.f32 %v1632, 1.0
    %v1634 = vrcp.pop %v1633
    %v1635 = vmul.f32 %v1633, %v1634
    %v1636 = vsub.f32 1.0, %v1635
    %v1637 = vmul.f32 %v1634, %v1636
    %v1638 = vadd.f32 %v1634, %v1637
    %vm1639 = vweird.f32 %v1633
    %vm1640 = vweird.f32 %v1634
    %vm1641 = vmor %vm1639, %vm1640
    %v1642 = vsel %vm1641, %v1634, %v1638
    %v1643 = vand.u32 2147483647, %v1633
    %vm1644 = vcmp.eq.f32.partialorder %v1643, 8.507059e+37
    %v1645 = vand.u32 %v1633, 2147483648
    %v1646 = vor.u32 1.1754944e-38, %v1645
    %v1647 = vsel %vm1644, %v1646, %v1642
    %v1648 = vmul.f32 1.0, %v1647
    %v1649 = vtanh.pop %v1629
    %1650 = vrot.lane.b32.xlu0 %v1289, 64
    %v1651 = vpop.permute.xlu0 %1650
    %v1653 = vmul.f32 %v1648, %v1651
    %1655 = vrot.lane.b32.xlu0 %v1649, 64
    %v1656 = vpop.permute.xlu0 %1655
    %v1658 = vmul.f32 %v1648, %v1656
    %1660 = vrot.lane.b32.xlu0 %v1658, 32
    %v1661 = vpop.permute.xlu0 %1660
    %v1663 = vadd.f32 %v1653, %v1661
    %v1664 = vtanh.pop %v1663
    %1666 = vrot.lane.b32.xlu0 %v1664, 64
    %v1667 = vpop.permute.xlu0 %1666
    %v1669 = vmul.f32 %v1648, %v1667
    %1671 = vrot.lane.b32.xlu0 %v1521, 64
    %v1672 = vpop.permute.xlu0 %1671
    %1674 = vrot.lane.b32.xlu0 %v1595, 96
    %v1675 = vpop.permute.xlu0 %1674
    %v1677 = vsel %vm234, %v1457, %v1672
    %v1678 = vsel %vm459, %v1677, %v1675
    %v1679 = vsel %vm461, %v1678, %v1669
    %1681 = vrot.lane.b32.xlu0 %v1444, 96
    %v1682 = vpop.permute.xlu0 %1681
    %1685 = vrot.lane.b32.xlu0 %v1589, 32
    %v1686 = vpop.permute.xlu0 %1685
    %1689 = vrot.lane.b32.xlu0 %v1663, 64
    %v1690 = vpop.permute.xlu0 %1689
    %v1692 = vsel %vm234, %v1682, %v1515
    %v1693 = vsel %vm459, %v1692, %v1686
    %v1694 = vsel %vm461, %v1693, %v1690
    %1696 = vrot.lane.b32.xlu0 %v1669, 32
    %v1697 = vpop.permute.xlu0 %1696
    %v1698 = vsel %vm234, %v1697, 0
    %1700 = vmatpush.msra.mxu0 0.0
    %1701 = vmatpush.msra.mxu0 0.0
    %1702 = vmatpush.msra.mxu0 0.0
    %1703 = vmatpush.msra.mxu0 0.0
    %1704 = vmatpush.msra.mxu0 0.0
    %1705 = vmatpush.msra.mxu0 0.0
    %1706 = vmatpush.msra.mxu0 0.0
    %1707 = vmatpush.msra.mxu0 0.0
    %1708 = vmatpush.msra.mxu0 0.0
    %1709 = vmatpush.msra.mxu0 0.0
    %1710 = vmatpush.msra.mxu0 0.0
    %1711 = vmatpush.msra.mxu0 0.0
    %1712 = vmatpush.msra.mxu0 %v100
    %1713 = vmatpush.msra.mxu0 %v99
    %1714 = vmatpush.msra.mxu0 %v98
    %1715 = vmatpush.msra.mxu0 %v97
    %1716 = vmatmul.f32.gmra.mxu0 %v1698
    %v1717 = vpop.f32.mrf.mxu0
    %v1718 = vadd.f32 %v479, %v1717
    %1719 = vdwg.mxu0
    %1720 = vmax.xlane.f32.xlu0 %v1718
    %v1721 = vpop.xlane.xlu0 %1720
    %v1722 = vsub.f32 %v1718, %v1721
    %v1723 = vmul.f32 %v1722, 1.442695
    %v1724 = vpow.pop %v1723
    %1725 = vadd.xlane.f32.xlu0 %v1724
    %v1726 = vpop.xlane.xlu0 %1725
    %v1727 = vlog2.pop %v1726
    %v1728 = vmul.f32 %v1727, 0.6931472
    %v1729 = vsub.f32 %v1722, %v1728
    %s1730 = scalar_lea.vmem [#allocation2], 24
    %1731 = vst [vmem:[%s1730] sm:$0xff] %v1729
    %1732 = vmatpush.msra.mxu0 %v93
    %1733 = vmatpush.msra.mxu0 %v89
    %1734 = vmatpush.msra.mxu0 %v85
    %1735 = vmatpush.msra.mxu0 %v81
    %1736 = vmatpush.msra.mxu0 %v77
    %1737 = vmatpush.msra.mxu0 %v73
    %1738 = vmatpush.msra.mxu0 %v69
    %1739 = vmatpush.msra.mxu0 %v65
    %1740 = vmatpush.msra.mxu0 %v61
    %1741 = vmatpush.msra.mxu0 %v57
    %1742 = vmatpush.msra.mxu0 %v53
    %1743 = vmatpush.msra.mxu0 %v49
    %1744 = vmatpush.msra.mxu0 %v45
    %1745 = vmatpush.msra.mxu0 %v41
    %1746 = vmatpush.msra.mxu0 %v37
    %1747 = vmatpush.msra.mxu0 %v33
    %1748 = vmatmul.f32.gmra.mxu0 %v1679
    %v1749 = vpop.f32.mrf.mxu0
    %v1750 = vadd.f32 0.0, %v1749
    %1751 = vdwg.mxu0
    %1752 = vmatpush.msra.mxu0 %v94
    %1753 = vmatpush.msra.mxu0 %v90
    %1754 = vmatpush.msra.mxu0 %v86
    %1755 = vmatpush.msra.mxu0 %v82
    %1756 = vmatpush.msra.mxu0 %v78
    %1757 = vmatpush.msra.mxu0 %v74
    %1758 = vmatpush.msra.mxu0 %v70
    %1759 = vmatpush.msra.mxu0 %v66
    %1760 = vmatpush.msra.mxu0 %v62
    %1761 = vmatpush.msra.mxu0 %v58
    %1762 = vmatpush.msra.mxu0 %v54
    %1763 = vmatpush.msra.mxu0 %v50
    %1764 = vmatpush.msra.mxu0 %v46
    %1765 = vmatpush.msra.mxu0 %v42
    %1766 = vmatpush.msra.mxu0 %v38
    %1767 = vmatpush.msra.mxu0 %v34
    %1768 = vmatmul.f32.gmra.mxu0 %v1679
    %v1769 = vpop.f32.mrf.mxu0
    %v1770 = vadd.f32 0.0, %v1769
    %1771 = vdwg.mxu0
    %1772 = vmatpush.msra.mxu0 %v95
    %1773 = vmatpush.msra.mxu0 %v91
    %1774 = vmatpush.msra.mxu0 %v87
    %1775 = vmatpush.msra.mxu0 %v83
    %1776 = vmatpush.msra.mxu0 %v79
    %1777 = vmatpush.msra.mxu0 %v75
    %1778 = vmatpush.msra.mxu0 %v71
    %1779 = vmatpush.msra.mxu0 %v67
    %1780 = vmatpush.msra.mxu0 %v63
    %1781 = vmatpush.msra.mxu0 %v59
    %1782 = vmatpush.msra.mxu0 %v55
    %1783 = vmatpush.msra.mxu0 %v51
    %1784 = vmatpush.msra.mxu0 %v47
    %1785 = vmatpush.msra.mxu0 %v43
    %1786 = vmatpush.msra.mxu0 %v39
    %1787 = vmatpush.msra.mxu0 %v35
    %1788 = vmatmul.f32.gmra.mxu0 %v1679
    %v1789 = vpop.f32.mrf.mxu0
    %v1790 = vadd.f32 0.0, %v1789
    %1791 = vdwg.mxu0
    %1792 = vmatpush.msra.mxu0 %v96
    %1793 = vmatpush.msra.mxu0 %v92
    %1794 = vmatpush.msra.mxu0 %v88
    %1795 = vmatpush.msra.mxu0 %v84
    %1796 = vmatpush.msra.mxu0 %v80
    %1797 = vmatpush.msra.mxu0 %v76
    %1798 = vmatpush.msra.mxu0 %v72
    %1799 = vmatpush.msra.mxu0 %v68
    %1800 = vmatpush.msra.mxu0 %v64
    %1801 = vmatpush.msra.mxu0 %v60
    %1802 = vmatpush.msra.mxu0 %v56
    %1803 = vmatpush.msra.mxu0 %v52
    %1804 = vmatpush.msra.mxu0 %v48
    %1805 = vmatpush.msra.mxu0 %v44
    %1806 = vmatpush.msra.mxu0 %v40
    %1807 = vmatpush.msra.mxu0 %v36
    %1808 = vmatmul.f32.gmra.mxu0 %v1679
    %v1809 = vpop.f32.mrf.mxu0
    %v1810 = vadd.f32 0.0, %v1809
    %1811 = vdwg.mxu0
    %s1812 = scalar_lea.vmem %s0, 32
    %v1813 = vld [vmem:[%s1812] sm:$0xff]
    %v1814 = vadd.f32 %v1813, %v1750
    %v1815 = vxor.u32 %v1814, 2147483648
    %v1816 = vmul.f32 %v1815, 1.442695
    %v1817 = vpow.pop %v1816
    %v1818 = vadd.f32 %v1817, 1.0
    %v1819 = vrcp.pop %v1818
    %v1820 = vmul.f32 %v1818, %v1819
    %v1821 = vsub.f32 1.0, %v1820
    %v1822 = vmul.f32 %v1819, %v1821
    %v1823 = vadd.f32 %v1819, %v1822
    %vm1824 = vweird.f32 %v1818
    %vm1825 = vweird.f32 %v1819
    %vm1826 = vmor %vm1824, %vm1825
    %v1827 = vsel %vm1826, %v1819, %v1823
    %v1828 = vand.u32 2147483647, %v1818
    %vm1829 = vcmp.eq.f32.partialorder %v1828, 8.507059e+37
    %v1830 = vand.u32 %v1818, 2147483648
    %v1831 = vor.u32 1.1754944e-38, %v1830
    %v1832 = vsel %vm1829, %v1831, %v1827
    %v1833 = vmul.f32 1.0, %v1832
    %v1834 = vtanh.pop %v1814
    %1836 = vrot.lane.b32.xlu0 %v1694, 32
    %v1837 = vpop.permute.xlu0 %1836
    %v1839 = vmul.f32 %v1833, %v1837
    %1841 = vrot.lane.b32.xlu0 %v1834, 64
    %v1842 = vpop.permute.xlu0 %1841
    %v1844 = vmul.f32 %v1833, %v1842
    %1846 = vrot.lane.b32.xlu0 %v1844, 32
    %v1847 = vpop.permute.xlu0 %1846
    %v1849 = vadd.f32 %v1839, %v1847
    %v1850 = vtanh.pop %v1849
    %1852 = vrot.lane.b32.xlu0 %v1850, 64
    %v1853 = vpop.permute.xlu0 %1852
    %v1855 = vmul.f32 %v1833, %v1853
    %v1856 = vld [vmem:[%s2] sm:$0xff]
    %v1857 = vld [vmem:[%s2 + $0x8] sm:$0xff]
    %v1858 = vld [vmem:[%s2 + $0x10] sm:$0xff]
    %v1859 = vld [vmem:[%s2 + $0x18] sm:$0xff]
    %1861 = vrot.lane.b32.xlu0 %v1855, 32
    %v1862 = vpop.permute.xlu0 %1861
    %v1863 = vsel %vm234, %v1862, 0
    %1865 = vmatpush.msra.mxu0 0.0
    %1866 = vmatpush.msra.mxu0 0.0
    %1867 = vmatpush.msra.mxu0 0.0
    %1868 = vmatpush.msra.mxu0 0.0
    %1869 = vmatpush.msra.mxu0 0.0
    %1870 = vmatpush.msra.mxu0 0.0
    %1871 = vmatpush.msra.mxu0 0.0
    %1872 = vmatpush.msra.mxu0 0.0
    %1873 = vmatpush.msra.mxu0 0.0
    %1874 = vmatpush.msra.mxu0 0.0
    %1875 = vmatpush.msra.mxu0 0.0
    %1876 = vmatpush.msra.mxu0 0.0
    %1877 = vmatpush.msra.mxu0 %v1859
    %1878 = vmatpush.msra.mxu0 %v1858
    %1879 = vmatpush.msra.mxu0 %v1857
    %1880 = vmatpush.msra.mxu0 %v1856
    %1881 = vmatmul.f32.gmra.mxu0 %v1863
    %v1882 = vpop.f32.mrf.mxu0
    %v1883 = vadd.f32 %v1770, %v1882
    %1884 = vdwg.mxu0
    %v1885 = vld [vmem:[%s3] sm:$0x1]
    %v1887 = vperm.slane %v1885, 0
    %v1889 = vadd.f32 %v1883, %v1887
    %v1890 = vxor.u32 %v1889, 2147483648
    %v1891 = vmul.f32 %v1890, 1.442695
    %v1892 = vpow.pop %v1891
    %v1893 = vadd.f32 %v1892, 1.0
    %v1894 = vrcp.pop %v1893
    %v1895 = vmul.f32 %v1893, %v1894
    %v1896 = vsub.f32 1.0, %v1895
    %v1897 = vmul.f32 %v1894, %v1896
    %v1898 = vadd.f32 %v1894, %v1897
    %vm1899 = vweird.f32 %v1893
    %vm1900 = vweird.f32 %v1894
    %vm1901 = vmor %vm1899, %vm1900
    %v1902 = vsel %vm1901, %v1894, %v1898
    %v1903 = vand.u32 2147483647, %v1893
    %vm1904 = vcmp.eq.f32.partialorder %v1903, 8.507059e+37
    %v1905 = vand.u32 %v1893, 2147483648
    %v1906 = vor.u32 1.1754944e-38, %v1905
    %v1907 = vsel %vm1904, %v1906, %v1902
    %v1908 = vmul.f32 1.0, %v1907
    %v1909 = vtanh.pop %v1889
    %v1910 = vmul.f32 %v1908, %v1694
    %1912 = vrot.lane.b32.xlu0 %v1909, 64
    %v1913 = vpop.permute.xlu0 %1912
    %v1915 = vmul.f32 %v1908, %v1913
    %1917 = vrot.lane.b32.xlu0 %v1915, 32
    %v1918 = vpop.permute.xlu0 %1917
    %v1920 = vadd.f32 %v1910, %v1918
    %v1921 = vtanh.pop %v1920
    %1923 = vrot.lane.b32.xlu0 %v1921, 64
    %v1924 = vpop.permute.xlu0 %1923
    %v1926 = vmul.f32 %v1908, %v1924
    %v1927 = vld [vmem:[%s299] sm:$0xff]
    %v1928 = vld [vmem:[%s299 + $0x8] sm:$0xff]
    %v1929 = vld [vmem:[%s299 + $0x10] sm:$0xff]
    %v1930 = vld [vmem:[%s299 + $0x18] sm:$0xff]
    %1932 = vrot.lane.b32.xlu0 %v1926, 32
    %v1933 = vpop.permute.xlu0 %1932
    %v1934 = vsel %vm234, %v1933, 0
    %1936 = vmatpush.msra.mxu0 0.0
    %1937 = vmatpush.msra.mxu0 0.0
    %1938 = vmatpush.msra.mxu0 0.0
    %1939 = vmatpush.msra.mxu0 0.0
    %1940 = vmatpush.msra.mxu0 0.0
    %1941 = vmatpush.msra.mxu0 0.0
    %1942 = vmatpush.msra.mxu0 0.0
    %1943 = vmatpush.msra.mxu0 0.0
    %1944 = vmatpush.msra.mxu0 0.0
    %1945 = vmatpush.msra.mxu0 0.0
    %1946 = vmatpush.msra.mxu0 0.0
    %1947 = vmatpush.msra.mxu0 0.0
    %1948 = vmatpush.msra.mxu0 %v1930
    %1949 = vmatpush.msra.mxu0 %v1929
    %1950 = vmatpush.msra.mxu0 %v1928
    %1951 = vmatpush.msra.mxu0 %v1927
    %1952 = vmatmul.f32.gmra.mxu0 %v1934
    %v1953 = vpop.f32.mrf.mxu0
    %v1954 = vadd.f32 %v1790, %v1953
    %1955 = vdwg.mxu0
    %v1956 = vld [vmem:[%s329] sm:$0x1]
    %v1958 = vperm.slane %v1956, 0
    %v1960 = vadd.f32 %v1954, %v1958
    %v1961 = vxor.u32 %v1960, 2147483648
    %v1962 = vmul.f32 %v1961, 1.442695
    %v1963 = vpow.pop %v1962
    %v1964 = vadd.f32 %v1963, 1.0
    %v1965 = vrcp.pop %v1964
    %v1966 = vmul.f32 %v1964, %v1965
    %v1967 = vsub.f32 1.0, %v1966
    %v1968 = vmul.f32 %v1965, %v1967
    %v1969 = vadd.f32 %v1965, %v1968
    %vm1970 = vweird.f32 %v1964
    %vm1971 = vweird.f32 %v1965
    %vm1972 = vmor %vm1970, %vm1971
    %v1973 = vsel %vm1972, %v1965, %v1969
    %v1974 = vand.u32 2147483647, %v1964
    %vm1975 = vcmp.eq.f32.partialorder %v1974, 8.507059e+37
    %v1976 = vand.u32 %v1964, 2147483648
    %v1977 = vor.u32 1.1754944e-38, %v1976
    %v1978 = vsel %vm1975, %v1977, %v1973
    %v1979 = vmul.f32 1.0, %v1978
    %v1980 = vtanh.pop %v1960
    %1981 = vrot.lane.b32.xlu0 %v1694, 96
    %v1982 = vpop.permute.xlu0 %1981
    %v1984 = vmul.f32 %v1979, %v1982
    %1986 = vrot.lane.b32.xlu0 %v1980, 64
    %v1987 = vpop.permute.xlu0 %1986
    %v1989 = vmul.f32 %v1979, %v1987
    %1991 = vrot.lane.b32.xlu0 %v1989, 32
    %v1992 = vpop.permute.xlu0 %1991
    %v1994 = vadd.f32 %v1984, %v1992
    %v1995 = vtanh.pop %v1994
    %1997 = vrot.lane.b32.xlu0 %v1995, 64
    %v1998 = vpop.permute.xlu0 %1997
    %v2000 = vmul.f32 %v1979, %v1998
    %v2001 = vld [vmem:[%s375] sm:$0xff]
    %v2002 = vld [vmem:[%s375 + $0x8] sm:$0xff]
    %v2003 = vld [vmem:[%s375 + $0x10] sm:$0xff]
    %v2004 = vld [vmem:[%s375 + $0x18] sm:$0xff]
    %2006 = vrot.lane.b32.xlu0 %v2000, 32
    %v2007 = vpop.permute.xlu0 %2006
    %v2008 = vsel %vm234, %v2007, 0
    %2010 = vmatpush.msra.mxu0 0.0
    %2011 = vmatpush.msra.mxu0 0.0
    %2012 = vmatpush.msra.mxu0 0.0
    %2013 = vmatpush.msra.mxu0 0.0
    %2014 = vmatpush.msra.mxu0 0.0
    %2015 = vmatpush.msra.mxu0 0.0
    %2016 = vmatpush.msra.mxu0 0.0
    %2017 = vmatpush.msra.mxu0 0.0
    %2018 = vmatpush.msra.mxu0 0.0
    %2019 = vmatpush.msra.mxu0 0.0
    %2020 = vmatpush.msra.mxu0 0.0
    %2021 = vmatpush.msra.mxu0 0.0
    %2022 = vmatpush.msra.mxu0 %v2004
    %2023 = vmatpush.msra.mxu0 %v2003
    %2024 = vmatpush.msra.mxu0 %v2002
    %2025 = vmatpush.msra.mxu0 %v2001
    %2026 = vmatmul.f32.gmra.mxu0 %v2008
    %v2027 = vpop.f32.mrf.mxu0
    %v2028 = vadd.f32 %v1810, %v2027
    %2029 = vdwg.mxu0
    %v2030 = vld [vmem:[%s405] sm:$0x1]
    %v2032 = vperm.slane %v2030, 0
    %v2034 = vadd.f32 %v2028, %v2032
    %v2035 = vxor.u32 %v2034, 2147483648
    %v2036 = vmul.f32 %v2035, 1.442695
    %v2037 = vpow.pop %v2036
    %v2038 = vadd.f32 %v2037, 1.0
    %v2039 = vrcp.pop %v2038
    %v2040 = vmul.f32 %v2038, %v2039
    %v2041 = vsub.f32 1.0, %v2040
    %v2042 = vmul.f32 %v2039, %v2041
    %v2043 = vadd.f32 %v2039, %v2042
    %vm2044 = vweird.f32 %v2038
    %vm2045 = vweird.f32 %v2039
    %vm2046 = vmor %vm2044, %vm2045
    %v2047 = vsel %vm2046, %v2039, %v2043
    %v2048 = vand.u32 2147483647, %v2038
    %vm2049 = vcmp.eq.f32.partialorder %v2048, 8.507059e+37
    %v2050 = vand.u32 %v2038, 2147483648
    %v2051 = vor.u32 1.1754944e-38, %v2050
    %v2052 = vsel %vm2049, %v2051, %v2047
    %v2053 = vmul.f32 1.0, %v2052
    %v2054 = vtanh.pop %v2034
    %2055 = vrot.lane.b32.xlu0 %v1694, 64
    %v2056 = vpop.permute.xlu0 %2055
    %v2058 = vmul.f32 %v2053, %v2056
    %2060 = vrot.lane.b32.xlu0 %v2054, 64
    %v2061 = vpop.permute.xlu0 %2060
    %v2063 = vmul.f32 %v2053, %v2061
    %2065 = vrot.lane.b32.xlu0 %v2063, 32
    %v2066 = vpop.permute.xlu0 %2065
    %v2068 = vadd.f32 %v2058, %v2066
    %v2069 = vtanh.pop %v2068
    %2071 = vrot.lane.b32.xlu0 %v2069, 64
    %v2072 = vpop.permute.xlu0 %2071
    %v2074 = vmul.f32 %v2053, %v2072
    %2076 = vrot.lane.b32.xlu0 %v1926, 64
    %v2077 = vpop.permute.xlu0 %2076
    %2079 = vrot.lane.b32.xlu0 %v2000, 96
    %v2080 = vpop.permute.xlu0 %2079
    %v2082 = vsel %vm234, %v1862, %v2077
    %v2083 = vsel %vm459, %v2082, %v2080
    %v2084 = vsel %vm461, %v2083, %v2074
    %2086 = vrot.lane.b32.xlu0 %v1849, 96
    %v2087 = vpop.permute.xlu0 %2086
    %2090 = vrot.lane.b32.xlu0 %v1994, 32
    %v2091 = vpop.permute.xlu0 %2090
    %2094 = vrot.lane.b32.xlu0 %v2068, 64
    %v2095 = vpop.permute.xlu0 %2094
    %v2097 = vsel %vm234, %v2087, %v1920
    %v2098 = vsel %vm459, %v2097, %v2091
    %v2099 = vsel %vm461, %v2098, %v2095
    %2101 = vrot.lane.b32.xlu0 %v2074, 32
    %v2102 = vpop.permute.xlu0 %2101
    %v2103 = vsel %vm234, %v2102, 0
    %2105 = vmatpush.msra.mxu0 0.0
    %2106 = vmatpush.msra.mxu0 0.0
    %2107 = vmatpush.msra.mxu0 0.0
    %2108 = vmatpush.msra.mxu0 0.0
    %2109 = vmatpush.msra.mxu0 0.0
    %2110 = vmatpush.msra.mxu0 0.0
    %2111 = vmatpush.msra.mxu0 0.0
    %2112 = vmatpush.msra.mxu0 0.0
    %2113 = vmatpush.msra.mxu0 0.0
    %2114 = vmatpush.msra.mxu0 0.0
    %2115 = vmatpush.msra.mxu0 0.0
    %2116 = vmatpush.msra.mxu0 0.0
    %2117 = vmatpush.msra.mxu0 %v100
    %2118 = vmatpush.msra.mxu0 %v99
    %2119 = vmatpush.msra.mxu0 %v98
    %2120 = vmatpush.msra.mxu0 %v97
    %2121 = vmatmul.f32.gmra.mxu0 %v2103
    %v2122 = vpop.f32.mrf.mxu0
    %v2123 = vadd.f32 %v479, %v2122
    %2124 = vdwg.mxu0
    %2125 = vmax.xlane.f32.xlu0 %v2123
    %v2126 = vpop.xlane.xlu0 %2125
    %v2127 = vsub.f32 %v2123, %v2126
    %v2128 = vmul.f32 %v2127, 1.442695
    %v2129 = vpow.pop %v2128
    %2130 = vadd.xlane.f32.xlu0 %v2129
    %v2131 = vpop.xlane.xlu0 %2130
    %v2132 = vlog2.pop %v2131
    %v2133 = vmul.f32 %v2132, 0.6931472
    %v2134 = vsub.f32 %v2127, %v2133
    %s2135 = scalar_lea.vmem [#allocation2], 32
    %2136 = vst [vmem:[%s2135] sm:$0xff] %v2134
    %2137 = vmatpush.msra.mxu0 %v93
    %2138 = vmatpush.msra.mxu0 %v89
    %2139 = vmatpush.msra.mxu0 %v85
    %2140 = vmatpush.msra.mxu0 %v81
    %2141 = vmatpush.msra.mxu0 %v77
    %2142 = vmatpush.msra.mxu0 %v73
    %2143 = vmatpush.msra.mxu0 %v69
    %2144 = vmatpush.msra.mxu0 %v65
    %2145 = vmatpush.msra.mxu0 %v61
    %2146 = vmatpush.msra.mxu0 %v57
    %2147 = vmatpush.msra.mxu0 %v53
    %2148 = vmatpush.msra.mxu0 %v49
    %2149 = vmatpush.msra.mxu0 %v45
    %2150 = vmatpush.msra.mxu0 %v41
    %2151 = vmatpush.msra.mxu0 %v37
    %2152 = vmatpush.msra.mxu0 %v33
    %2153 = vmatmul.f32.gmra.mxu0 %v2084
    %v2154 = vpop.f32.mrf.mxu0
    %v2155 = vadd.f32 0.0, %v2154
    %2156 = vdwg.mxu0
    %2157 = vmatpush.msra.mxu0 %v94
    %2158 = vmatpush.msra.mxu0 %v90
    %2159 = vmatpush.msra.mxu0 %v86
    %2160 = vmatpush.msra.mxu0 %v82
    %2161 = vmatpush.msra.mxu0 %v78
    %2162 = vmatpush.msra.mxu0 %v74
    %2163 = vmatpush.msra.mxu0 %v70
    %2164 = vmatpush.msra.mxu0 %v66
    %2165 = vmatpush.msra.mxu0 %v62
    %2166 = vmatpush.msra.mxu0 %v58
    %2167 = vmatpush.msra.mxu0 %v54
    %2168 = vmatpush.msra.mxu0 %v50
    %2169 = vmatpush.msra.mxu0 %v46
    %2170 = vmatpush.msra.mxu0 %v42
    %2171 = vmatpush.msra.mxu0 %v38
    %2172 = vmatpush.msra.mxu0 %v34
    %2173 = vmatmul.f32.gmra.mxu0 %v2084
    %v2174 = vpop.f32.mrf.mxu0
    %v2175 = vadd.f32 0.0, %v2174
    %2176 = vdwg.mxu0
    %2177 = vmatpush.msra.mxu0 %v95
    %2178 = vmatpush.msra.mxu0 %v91
    %2179 = vmatpush.msra.mxu0 %v87
    %2180 = vmatpush.msra.mxu0 %v83
    %2181 = vmatpush.msra.mxu0 %v79
    %2182 = vmatpush.msra.mxu0 %v75
    %2183 = vmatpush.msra.mxu0 %v71
    %2184 = vmatpush.msra.mxu0 %v67
    %2185 = vmatpush.msra.mxu0 %v63
    %2186 = vmatpush.msra.mxu0 %v59
    %2187 = vmatpush.msra.mxu0 %v55
    %2188 = vmatpush.msra.mxu0 %v51
    %2189 = vmatpush.msra.mxu0 %v47
    %2190 = vmatpush.msra.mxu0 %v43
    %2191 = vmatpush.msra.mxu0 %v39
    %2192 = vmatpush.msra.mxu0 %v35
    %2193 = vmatmul.f32.gmra.mxu0 %v2084
    %v2194 = vpop.f32.mrf.mxu0
    %v2195 = vadd.f32 0.0, %v2194
    %2196 = vdwg.mxu0
    %2197 = vmatpush.msra.mxu0 %v96
    %2198 = vmatpush.msra.mxu0 %v92
    %2199 = vmatpush.msra.mxu0 %v88
    %2200 = vmatpush.msra.mxu0 %v84
    %2201 = vmatpush.msra.mxu0 %v80
    %2202 = vmatpush.msra.mxu0 %v76
    %2203 = vmatpush.msra.mxu0 %v72
    %2204 = vmatpush.msra.mxu0 %v68
    %2205 = vmatpush.msra.mxu0 %v64
    %2206 = vmatpush.msra.mxu0 %v60
    %2207 = vmatpush.msra.mxu0 %v56
    %2208 = vmatpush.msra.mxu0 %v52
    %2209 = vmatpush.msra.mxu0 %v48
    %2210 = vmatpush.msra.mxu0 %v44
    %2211 = vmatpush.msra.mxu0 %v40
    %2212 = vmatpush.msra.mxu0 %v36
    %2213 = vmatmul.f32.gmra.mxu0 %v2084
    %v2214 = vpop.f32.mrf.mxu0
    %v2215 = vadd.f32 0.0, %v2214
    %2216 = vdwg.mxu0
    %s2217 = scalar_lea.vmem %s0, 40
    %v2218 = vld [vmem:[%s2217] sm:$0xff]
    %v2219 = vadd.f32 %v2218, %v2155
    %v2220 = vxor.u32 %v2219, 2147483648
    %v2221 = vmul.f32 %v2220, 1.442695
    %v2222 = vpow.pop %v2221
    %v2223 = vadd.f32 %v2222, 1.0
    %v2224 = vrcp.pop %v2223
    %v2225 = vmul.f32 %v2223, %v2224
    %v2226 = vsub.f32 1.0, %v2225
    %v2227 = vmul.f32 %v2224, %v2226
    %v2228 = vadd.f32 %v2224, %v2227
    %vm2229 = vweird.f32 %v2223
    %vm2230 = vweird.f32 %v2224
    %vm2231 = vmor %vm2229, %vm2230
    %v2232 = vsel %vm2231, %v2224, %v2228
    %v2233 = vand.u32 2147483647, %v2223
    %vm2234 = vcmp.eq.f32.partialorder %v2233, 8.507059e+37
    %v2235 = vand.u32 %v2223, 2147483648
    %v2236 = vor.u32 1.1754944e-38, %v2235
    %v2237 = vsel %vm2234, %v2236, %v2232
    %v2238 = vmul.f32 1.0, %v2237
    %v2239 = vtanh.pop %v2219
    %2241 = vrot.lane.b32.xlu0 %v2099, 32
    %v2242 = vpop.permute.xlu0 %2241
    %v2244 = vmul.f32 %v2238, %v2242
    %2246 = vrot.lane.b32.xlu0 %v2239, 64
    %v2247 = vpop.permute.xlu0 %2246
    %v2249 = vmul.f32 %v2238, %v2247
    %2251 = vrot.lane.b32.xlu0 %v2249, 32
    %v2252 = vpop.permute.xlu0 %2251
    %v2254 = vadd.f32 %v2244, %v2252
    %v2255 = vtanh.pop %v2254
    %2257 = vrot.lane.b32.xlu0 %v2255, 64
    %v2258 = vpop.permute.xlu0 %2257
    %v2260 = vmul.f32 %v2238, %v2258
    %v2261 = vld [vmem:[%s2] sm:$0xff]
    %v2262 = vld [vmem:[%s2 + $0x8] sm:$0xff]
    %v2263 = vld [vmem:[%s2 + $0x10] sm:$0xff]
    %v2264 = vld [vmem:[%s2 + $0x18] sm:$0xff]
    %2266 = vrot.lane.b32.xlu0 %v2260, 32
    %v2267 = vpop.permute.xlu0 %2266
    %v2268 = vsel %vm234, %v2267, 0
    %2270 = vmatpush.msra.mxu0 0.0
    %2271 = vmatpush.msra.mxu0 0.0
    %2272 = vmatpush.msra.mxu0 0.0
    %2273 = vmatpush.msra.mxu0 0.0
    %2274 = vmatpush.msra.mxu0 0.0
    %2275 = vmatpush.msra.mxu0 0.0
    %2276 = vmatpush.msra.mxu0 0.0
    %2277 = vmatpush.msra.mxu0 0.0
    %2278 = vmatpush.msra.mxu0 0.0
    %2279 = vmatpush.msra.mxu0 0.0
    %2280 = vmatpush.msra.mxu0 0.0
    %2281 = vmatpush.msra.mxu0 0.0
    %2282 = vmatpush.msra.mxu0 %v2264
    %2283 = vmatpush.msra.mxu0 %v2263
    %2284 = vmatpush.msra.mxu0 %v2262
    %2285 = vmatpush.msra.mxu0 %v2261
    %2286 = vmatmul.f32.gmra.mxu0 %v2268
    %v2287 = vpop.f32.mrf.mxu0
    %v2288 = vadd.f32 %v2175, %v2287
    %2289 = vdwg.mxu0
    %v2290 = vld [vmem:[%s3] sm:$0x1]
    %v2292 = vperm.slane %v2290, 0
    %v2294 = vadd.f32 %v2288, %v2292
    %v2295 = vxor.u32 %v2294, 2147483648
    %v2296 = vmul.f32 %v2295, 1.442695
    %v2297 = vpow.pop %v2296
    %v2298 = vadd.f32 %v2297, 1.0
    %v2299 = vrcp.pop %v2298
    %v2300 = vmul.f32 %v2298, %v2299
    %v2301 = vsub.f32 1.0, %v2300
    %v2302 = vmul.f32 %v2299, %v2301
    %v2303 = vadd.f32 %v2299, %v2302
    %vm2304 = vweird.f32 %v2298
    %vm2305 = vweird.f32 %v2299
    %vm2306 = vmor %vm2304, %vm2305
    %v2307 = vsel %vm2306, %v2299, %v2303
    %v2308 = vand.u32 2147483647, %v2298
    %vm2309 = vcmp.eq.f32.partialorder %v2308, 8.507059e+37
    %v2310 = vand.u32 %v2298, 2147483648
    %v2311 = vor.u32 1.1754944e-38, %v2310
    %v2312 = vsel %vm2309, %v2311, %v2307
    %v2313 = vmul.f32 1.0, %v2312
    %v2314 = vtanh.pop %v2294
    %v2315 = vmul.f32 %v2313, %v2099
    %2317 = vrot.lane.b32.xlu0 %v2314, 64
    %v2318 = vpop.permute.xlu0 %2317
    %v2320 = vmul.f32 %v2313, %v2318
    %2322 = vrot.lane.b32.xlu0 %v2320, 32
    %v2323 = vpop.permute.xlu0 %2322
    %v2325 = vadd.f32 %v2315, %v2323
    %v2326 = vtanh.pop %v2325
    %2328 = vrot.lane.b32.xlu0 %v2326, 64
    %v2329 = vpop.permute.xlu0 %2328
    %v2331 = vmul.f32 %v2313, %v2329
    %v2332 = vld [vmem:[%s299] sm:$0xff]
    %v2333 = vld [vmem:[%s299 + $0x8] sm:$0xff]
    %v2334 = vld [vmem:[%s299 + $0x10] sm:$0xff]
    %v2335 = vld [vmem:[%s299 + $0x18] sm:$0xff]
    %2337 = vrot.lane.b32.xlu0 %v2331, 32
    %v2338 = vpop.permute.xlu0 %2337
    %v2339 = vsel %vm234, %v2338, 0
    %2341 = vmatpush.msra.mxu0 0.0
    %2342 = vmatpush.msra.mxu0 0.0
    %2343 = vmatpush.msra.mxu0 0.0
    %2344 = vmatpush.msra.mxu0 0.0
    %2345 = vmatpush.msra.mxu0 0.0
    %2346 = vmatpush.msra.mxu0 0.0
    %2347 = vmatpush.msra.mxu0 0.0
    %2348 = vmatpush.msra.mxu0 0.0
    %2349 = vmatpush.msra.mxu0 0.0
    %2350 = vmatpush.msra.mxu0 0.0
    %2351 = vmatpush.msra.mxu0 0.0
    %2352 = vmatpush.msra.mxu0 0.0
    %2353 = vmatpush.msra.mxu0 %v2335
    %2354 = vmatpush.msra.mxu0 %v2334
    %2355 = vmatpush.msra.mxu0 %v2333
    %2356 = vmatpush.msra.mxu0 %v2332
    %2357 = vmatmul.f32.gmra.mxu0 %v2339
    %v2358 = vpop.f32.mrf.mxu0
    %v2359 = vadd.f32 %v2195, %v2358
    %2360 = vdwg.mxu0
    %v2361 = vld [vmem:[%s329] sm:$0x1]
    %v2363 = vperm.slane %v2361, 0
    %v2365 = vadd.f32 %v2359, %v2363
    %v2366 = vxor.u32 %v2365, 2147483648
    %v2367 = vmul.f32 %v2366, 1.442695
    %v2368 = vpow.pop %v2367
    %v2369 = vadd.f32 %v2368, 1.0
    %v2370 = vrcp.pop %v2369
    %v2371 = vmul.f32 %v2369, %v2370
    %v2372 = vsub.f32 1.0, %v2371
    %v2373 = vmul.f32 %v2370, %v2372
    %v2374 = vadd.f32 %v2370, %v2373
    %vm2375 = vweird.f32 %v2369
    %vm2376 = vweird.f32 %v2370
    %vm2377 = vmor %vm2375, %vm2376
    %v2378 = vsel %vm2377, %v2370, %v2374
    %v2379 = vand.u32 2147483647, %v2369
    %vm2380 = vcmp.eq.f32.partialorder %v2379, 8.507059e+37
    %v2381 = vand.u32 %v2369, 2147483648
    %v2382 = vor.u32 1.1754944e-38, %v2381
    %v2383 = vsel %vm2380, %v2382, %v2378
    %v2384 = vmul.f32 1.0, %v2383
    %v2385 = vtanh.pop %v2365
    %2386 = vrot.lane.b32.xlu0 %v2099, 96
    %v2387 = vpop.permute.xlu0 %2386
    %v2389 = vmul.f32 %v2384, %v2387
    %2391 = vrot.lane.b32.xlu0 %v2385, 64
    %v2392 = vpop.permute.xlu0 %2391
    %v2394 = vmul.f32 %v2384, %v2392
    %2396 = vrot.lane.b32.xlu0 %v2394, 32
    %v2397 = vpop.permute.xlu0 %2396
    %v2399 = vadd.f32 %v2389, %v2397
    %v2400 = vtanh.pop %v2399
    %2402 = vrot.lane.b32.xlu0 %v2400, 64
    %v2403 = vpop.permute.xlu0 %2402
    %v2405 = vmul.f32 %v2384, %v2403
    %v2406 = vld [vmem:[%s375] sm:$0xff]
    %v2407 = vld [vmem:[%s375 + $0x8] sm:$0xff]
    %v2408 = vld [vmem:[%s375 + $0x10] sm:$0xff]
    %v2409 = vld [vmem:[%s375 + $0x18] sm:$0xff]
    %2411 = vrot.lane.b32.xlu0 %v2405, 32
    %v2412 = vpop.permute.xlu0 %2411
    %v2413 = vsel %vm234, %v2412, 0
    %2415 = vmatpush.msra.mxu0 0.0
    %2416 = vmatpush.msra.mxu0 0.0
    %2417 = vmatpush.msra.mxu0 0.0
    %2418 = vmatpush.msra.mxu0 0.0
    %2419 = vmatpush.msra.mxu0 0.0
    %2420 = vmatpush.msra.mxu0 0.0
    %2421 = vmatpush.msra.mxu0 0.0
    %2422 = vmatpush.msra.mxu0 0.0
    %2423 = vmatpush.msra.mxu0 0.0
    %2424 = vmatpush.msra.mxu0 0.0
    %2425 = vmatpush.msra.mxu0 0.0
    %2426 = vmatpush.msra.mxu0 0.0
    %2427 = vmatpush.msra.mxu0 %v2409
    %2428 = vmatpush.msra.mxu0 %v2408
    %2429 = vmatpush.msra.mxu0 %v2407
    %2430 = vmatpush.msra.mxu0 %v2406
    %2431 = vmatmul.f32.gmra.mxu0 %v2413
    %v2432 = vpop.f32.mrf.mxu0
    %v2433 = vadd.f32 %v2215, %v2432
    %2434 = vdwg.mxu0
    %v2435 = vld [vmem:[%s405] sm:$0x1]
    %v2437 = vperm.slane %v2435, 0
    %v2439 = vadd.f32 %v2433, %v2437
    %v2440 = vxor.u32 %v2439, 2147483648
    %v2441 = vmul.f32 %v2440, 1.442695
    %v2442 = vpow.pop %v2441
    %v2443 = vadd.f32 %v2442, 1.0
    %v2444 = vrcp.pop %v2443
    %v2445 = vmul.f32 %v2443, %v2444
    %v2446 = vsub.f32 1.0, %v2445
    %v2447 = vmul.f32 %v2444, %v2446
    %v2448 = vadd.f32 %v2444, %v2447
    %vm2449 = vweird.f32 %v2443
    %vm2450 = vweird.f32 %v2444
    %vm2451 = vmor %vm2449, %vm2450
    %v2452 = vsel %vm2451, %v2444, %v2448
    %v2453 = vand.u32 2147483647, %v2443
    %vm2454 = vcmp.eq.f32.partialorder %v2453, 8.507059e+37
    %v2455 = vand.u32 %v2443, 2147483648
    %v2456 = vor.u32 1.1754944e-38, %v2455
    %v2457 = vsel %vm2454, %v2456, %v2452
    %v2458 = vmul.f32 1.0, %v2457
    %v2459 = vtanh.pop %v2439
    %2460 = vrot.lane.b32.xlu0 %v2099, 64
    %v2461 = vpop.permute.xlu0 %2460
    %v2463 = vmul.f32 %v2458, %v2461
    %2465 = vrot.lane.b32.xlu0 %v2459, 64
    %v2466 = vpop.permute.xlu0 %2465
    %v2468 = vmul.f32 %v2458, %v2466
    %2470 = vrot.lane.b32.xlu0 %v2468, 32
    %v2471 = vpop.permute.xlu0 %2470
    %v2473 = vadd.f32 %v2463, %v2471
    %v2474 = vtanh.pop %v2473
    %2476 = vrot.lane.b32.xlu0 %v2474, 64
    %v2477 = vpop.permute.xlu0 %2476
    %v2479 = vmul.f32 %v2458, %v2477
    %2481 = vrot.lane.b32.xlu0 %v2331, 64
    %v2482 = vpop.permute.xlu0 %2481
    %2484 = vrot.lane.b32.xlu0 %v2405, 96
    %v2485 = vpop.permute.xlu0 %2484
    %v2487 = vsel %vm234, %v2267, %v2482
    %v2488 = vsel %vm459, %v2487, %v2485
    %v2489 = vsel %vm461, %v2488, %v2479
    %2491 = vrot.lane.b32.xlu0 %v2254, 96
    %v2492 = vpop.permute.xlu0 %2491
    %2495 = vrot.lane.b32.xlu0 %v2399, 32
    %v2496 = vpop.permute.xlu0 %2495
    %2499 = vrot.lane.b32.xlu0 %v2473, 64
    %v2500 = vpop.permute.xlu0 %2499
    %v2502 = vsel %vm234, %v2492, %v2325
    %v2503 = vsel %vm459, %v2502, %v2496
    %v2504 = vsel %vm461, %v2503, %v2500
    %2506 = vrot.lane.b32.xlu0 %v2479, 32
    %v2507 = vpop.permute.xlu0 %2506
    %v2508 = vsel %vm234, %v2507, 0
    %2510 = vmatpush.msra.mxu0 0.0
    %2511 = vmatpush.msra.mxu0 0.0
    %2512 = vmatpush.msra.mxu0 0.0
    %2513 = vmatpush.msra.mxu0 0.0
    %2514 = vmatpush.msra.mxu0 0.0
    %2515 = vmatpush.msra.mxu0 0.0
    %2516 = vmatpush.msra.mxu0 0.0
    %2517 = vmatpush.msra.mxu0 0.0
    %2518 = vmatpush.msra.mxu0 0.0
    %2519 = vmatpush.msra.mxu0 0.0
    %2520 = vmatpush.msra.mxu0 0.0
    %2521 = vmatpush.msra.mxu0 0.0
    %2522 = vmatpush.msra.mxu0 %v100
    %2523 = vmatpush.msra.mxu0 %v99
    %2524 = vmatpush.msra.mxu0 %v98
    %2525 = vmatpush.msra.mxu0 %v97
    %2526 = vmatmul.f32.gmra.mxu0 %v2508
    %v2527 = vpop.f32.mrf.mxu0
    %v2528 = vadd.f32 %v479, %v2527
    %2529 = vdwg.mxu0
    %2530 = vmax.xlane.f32.xlu0 %v2528
    %v2531 = vpop.xlane.xlu0 %2530
    %v2532 = vsub.f32 %v2528, %v2531
    %v2533 = vmul.f32 %v2532, 1.442695
    %v2534 = vpow.pop %v2533
    %2535 = vadd.xlane.f32.xlu0 %v2534
    %v2536 = vpop.xlane.xlu0 %2535
    %v2537 = vlog2.pop %v2536
    %v2538 = vmul.f32 %v2537, 0.6931472
    %v2539 = vsub.f32 %v2532, %v2538
    %s2540 = scalar_lea.vmem [#allocation2], 40
    %2541 = vst [vmem:[%s2540] sm:$0xff] %v2539
    %2542 = vst [vmem:[%s9] sm:$0xff] %v2489
    %2543 = vst [vmem:[%s10] sm:$0xff] %v2504
    // Predicated region
    $region34: #{decoder_decode_fused.1} parent=1 // pred_check
      _
    $region35: #{decoder_decode_fused.1} parent=1 // pred_check_branch
      %2545 = sbr.rel (0) target = $region37
    $region36: #{decoder_decode_fused.1} parent=1 // pred_region
      %2547 = vsyncadd [#allocation3], 0
      %s2548 = sshll.u32 [#allocation2], 4
      %s2549 = int_to_ptr.vmem [resolvable:$true] %s2548
      %s2550 = sshll.u32 %s8, 4
      %s2551 = int_to_ptr.hbm [resolvable:$true] %s2550
      %2556 = dma.vmem_to_hbm [thread:$0]  %s2549, 768, %s2551, [#allocation3], 128, 128, 8
    $region37: #{decoder_decode_fused.1} parent=1 // pred_fallthru
      _
    // Predicated region
    $region38: #{decoder_decode_fused.1} parent=1 // pred_check
      _
    $region39: #{decoder_decode_fused.1} parent=1 // pred_check_branch
      %2558 = sbr.rel (0) target = $region41
    $region40: #{decoder_decode_fused.1} parent=1 // pred_region
      _
    $region41: #{decoder_decode_fused.1} parent=1 // pred_fallthru
      _
    // Predicated region
    $region42: #{decoder_decode_fused.1} parent=1 // pred_check
      _
    $region43: #{decoder_decode_fused.1} parent=1 // pred_check_branch
      %2560 = sbr.rel (0) target = $region45
    $region44: #{decoder_decode_fused.1} parent=1 // pred_region
      _
    $region45: #{decoder_decode_fused.1} parent=1 // pred_fallthru
      _
    // Predicated region
    $region46: #{decoder_decode_fused.1} parent=1 // pred_check
      _
    $region47: #{decoder_decode_fused.1} parent=1 // pred_check_branch
      %2562 = sbr.rel (0) target = $region49
    $region48: #{decoder_decode_fused.1} parent=1 // pred_region
      %2564 = dma.done [#allocation3], 768
    $region49: #{decoder_decode_fused.1} parent=1 // pred_fallthru
      _
    // Predicated region
    $region50: #{decoder_decode_fused.1} parent=1 // pred_check
      _
    $region51: #{decoder_decode_fused.1} parent=1 // pred_check_branch
      %2566 = sbr.rel (0) target = $region53
    $region52: #{decoder_decode_fused.1} parent=1 // pred_region
      _
    $region53: #{decoder_decode_fused.1} parent=1 // pred_fallthru
      _
    // Predicated region
    $region54: #{decoder_decode_fused.1} parent=1 // pred_check
      _
    $region55: #{decoder_decode_fused.1} parent=1 // pred_check_branch
      %2568 = sbr.rel (0) target = $region57
    $region56: #{decoder_decode_fused.1} parent=1 // pred_region
      _
    $region57: #{decoder_decode_fused.1} parent=1 // pred_fallthru
      _
    %2569 = vsyncpa [#allocation3], 1

</llo_original>
